<compile_context>
chip_gen: v7x
topology: tpu7x:2x2x1
jax: 0.10.0
libtpu: 0.0.40
codegen_flags: <defaults>
</compile_context>

<pallas_src>
import functools

import jax
import jax.numpy as jnp
from jax import lax
from jax.experimental import pallas as pl
from jax.experimental.pallas import tpu as pltpu


LANE = 128
COMPUTE_DTYPE = jnp.bfloat16   # MXU input dtype (v5e/v6e/v7x all do bf16 matmul)


def _round_up(x, m):
    return ((x + m - 1) // m) * m


def _vmem_capacity_bytes():
    try:
        info = pltpu.get_tpu_info()
        cap = int(getattr(info, "vmem_capacity_bytes", 0))
        if cap > 0:
            return cap
    except Exception:
        pass
    return 128 * 1024 * 1024


# ----------------------------------------------------------------------------
# Plain-JAX glue: FPS, ball query, gather (data-dependent indexing).
# ----------------------------------------------------------------------------
def farthest_point_sample(xyz, npoint):
    """xyz: [B, N, 3] -> [B, npoint] int32 indices (seeded at index 0 per batch)."""
    B, N, _ = xyz.shape

    def body(i, state):
        dist, farthest, centroids = state
        centroids = centroids.at[:, i].set(farthest)
        centroid = jnp.take_along_axis(xyz, farthest[:, None, None], axis=1)  # [B,1,3]
        d = jnp.sum((xyz - centroid) ** 2, axis=-1)                           # [B,N]
        dist = jnp.minimum(dist, d)
        farthest = jnp.argmax(dist, axis=-1).astype(jnp.int32)
        return dist, farthest, centroids

    dist0 = jnp.full((B, N), 1e10, jnp.float32)
    far0 = jnp.zeros((B,), jnp.int32)
    cen0 = jnp.zeros((B, npoint), jnp.int32)
    _, _, centroids = lax.fori_loop(0, npoint, body, (dist0, far0, cen0))
    return centroids


def ball_query(radius, nsample, xyz, new_xyz):
    """xyz [B,N,3], new_xyz [B,S,3] -> [B,S,nsample] int32 (CUDA ball_query semantics:
    first nsample in-radius points in index order, padded with the first hit)."""
    B, N, _ = xyz.shape
    S = new_xyz.shape[1]
    sqr = jnp.sum((new_xyz[:, :, None, :] - xyz[:, None, :, :]) ** 2, axis=-1)  # [B,S,N]
    idx = jnp.broadcast_to(jnp.arange(N, dtype=jnp.int32), (B, S, N))
    idx = jnp.where(sqr < radius * radius, idx, N)
    idx = jnp.sort(idx, axis=-1)[:, :, :nsample]
    first = idx[:, :, :1]
    first = jnp.where(first == N, 0, first)         # no neighbor -> index 0 (CUDA init)
    idx = jnp.where(idx == N, first, idx)
    return idx


def index_points(points, idx):
    """points [B,N,C], idx [B,...] -> [B,...,C]."""
    B = points.shape[0]
    batch = jnp.arange(B).reshape((B,) + (1,) * (idx.ndim - 1))
    return points[batch, idx]


# ----------------------------------------------------------------------------
# Host-side parameter prep: fold eval-mode BN into conv W/b, split layer 1,
# pad deeper layers to exactly 128-lane widths.
# ----------------------------------------------------------------------------
def fold_branch_params(branch, d_pts):
    """branch: list of (w [cin,cout], b, gamma, beta, mean, var) f32 for one radius scale.
    BN fold: y = scale*(Wx + b - mean) + beta -> W' = W*scale, b' = (b-mean)*scale + beta.
    Layer 1 is split: rows [:d_pts] (point features, applied on the host before the gather)
    and rows [d_pts:d_pts+3] (relative xyz, applied in-kernel as 3 VPU FMAs).  Layers >= 2
    get out-widths zero-padded to 128 (only beyond 128 if the real width exceeds 128)."""
    eps = 1e-5
    folded = []
    for (w, b, gamma, beta, mean, var) in branch:
        scale = gamma / jnp.sqrt(var + eps)
        folded.append((w * scale[None, :], (b - mean) * scale + beta))

    w0, b0 = folded[0]
    c1 = w0.shape[1]
    out = {
        "w_pts": (w0[:d_pts, :] if d_pts > 0 else None),   # f32 [D, c1] — host matmul
        "w_xyz": w0[d_pts:d_pts + 3, :],                    # f32 [3, c1] — in-kernel FMAs
        "b1": b0.reshape(1, c1),                            # f32 [1, c1]
        "c1": c1,
    }
    extra = []
    prev = c1
    for (w, b) in folded[1:]:
        cin, cout = w.shape
        cpad = max(LANE, _round_up(cout, LANE))
        w_pad = jnp.zeros((prev, cpad), jnp.float32).at[:cin, :cout].set(w)
        b_pad = jnp.zeros((1, cpad), jnp.float32).at[0, :cout].set(b)
        extra.append((w_pad.astype(COMPUTE_DTYPE), b_pad))
        prev = cpad
    out["extra"] = extra
    out["c_out_pad"] = prev
    return out


# ----------------------------------------------------------------------------
# Pallas kernel: layer-1 epilogue (FMAs + hoisted pts half) -> MLP matmuls ->
# running max over K-chunks -> transposed bf16 store.
# ----------------------------------------------------------------------------
def _make_mlp_max_kernel(num_extra_layers, tile_s, tile_k, has_pts):
    def kernel(*refs):
        acc_ref = refs[-1]          # [tile_s, c_out_pad] f32 running max (scratch)
        out_ref = refs[-2]          # [1, c_out_pad, tile_s] bf16
        ins = refs[:-2]
        p = 0
        if has_pts:
            feat = ins[p][0]; p += 1                      # [tile_s, tile_k, c1] bf16
        gxyz = ins[p][0].astype(jnp.float32); p += 1      # [tile_s, tile_k, 3] f32
        wxyz = ins[p][...]; p += 1                        # [3, c1] f32 (BN folded)
        b1 = ins[p][...]; p += 1                          # [1, c1] f32 (BN folded)

        # Layer 1: relative-xyz contribution as 3 broadcast FMAs on the VPU
        # (VALU has slack; keeps the MXU for the wide layers).
        y = (gxyz[:, :, 0:1] * wxyz[0:1, :]
             + gxyz[:, :, 1:2] * wxyz[1:2, :]
             + gxyz[:, :, 2:3] * wxyz[2:3, :]
             + b1)
        if has_pts:
            y = y + feat.astype(jnp.float32)              # hoisted W1_pts @ points (pre-act)
        x = jnp.maximum(y, 0.0)                           # ReLU, [tile_s, tile_k, c1] f32

        x = x.reshape(tile_s * tile_k, x.shape[-1])
        for _ in range(num_extra_layers):
            w = ins[p][...]; p += 1                       # bf16 [c_prev, c_pad]
            b = ins[p][...]; p += 1                       # f32  [1, c_pad]
            x = jnp.dot(x.astype(w.dtype), w, preferred_element_type=jnp.float32) + b
            x = jnp.maximum(x, 0.0)

        part = jnp.max(x.reshape(tile_s, tile_k, x.shape[-1]), axis=1)  # max over K chunk

        k = pl.program_id(2)

        @pl.when(k == 0)
        def _init():
            acc_ref[...] = jnp.full(acc_ref.shape, -jnp.inf, jnp.float32)

        acc_ref[...] = jnp.maximum(acc_ref[...], part)

        @pl.when(k == pl.num_programs(2) - 1)
        def _store():
            # transposed, lane-dense bf16 store: wrapper transpose + HBM round trip removed
            out_ref[0] = acc_ref[...].T.astype(out_ref.dtype)

    return kernel


def mlp_max_pallas(g_xyz, feat_g, folded, *, tile_s, tile_k, vmem_limit):
    """g_xyz  : [B, S_pad, K_pad, 3]  bf16 relative coords
       feat_g : [B, S_pad, K_pad, c1] bf16 hoisted layer-1 pts pre-activation (or None)
       Returns [B, c_out_pad, S_pad] bf16 (padded channels zero, padded S garbage)."""
    B, S_pad, K_pad, _ = g_xyz.shape
    has_pts = feat_g is not None
    c_out_pad = folded["c_out_pad"]
    grid = (B, S_pad // tile_s, K_pad // tile_k)

    args, in_specs = [], []
    if has_pts:
        c1 = feat_g.shape[-1]
        args.append(feat_g)
        in_specs.append(pl.BlockSpec((1, tile_s, tile_k, c1), lambda b, s, k: (b, s, k, 0)))
    args.append(g_xyz)
    in_specs.append(pl.BlockSpec((1, tile_s, tile_k, 3), lambda b, s, k: (b, s, k, 0)))
    for prm in (folded["w_xyz"], folded["b1"]):
        args.append(prm)
        in_specs.append(pl.BlockSpec(prm.shape, lambda b, s, k: (0, 0)))
    for (w, bias) in folded["extra"]:
        args.append(w)
        in_specs.append(pl.BlockSpec(w.shape, lambda b, s, k: (0, 0)))
        args.append(bias)
        in_specs.append(pl.BlockSpec(bias.shape, lambda b, s, k: (0, 0)))

    return pl.pallas_call(
        _make_mlp_max_kernel(len(folded["extra"]), tile_s, tile_k, has_pts),
        out_shape=jax.ShapeDtypeStruct((B, c_out_pad, S_pad), jnp.bfloat16),
        grid=grid,
        in_specs=in_specs,
        out_specs=pl.BlockSpec((1, c_out_pad, tile_s), lambda b, s, k: (b, 0, s)),
        scratch_shapes=[pltpu.VMEM((tile_s, c_out_pad), jnp.float32)],
        compiler_params=pltpu.CompilerParams(
            dimension_semantics=("parallel", "parallel", "arbitrary"),
            vmem_limit_bytes=vmem_limit),
    )(*args)


# ----------------------------------------------------------------------------
# Module forward
# ----------------------------------------------------------------------------
def pointnet_sa_msg_forward(xyz, points, params, *, npoint, radius_list, nsample_list):
    """
    xyz:    [B, 3, N]  (torch NCW convention)
    points: [B, D, N] or None
    returns (new_xyz [B, 3, S], new_points_concat [B, sum(mlp[i][-1]), S])
    """
    xyz_t = jnp.transpose(xyz, (0, 2, 1))                       # [B, N, 3]
    points_t = None if points is None else jnp.transpose(points, (0, 2, 1))
    B, N, _ = xyz_t.shape
    S = npoint
    d_pts = 0 if points_t is None else points_t.shape[-1]

    fps_idx = farthest_point_sample(xyz_t, S)                   # [B, S]
    new_xyz = index_points(xyz_t, fps_idx)                      # [B, S, 3]

    # Generation-aware tiling: v7x has 64 MiB VMEM/TC, v5e/v6e have 128 MiB.
    vmem_cap = _vmem_capacity_bytes()
    vmem_limit = 96 * 1024 * 1024 if vmem_cap >= 96 * 1024 * 1024 else int(vmem_cap * 0.65)
    target_s = 256 if vmem_cap >= 96 * 1024 * 1024 else 128
    tile_s = min(target_s, _round_up(S, 8))
    S_pad = _round_up(S, tile_s)

    new_points_list = []
    for i, radius in enumerate(radius_list):
        K = nsample_list[i]
        gidx = ball_query(radius, K, xyz_t, new_xyz)            # [B, S, K]

        # Pad K to a multiple of the K-chunk (duplicate first neighbor: max-invariant)
        # and pad S to a tile multiple (dummy centroids, sliced off after the kernel).
        tile_k = min(32, _round_up(K, 8))
        K_pad = _round_up(K, tile_k)
        if K_pad > K:
            gidx = jnp.concatenate(
                [gidx, jnp.broadcast_to(gidx[:, :, :1], (B, S, K_pad - K))], axis=-1)
        if S_pad > S:
            gidx = jnp.pad(gidx, ((0, 0), (0, S_pad - S), (0, 0)))
            new_xyz_p = jnp.pad(new_xyz, ((0, 0), (0, S_pad - S), (0, 0)))
        else:
            new_xyz_p = new_xyz

        folded = fold_branch_params(params[i], d_pts)

        # Relative xyz: difference in f32 (precision of small offsets), single bf16 write.
        g_xyz = (index_points(xyz_t, gidx) - new_xyz_p[:, :, None, :]).astype(COMPUTE_DTYPE)

        if points_t is not None:
            # Hoisted layer-1 point-feature half: N-row matmul BEFORE the K-fold gather,
            # gathered once in bf16 (no f32 grouped tensor, no concat, no extra astype).
            feat_n = (points_t @ folded["w_pts"]).astype(COMPUTE_DTYPE)   # [B, N, c1]
            feat_g = index_points(feat_n, gidx)                           # [B,S_pad,K_pad,c1]
        else:
            feat_g = None

        pooled = mlp_max_pallas(g_xyz, feat_g, folded,
                                tile_s=tile_s, tile_k=tile_k, vmem_limit=vmem_limit)
        c_out = params[i][-1][0].shape[1]
        new_points_list.append(pooled[:, :c_out, :S].astype(jnp.float32))  # already [B,C',S]

    new_xyz_out = jnp.transpose(new_xyz, (0, 2, 1))             # [B, 3, S]
    new_points_concat = jnp.concatenate(new_points_list, axis=1)
    return new_xyz_out, new_points_concat


# ----------------------------------------------------------------------------
# Deterministic parameter init (Conv2d 1x1 weight/bias + eval-mode BatchNorm2d stats).
# ----------------------------------------------------------------------------
def init_params(key, in_channel, mlp):
    params = []
    for branch in mlp:
        layers = []
        last = in_channel
        for out_ch in branch:
            key, k1, k2, k3, k4 = jax.random.split(key, 5)
            w = jax.random.normal(k1, (last, out_ch), jnp.float32) / jnp.sqrt(float(last))
            b = 0.01 * jax.random.normal(k2, (out_ch,), jnp.float32)
            gamma = 1.0 + 0.1 * jax.random.normal(k3, (out_ch,), jnp.float32)
            beta = 0.1 * jax.random.normal(k4, (out_ch,), jnp.float32)
            running_mean = jnp.zeros((out_ch,), jnp.float32)
            running_var = jnp.ones((out_ch,), jnp.float32)
            layers.append((w, b, gamma, beta, running_mean, running_var))
            last = out_ch
        params.append(layers)
    return params


if __name__ == "__main__":
    key = jax.random.PRNGKey(0)
    B, N, D = 2, 64, 4
    npoint = 16
    radius_list = [0.2, 0.4]
    nsample_list = [8, 16]
    mlp = [[16, 32], [16, 32]]
    in_channel = D + 3  # grouped point features concatenated with relative xyz

    k1, k2, k3 = jax.random.split(key, 3)
    xyz = jax.random.uniform(k1, (B, 3, N), dtype=jnp.float32)
    points = jax.random.normal(k2, (B, D, N), dtype=jnp.float32)
    params = init_params(k3, in_channel, mlp)

    fwd = jax.jit(functools.partial(
        pointnet_sa_msg_forward,
        npoint=npoint, radius_list=radius_list, nsample_list=nsample_list))

    new_xyz, new_points = fwd(xyz, points, params)
    jax.block_until_ready((new_xyz, new_points))

    assert new_xyz.shape == (B, 3, npoint), new_xyz.shape
    assert new_points.shape == (B, sum(m[-1] for m in mlp), npoint), new_points.shape
    assert jnp.all(jnp.isfinite(new_xyz)) and jnp.all(jnp.isfinite(new_points))
    print("KERNEL_OK")
</pallas_src>

<mosaic_0001>
module attributes {stable_mosaic.version = 11 : i64} {
  func.func @kernel(%arg0: i32, %arg1: i32, %arg2: i32, %arg3: memref<1x16x8x16xbf16, #tpu.memory_space<vmem>>, %arg4: memref<1x16x8x3xbf16, #tpu.memory_space<vmem>>, %arg5: memref<3x16xf32, #tpu.memory_space<vmem>>, %arg6: memref<1x16xf32, #tpu.memory_space<vmem>>, %arg7: memref<16x128xbf16, #tpu.memory_space<vmem>>, %arg8: memref<1x128xf32, #tpu.memory_space<vmem>>, %arg9: memref<1x128x16xbf16, #tpu.memory_space<vmem>>, %arg10: memref<16x128xf32, #tpu.memory_space<vmem>>) attributes {dimension_semantics = [#tpu.dimension_semantics<parallel>, #tpu.dimension_semantics<parallel>, #tpu.dimension_semantics<arbitrary>], iteration_bounds = array<i64: 2, 1, 1>, scalar_prefetch = 0 : i64, scratch_operands = 1 : i64, tpu.core_type = #tpu.core_type<tc>, window_params = [{transform_indices = @transform_0, window_bounds = array<i64: 1, 16, 8, 16>}, {transform_indices = @transform_1, window_bounds = array<i64: 1, 16, 8, 3>}, {pipeline_mode = #tpu.pipeline_mode<synchronous>, transform_indices = @transform_2, window_bounds = array<i64: 3, 16>}, {pipeline_mode = #tpu.pipeline_mode<synchronous>, transform_indices = @transform_3, window_bounds = array<i64: 1, 16>}, {pipeline_mode = #tpu.pipeline_mode<synchronous>, transform_indices = @transform_4, window_bounds = array<i64: 16, 128>}, {pipeline_mode = #tpu.pipeline_mode<synchronous>, transform_indices = @transform_5, window_bounds = array<i64: 1, 128>}, {transform_indices = @transform_6, window_bounds = array<i64: 1, 128, 16>}]} {
    %c0 = arith.constant 0 : index
    %c0_0 = arith.constant 0 : index
    %c0_1 = arith.constant 0 : index
    %c0_2 = arith.constant 0 : index
    %0 = vector.load %arg3[%c0, %c0_0, %c0_1, %c0_2] : memref<1x16x8x16xbf16, #tpu.memory_space<vmem>>, vector<1x16x8x16xbf16>
    %1 = vector.shape_cast %0 : vector<1x16x8x16xbf16> to vector<16x8x16xbf16>
    %c0_3 = arith.constant 0 : index
    %c0_4 = arith.constant 0 : index
    %c0_5 = arith.constant 0 : index
    %c0_6 = arith.constant 0 : index
    %2 = vector.load %arg4[%c0_3, %c0_4, %c0_5, %c0_6] : memref<1x16x8x3xbf16, #tpu.memory_space<vmem>>, vector<1x16x8x3xbf16>
    %3 = vector.shape_cast %2 : vector<1x16x8x3xbf16> to vector<16x8x3xbf16>
    %4 = arith.extf %3 : vector<16x8x3xbf16> to vector<16x8x3xf32>
    %c0_7 = arith.constant 0 : index
    %c0_8 = arith.constant 0 : index
    %5 = vector.load %arg5[%c0_7, %c0_8] : memref<3x16xf32, #tpu.memory_space<vmem>>, vector<3x16xf32>
    %c0_9 = arith.constant 0 : index
    %c0_10 = arith.constant 0 : index
    %6 = vector.load %arg6[%c0_9, %c0_10] : memref<1x16xf32, #tpu.memory_space<vmem>>, vector<1x16xf32>
    %7 = vector.extract_strided_slice %4 {offsets = [0, 0, 0], sizes = [16, 8, 1], strides = [1, 1, 1]} : vector<16x8x3xf32> to vector<16x8x1xf32>
    %8 = vector.extract_strided_slice %5 {offsets = [0, 0], sizes = [1, 16], strides = [1, 1]} : vector<3x16xf32> to vector<1x16xf32>
    %9 = vector.shape_cast %8 : vector<1x16xf32> to vector<1x1x16xf32>
    %10 = vector.broadcast %7 : vector<16x8x1xf32> to vector<16x8x16xf32>
    %11 = vector.broadcast %9 : vector<1x1x16xf32> to vector<16x8x16xf32>
    %12 = arith.mulf %10, %11 : vector<16x8x16xf32>
    %13 = vector.extract_strided_slice %4 {offsets = [0, 0, 1], sizes = [16, 8, 1], strides = [1, 1, 1]} : vector<16x8x3xf32> to vector<16x8x1xf32>
    %14 = vector.extract_strided_slice %5 {offsets = [1, 0], sizes = [1, 16], strides = [1, 1]} : vector<3x16xf32> to vector<1x16xf32>
    %15 = vector.shape_cast %14 : vector<1x16xf32> to vector<1x1x16xf32>
    %16 = vector.broadcast %13 : vector<16x8x1xf32> to vector<16x8x16xf32>
    %17 = vector.broadcast %15 : vector<1x1x16xf32> to vector<16x8x16xf32>
    %18 = arith.mulf %16, %17 : vector<16x8x16xf32>
    %19 = arith.addf %12, %18 : vector<16x8x16xf32>
    %20 = vector.extract_strided_slice %4 {offsets = [0, 0, 2], sizes = [16, 8, 1], strides = [1, 1, 1]} : vector<16x8x3xf32> to vector<16x8x1xf32>
    %21 = vector.extract_strided_slice %5 {offsets = [2, 0], sizes = [1, 16], strides = [1, 1]} : vector<3x16xf32> to vector<1x16xf32>
    %22 = vector.shape_cast %21 : vector<1x16xf32> to vector<1x1x16xf32>
    %23 = vector.broadcast %20 : vector<16x8x1xf32> to vector<16x8x16xf32>
    %24 = vector.broadcast %22 : vector<1x1x16xf32> to vector<16x8x16xf32>
    %25 = arith.mulf %23, %24 : vector<16x8x16xf32>
    %26 = arith.addf %19, %25 : vector<16x8x16xf32>
    %27 = vector.shape_cast %6 : vector<1x16xf32> to vector<1x1x16xf32>
    %28 = vector.broadcast %27 : vector<1x1x16xf32> to vector<16x8x16xf32>
    %29 = arith.addf %26, %28 : vector<16x8x16xf32>
    %30 = arith.extf %1 : vector<16x8x16xbf16> to vector<16x8x16xf32>
    %31 = arith.addf %29, %30 : vector<16x8x16xf32>
    %cst = arith.constant 0.000000e+00 : f32
    %32 = vector.broadcast %cst : f32 to vector<16x8x16xf32>
    %33 = arith.maximumf %31, %32 : vector<16x8x16xf32>
    %34 = vector.shape_cast %33 : vector<16x8x16xf32> to vector<128x16xf32>
    %c0_11 = arith.constant 0 : index
    %c0_12 = arith.constant 0 : index
    %35 = vector.load %arg7[%c0_11, %c0_12] : memref<16x128xbf16, #tpu.memory_space<vmem>>, vector<16x128xbf16>
    %c0_13 = arith.constant 0 : index
    %c0_14 = arith.constant 0 : index
    %36 = vector.load %arg8[%c0_13, %c0_14] : memref<1x128xf32, #tpu.memory_space<vmem>>, vector<1x128xf32>
    %37 = arith.truncf %34 : vector<128x16xf32> to vector<128x16xbf16>
    %cst_15 = arith.constant dense<0.000000e+00> : vector<128x128xf32>
    %38 = tpu.matmul %37, %35, %cst_15 {dimension_numbers = #tpu.dot_dimension_numbers<[1], [0], [0], [1], [0, 0, 1, 1], [], []>} : vector<128x16xbf16>, vector<16x128xbf16>, vector<128x128xf32> -> vector<128x128xf32>
    %39 = vector.broadcast %36 : vector<1x128xf32> to vector<128x128xf32>
    %40 = arith.addf %38, %39 : vector<128x128xf32>
    %cst_16 = arith.constant 0.000000e+00 : f32
    %41 = vector.broadcast %cst_16 : f32 to vector<128x128xf32>
    %42 = arith.maximumf %40, %41 : vector<128x128xf32>
    %43 = vector.shape_cast %42 : vector<128x128xf32> to vector<16x8x128xf32>
    %cst_17 = arith.constant dense<0xFF800000> : vector<16x128xf32>
    %44 = vector.multi_reduction <maximumf>, %43, %cst_17 [1] : vector<16x8x128xf32> to vector<16x128xf32>
    %c0_i32 = arith.constant 0 : i32
    %45 = arith.cmpi eq, %arg2, %c0_i32 : i32
    %46 = arith.extui %45 : i1 to i32
    %c0_i32_18 = arith.constant 0 : i32
    %47 = arith.cmpi ne, %46, %c0_i32_18 : i32
    scf.if %47 {
      %cst_25 = arith.constant 0xFF800000 : f32
      %54 = vector.broadcast %cst_25 : f32 to vector<16x128xf32>
      %c0_26 = arith.constant 0 : index
      %c0_27 = arith.constant 0 : index
      %55 = vector.load %arg10[%c0_26, %c0_27] : memref<16x128xf32, #tpu.memory_space<vmem>>, vector<16x128xf32>
      tpu.vector_store %arg10[%c0_26, %c0_27], %54 {strides = array<i32>} : memref<16x128xf32, #tpu.memory_space<vmem>>, vector<16x128xf32>,
    } else {
    }
    %c0_19 = arith.constant 0 : index
    %c0_20 = arith.constant 0 : index
    %48 = vector.load %arg10[%c0_19, %c0_20] : memref<16x128xf32, #tpu.memory_space<vmem>>, vector<16x128xf32>
    %49 = arith.maximumf %48, %44 : vector<16x128xf32>
    %c0_21 = arith.constant 0 : index
    %c0_22 = arith.constant 0 : index
    %50 = vector.load %arg10[%c0_21, %c0_22] : memref<16x128xf32, #tpu.memory_space<vmem>>, vector<16x128xf32>
    tpu.vector_store %arg10[%c0_21, %c0_22], %49 {strides = array<i32>} : memref<16x128xf32, #tpu.memory_space<vmem>>, vector<16x128xf32>,
    %c0_i32_23 = arith.constant 0 : i32
    %51 = arith.cmpi eq, %arg2, %c0_i32_23 : i32
    %52 = arith.extui %51 : i1 to i32
    %c0_i32_24 = arith.constant 0 : i32
    %53 = arith.cmpi ne, %52, %c0_i32_24 : i32
    scf.if %53 {
      %c0_25 = arith.constant 0 : index
      %c0_26 = arith.constant 0 : index
      %54 = vector.load %arg10[%c0_25, %c0_26] : memref<16x128xf32, #tpu.memory_space<vmem>>, vector<16x128xf32>
      %55 = tpu.transpose %54, [1, 0] : vector<16x128xf32> -> vector<128x16xf32>
      %56 = arith.truncf %55 : vector<128x16xf32> to vector<128x16xbf16>
      %c0_27 = arith.constant 0 : index
      %c0_28 = arith.constant 0 : index
      %c0_29 = arith.constant 0 : index
      %57 = vector.load %arg9[%c0_27, %c0_28, %c0_29] : memref<1x128x16xbf16, #tpu.memory_space<vmem>>, vector<1x128x16xbf16>
      %58 = vector.shape_cast %57 : vector<1x128x16xbf16> to vector<128x16xbf16>
      %59 = vector.shape_cast %56 : vector<128x16xbf16> to vector<1x128x16xbf16>
      tpu.vector_store %arg9[%c0_27, %c0_28, %c0_29], %59 {strides = array<i32>} : memref<1x128x16xbf16, #tpu.memory_space<vmem>>, vector<1x128x16xbf16>,
    } else {
    }
    return
  }
  func.func @transform_0(%arg0: i32, %arg1: i32, %arg2: i32) -> (i32, i32, i32, i32) {
    %c0_i32 = arith.constant 0 : i32
    %c0_i32_0 = arith.constant 0 : i32
    return %arg0, %arg1, %arg2, %c0_i32 : i32, i32, i32, i32
  }
  func.func @transform_1(%arg0: i32, %arg1: i32, %arg2: i32) -> (i32, i32, i32, i32) {
    %c0_i32 = arith.constant 0 : i32
    %c0_i32_0 = arith.constant 0 : i32
    return %arg0, %arg1, %arg2, %c0_i32 : i32, i32, i32, i32
  }
  func.func @transform_2(%arg0: i32, %arg1: i32, %arg2: i32) -> (i32, i32) {
    %c0_i32 = arith.constant 0 : i32
    %c0_i32_0 = arith.constant 0 : i32
    %c0_i32_1 = arith.constant 0 : i32
    return %c0_i32, %c0_i32_0 : i32, i32
  }
  func.func @transform_3(%arg0: i32, %arg1: i32, %arg2: i32) -> (i32, i32) {
    %c0_i32 = arith.constant 0 : i32
    %c0_i32_0 = arith.constant 0 : i32
    %c0_i32_1 = arith.constant 0 : i32
    return %c0_i32, %c0_i32_0 : i32, i32
  }
  func.func @transform_4(%arg0: i32, %arg1: i32, %arg2: i32) -> (i32, i32) {
    %c0_i32 = arith.constant 0 : i32
    %c0_i32_0 = arith.constant 0 : i32
    %c0_i32_1 = arith.constant 0 : i32
    return %c0_i32, %c0_i32_0 : i32, i32
  }
  func.func @transform_5(%arg0: i32, %arg1: i32, %arg2: i32) -> (i32, i32) {
    %c0_i32 = arith.constant 0 : i32
    %c0_i32_0 = arith.constant 0 : i32
    %c0_i32_1 = arith.constant 0 : i32
    return %c0_i32, %c0_i32_0 : i32, i32
  }
  func.func @transform_6(%arg0: i32, %arg1: i32, %arg2: i32) -> (i32, i32, i32) {
    %c0_i32 = arith.constant 0 : i32
    %c0_i32_0 = arith.constant 0 : i32
    return %arg0, %c0_i32, %arg1 : i32, i32, i32
  }
}

module attributes {stable_mosaic.version = 11 : i64} {
  func.func @kernel(%arg0: i32, %arg1: i32, %arg2: i32, %arg3: memref<1x16x16x16xbf16, #tpu.memory_space<vmem>>, %arg4: memref<1x16x16x3xbf16, #tpu.memory_space<vmem>>, %arg5: memref<3x16xf32, #tpu.memory_space<vmem>>, %arg6: memref<1x16xf32, #tpu.memory_space<vmem>>, %arg7: memref<16x128xbf16, #tpu.memory_space<vmem>>, %arg8: memref<1x128xf32, #tpu.memory_space<vmem>>, %arg9: memref<1x128x16xbf16, #tpu.memory_space<vmem>>, %arg10: memref<16x128xf32, #tpu.memory_space<vmem>>) attributes {dimension_semantics = [#tpu.dimension_semantics<parallel>, #tpu.dimension_semantics<parallel>, #tpu.dimension_semantics<arbitrary>], iteration_bounds = array<i64: 2, 1, 1>, scalar_prefetch = 0 : i64, scratch_operands = 1 : i64, tpu.core_type = #tpu.core_type<tc>, window_params = [{transform_indices = @transform_0, window_bounds = array<i64: 1, 16, 16, 16>}, {transform_indices = @transform_1, window_bounds = array<i64: 1, 16, 16, 3>}, {pipeline_mode = #tpu.pipeline_mode<synchronous>, transform_indices = @transform_2, window_bounds = array<i64: 3, 16>}, {pipeline_mode = #tpu.pipeline_mode<synchronous>, transform_indices = @transform_3, window_bounds = array<i64: 1, 16>}, {pipeline_mode = #tpu.pipeline_mode<synchronous>, transform_indices = @transform_4, window_bounds = array<i64: 16, 128>}, {pipeline_mode = #tpu.pipeline_mode<synchronous>, transform_indices = @transform_5, window_bounds = array<i64: 1, 128>}, {transform_indices = @transform_6, window_bounds = array<i64: 1, 128, 16>}]} {
    %c0 = arith.constant 0 : index
    %c0_0 = arith.constant 0 : index
    %c0_1 = arith.constant 0 : index
    %c0_2 = arith.constant 0 : index
    %0 = vector.load %arg3[%c0, %c0_0, %c0_1, %c0_2] : memref<1x16x16x16xbf16, #tpu.memory_space<vmem>>, vector<1x16x16x16xbf16>
    %1 = vector.shape_cast %0 : vector<1x16x16x16xbf16> to vector<16x16x16xbf16>
    %c0_3 = arith.constant 0 : index
    %c0_4 = arith.constant 0 : index
    %c0_5 = arith.constant 0 : index
    %c0_6 = arith.constant 0 : index
    %2 = vector.load %arg4[%c0_3, %c0_4, %c0_5, %c0_6] : memref<1x16x16x3xbf16, #tpu.memory_space<vmem>>, vector<1x16x16x3xbf16>
    %3 = vector.shape_cast %2 : vector<1x16x16x3xbf16> to vector<16x16x3xbf16>
    %4 = arith.extf %3 : vector<16x16x3xbf16> to vector<16x16x3xf32>
    %c0_7 = arith.constant 0 : index
    %c0_8 = arith.constant 0 : index
    %5 = vector.load %arg5[%c0_7, %c0_8] : memref<3x16xf32, #tpu.memory_space<vmem>>, vector<3x16xf32>
    %c0_9 = arith.constant 0 : index
    %c0_10 = arith.constant 0 : index
    %6 = vector.load %arg6[%c0_9, %c0_10] : memref<1x16xf32, #tpu.memory_space<vmem>>, vector<1x16xf32>
    %7 = vector.extract_strided_slice %4 {offsets = [0, 0, 0], sizes = [16, 16, 1], strides = [1, 1, 1]} : vector<16x16x3xf32> to vector<16x16x1xf32>
    %8 = vector.extract_strided_slice %5 {offsets = [0, 0], sizes = [1, 16], strides = [1, 1]} : vector<3x16xf32> to vector<1x16xf32>
    %9 = vector.shape_cast %8 : vector<1x16xf32> to vector<1x1x16xf32>
    %10 = vector.broadcast %7 : vector<16x16x1xf32> to vector<16x16x16xf32>
    %11 = vector.broadcast %9 : vector<1x1x16xf32> to vector<16x16x16xf32>
    %12 = arith.mulf %10, %11 : vector<16x16x16xf32>
    %13 = vector.extract_strided_slice %4 {offsets = [0, 0, 1], sizes = [16, 16, 1], strides = [1, 1, 1]} : vector<16x16x3xf32> to vector<16x16x1xf32>
    %14 = vector.extract_strided_slice %5 {offsets = [1, 0], sizes = [1, 16], strides = [1, 1]} : vector<3x16xf32> to vector<1x16xf32>
    %15 = vector.shape_cast %14 : vector<1x16xf32> to vector<1x1x16xf32>
    %16 = vector.broadcast %13 : vector<16x16x1xf32> to vector<16x16x16xf32>
    %17 = vector.broadcast %15 : vector<1x1x16xf32> to vector<16x16x16xf32>
    %18 = arith.mulf %16, %17 : vector<16x16x16xf32>
    %19 = arith.addf %12, %18 : vector<16x16x16xf32>
    %20 = vector.extract_strided_slice %4 {offsets = [0, 0, 2], sizes = [16, 16, 1], strides = [1, 1, 1]} : vector<16x16x3xf32> to vector<16x16x1xf32>
    %21 = vector.extract_strided_slice %5 {offsets = [2, 0], sizes = [1, 16], strides = [1, 1]} : vector<3x16xf32> to vector<1x16xf32>
    %22 = vector.shape_cast %21 : vector<1x16xf32> to vector<1x1x16xf32>
    %23 = vector.broadcast %20 : vector<16x16x1xf32> to vector<16x16x16xf32>
    %24 = vector.broadcast %22 : vector<1x1x16xf32> to vector<16x16x16xf32>
    %25 = arith.mulf %23, %24 : vector<16x16x16xf32>
    %26 = arith.addf %19, %25 : vector<16x16x16xf32>
    %27 = vector.shape_cast %6 : vector<1x16xf32> to vector<1x1x16xf32>
    %28 = vector.broadcast %27 : vector<1x1x16xf32> to vector<16x16x16xf32>
    %29 = arith.addf %26, %28 : vector<16x16x16xf32>
    %30 = arith.extf %1 : vector<16x16x16xbf16> to vector<16x16x16xf32>
    %31 = arith.addf %29, %30 : vector<16x16x16xf32>
    %cst = arith.constant 0.000000e+00 : f32
    %32 = vector.broadcast %cst : f32 to vector<16x16x16xf32>
    %33 = arith.maximumf %31, %32 : vector<16x16x16xf32>
    %34 = vector.shape_cast %33 : vector<16x16x16xf32> to vector<256x16xf32>
    %c0_11 = arith.constant 0 : index
    %c0_12 = arith.constant 0 : index
    %35 = vector.load %arg7[%c0_11, %c0_12] : memref<16x128xbf16, #tpu.memory_space<vmem>>, vector<16x128xbf16>
    %c0_13 = arith.constant 0 : index
    %c0_14 = arith.constant 0 : index
    %36 = vector.load %arg8[%c0_13, %c0_14] : memref<1x128xf32, #tpu.memory_space<vmem>>, vector<1x128xf32>
    %37 = arith.truncf %34 : vector<256x16xf32> to vector<256x16xbf16>
    %cst_15 = arith.constant dense<0.000000e+00> : vector<256x128xf32>
    %38 = tpu.matmul %37, %35, %cst_15 {dimension_numbers = #tpu.dot_dimension_numbers<[1], [0], [0], [1], [0, 0, 1, 1], [], []>} : vector<256x16xbf16>, vector<16x128xbf16>, vector<256x128xf32> -> vector<256x128xf32>
    %39 = vector.broadcast %36 : vector<1x128xf32> to vector<256x128xf32>
    %40 = arith.addf %38, %39 : vector<256x128xf32>
    %cst_16 = arith.constant 0.000000e+00 : f32
    %41 = vector.broadcast %cst_16 : f32 to vector<256x128xf32>
    %42 = arith.maximumf %40, %41 : vector<256x128xf32>
    %43 = vector.shape_cast %42 : vector<256x128xf32> to vector<16x16x128xf32>
    %cst_17 = arith.constant dense<0xFF800000> : vector<16x128xf32>
    %44 = vector.multi_reduction <maximumf>, %43, %cst_17 [1] : vector<16x16x128xf32> to vector<16x128xf32>
    %c0_i32 = arith.constant 0 : i32
    %45 = arith.cmpi eq, %arg2, %c0_i32 : i32
    %46 = arith.extui %45 : i1 to i32
    %c0_i32_18 = arith.constant 0 : i32
    %47 = arith.cmpi ne, %46, %c0_i32_18 : i32
    scf.if %47 {
      %cst_25 = arith.constant 0xFF800000 : f32
      %54 = vector.broadcast %cst_25 : f32 to vector<16x128xf32>
      %c0_26 = arith.constant 0 : index
      %c0_27 = arith.constant 0 : index
      %55 = vector.load %arg10[%c0_26, %c0_27] : memref<16x128xf32, #tpu.memory_space<vmem>>, vector<16x128xf32>
      tpu.vector_store %arg10[%c0_26, %c0_27], %54 {strides = array<i32>} : memref<16x128xf32, #tpu.memory_space<vmem>>, vector<16x128xf32>,
    } else {
    }
    %c0_19 = arith.constant 0 : index
    %c0_20 = arith.constant 0 : index
    %48 = vector.load %arg10[%c0_19, %c0_20] : memref<16x128xf32, #tpu.memory_space<vmem>>, vector<16x128xf32>
    %49 = arith.maximumf %48, %44 : vector<16x128xf32>
    %c0_21 = arith.constant 0 : index
    %c0_22 = arith.constant 0 : index
    %50 = vector.load %arg10[%c0_21, %c0_22] : memref<16x128xf32, #tpu.memory_space<vmem>>, vector<16x128xf32>
    tpu.vector_store %arg10[%c0_21, %c0_22], %49 {strides = array<i32>} : memref<16x128xf32, #tpu.memory_space<vmem>>, vector<16x128xf32>,
    %c0_i32_23 = arith.constant 0 : i32
    %51 = arith.cmpi eq, %arg2, %c0_i32_23 : i32
    %52 = arith.extui %51 : i1 to i32
    %c0_i32_24 = arith.constant 0 : i32
    %53 = arith.cmpi ne, %52, %c0_i32_24 : i32
    scf.if %53 {
      %c0_25 = arith.constant 0 : index
      %c0_26 = arith.constant 0 : index
      %54 = vector.load %arg10[%c0_25, %c0_26] : memref<16x128xf32, #tpu.memory_space<vmem>>, vector<16x128xf32>
      %55 = tpu.transpose %54, [1, 0] : vector<16x128xf32> -> vector<128x16xf32>
      %56 = arith.truncf %55 : vector<128x16xf32> to vector<128x16xbf16>
      %c0_27 = arith.constant 0 : index
      %c0_28 = arith.constant 0 : index
      %c0_29 = arith.constant 0 : index
      %57 = vector.load %arg9[%c0_27, %c0_28, %c0_29] : memref<1x128x16xbf16, #tpu.memory_space<vmem>>, vector<1x128x16xbf16>
      %58 = vector.shape_cast %57 : vector<1x128x16xbf16> to vector<128x16xbf16>
      %59 = vector.shape_cast %56 : vector<128x16xbf16> to vector<1x128x16xbf16>
      tpu.vector_store %arg9[%c0_27, %c0_28, %c0_29], %59 {strides = array<i32>} : memref<1x128x16xbf16, #tpu.memory_space<vmem>>, vector<1x128x16xbf16>,
    } else {
    }
    return
  }
  func.func @transform_0(%arg0: i32, %arg1: i32, %arg2: i32) -> (i32, i32, i32, i32) {
    %c0_i32 = arith.constant 0 : i32
    %c0_i32_0 = arith.constant 0 : i32
    return %arg0, %arg1, %arg2, %c0_i32 : i32, i32, i32, i32
  }
  func.func @transform_1(%arg0: i32, %arg1: i32, %arg2: i32) -> (i32, i32, i32, i32) {
    %c0_i32 = arith.constant 0 : i32
    %c0_i32_0 = arith.constant 0 : i32
    return %arg0, %arg1, %arg2, %c0_i32 : i32, i32, i32, i32
  }
  func.func @transform_2(%arg0: i32, %arg1: i32, %arg2: i32) -> (i32, i32) {
    %c0_i32 = arith.constant 0 : i32
    %c0_i32_0 = arith.constant 0 : i32
    %c0_i32_1 = arith.constant 0 : i32
    return %c0_i32, %c0_i32_0 : i32, i32
  }
  func.func @transform_3(%arg0: i32, %arg1: i32, %arg2: i32) -> (i32, i32) {
    %c0_i32 = arith.constant 0 : i32
    %c0_i32_0 = arith.constant 0 : i32
    %c0_i32_1 = arith.constant 0 : i32
    return %c0_i32, %c0_i32_0 : i32, i32
  }
  func.func @transform_4(%arg0: i32, %arg1: i32, %arg2: i32) -> (i32, i32) {
    %c0_i32 = arith.constant 0 : i32
    %c0_i32_0 = arith.constant 0 : i32
    %c0_i32_1 = arith.constant 0 : i32
    return %c0_i32, %c0_i32_0 : i32, i32
  }
  func.func @transform_5(%arg0: i32, %arg1: i32, %arg2: i32) -> (i32, i32) {
    %c0_i32 = arith.constant 0 : i32
    %c0_i32_0 = arith.constant 0 : i32
    %c0_i32_1 = arith.constant 0 : i32
    return %c0_i32, %c0_i32_0 : i32, i32
  }
  func.func @transform_6(%arg0: i32, %arg1: i32, %arg2: i32) -> (i32, i32, i32) {
    %c0_i32 = arith.constant 0 : i32
    %c0_i32_0 = arith.constant 0 : i32
    return %arg0, %c0_i32, %arg1 : i32, i32, i32
  }
}

</mosaic_0001>

<llo_original>
// kernel: custom-call.12
$region0: #{custom-call.12}
  %s0 = inlined_call_operand.vmem [shape: f32[2,64], index: 0, kind: output, shape index: {}]

// kernel: pointnet_sa_msg_forward.2
$region0: #{pointnet_sa_msg_forward.2}
  #allocation0 [shape = 'u32[]', space=smem, size = 0x4, offset = 0x4, fixed_abs, tag = 'smem constant byte address 0x4 - core index']
  #allocation1 [shape = 'u32[144,128]{1,0:T(1,128)}', space=vmem, size = 0x12000, scoped, tag = 'internal scratch']
  #allocation2 [shape = 'f32[16,128]{1,0:T(8,128)}', space=vmem, size = 0x2000, scoped, tag = 'scratch operand']
  %s0 = inlined_call_operand.hbm [shape: bf16[2,16,8,16], index: 0, kind: input, shape index: {}]
  %s1 = inlined_call_operand.hbm [shape: bf16[2,16,8,3], index: 1, kind: input, shape index: {}]
  %s2 = inlined_call_operand.hbm [shape: f32[3,16], index: 2, kind: input, shape index: {}]
  %s3 = inlined_call_operand.hbm [shape: f32[1,16], index: 3, kind: input, shape index: {}]
  %s4 = inlined_call_operand.hbm [shape: bf16[16,128], index: 4, kind: input, shape index: {}]
  %s5 = inlined_call_operand.hbm [shape: f32[1,128], index: 5, kind: input, shape index: {}]
  %s6 = inlined_call_operand.hbm [shape: bf16[2,128,16], index: 6, kind: output, shape index: {}]
  %s7 = sld [smem:[#allocation0]]
  $region89: #{pointnet_sa_msg_forward.2} parent=0
    _
  %s9 = ssub.s32 1, %s7
  %s10 = scalar_select 0, %s9, %s7
  $region1: #{pointnet_sa_msg_forward.2} parent=0
    #allocation3 [shape = 'u8[65536]{0}', space=vmem, size = 0x10000, scoped, tag = 'input window, operand 0']
    #allocation4 [shape = 's32[2]{0}', space=sflag, size = 0x8, scoped, tag = 'scoped memory for pointnet_sa_msg_forward.2']
    #allocation5 [shape = 's32[2]{0}', space=sflag, size = 0x8, scoped, tag = 'scoped memory for pointnet_sa_msg_forward.2']
    #allocation6 [shape = 'u8[65536]{0}', space=vmem, size = 0x10000, scoped, tag = 'input window, operand 1']
    #allocation7 [shape = 's32[2]{0}', space=sflag, size = 0x8, scoped, tag = 'scoped memory for pointnet_sa_msg_forward.2']
    #allocation8 [shape = 'u8[2048]{0}', space=vmem, size = 0x800, scoped, tag = 'input window, operand 2, single buffered']
    #allocation9 [shape = 'u8[512]{0}', space=vmem, size = 0x400, scoped, tag = 'input window, operand 3, single buffered']
    #allocation10 [shape = 's32[1]{0}', space=sflag, size = 0x4, scoped, tag = 'scoped memory for pointnet_sa_msg_forward.2']
    #allocation11 [shape = 'u8[4096]{0}', space=vmem, size = 0x1000, scoped, tag = 'input window, operand 4, single buffered']
    #allocation12 [shape = 'u8[512]{0}', space=vmem, size = 0x400, scoped, tag = 'input window, operand 5, single buffered']
    #allocation13 [shape = 's32[1]{0}', space=sflag, size = 0x4, scoped, tag = 'scoped memory for pointnet_sa_msg_forward.2']
    #allocation14 [shape = 'u8[65536]{0}', space=vmem, size = 0x10000, scoped, tag = 'output window, operand 0']
    %11 = vsyncpa [#allocation4], 0
    %s12 = scalar_lea.sflag [#allocation4], 1
    %13 = vsyncpa %s12, 0
    %14 = vsyncpa [#allocation7], 0
    %s15 = scalar_lea.sflag [#allocation7], 1
    %16 = vsyncpa %s15, 0
    %17 = vsyncpa [#allocation10], 0
    %18 = vsyncpa [#allocation13], 0
    %19 = vsyncpa [#allocation5], 0
    %s20 = scalar_lea.sflag [#allocation5], 1
    %21 = vsyncpa %s20, 0
    loop: start=0, step=1, limit=4
    $region2: #{pointnet_sa_msg_forward.2} parent=1 // loop_pre_header
      _
    $region3: #{pointnet_sa_msg_forward.2} parent=1 // loop_header
      %s23 = sphi 0, %s27
      %p24 = scmp.ge.s32.totalorder %s23, 4
      %s30 = sphi 0, %s49
      %s31 = sphi 0, %s45
      %s32 = sphi 0, %s41
      %s33 = sphi 0, %s30
      %s34 = sphi 0, %s31
      %s35 = sphi 0, %s32
      %s36 = sphi 0, %s33
      %s37 = sphi 0, %s34
      %s38 = sphi 0, %s35
      %s56 = sphi 0, %s58
      %s59 = sphi 0, %s56
      %s60 = sphi 0, %s59
      %s76 = sphi 0, %s60
      %s86 = sphi 0, %s88
      %s89 = sphi 0, %s86
      %s90 = sphi 0, %s89
      %s106 = sphi 0, %s90
      %s110 = sphi 0, %s110
      %s112 = sphi 0, %s110
      %s113 = sphi 0, %s112
      %s127 = sphi 0, %s113
      %s131 = sphi 0, %s131
      %s133 = sphi 0, %s131
      %s134 = sphi 0, %s133
      %s148 = sphi 0, %s134
      %s152 = sphi 0, %s152
      %s154 = sphi 0, %s152
      %s155 = sphi 0, %s154
      %s169 = sphi 0, %s155
      %s173 = sphi 0, %s173
      %s175 = sphi 0, %s173
      %s176 = sphi 0, %s175
      %s190 = sphi 0, %s176
      %s198 = sphi 0, %s200
      %s201 = sphi 0, %s198
      %s202 = sphi 0, %s201
      %s218 = sphi 0, %s202
    $region4: #{pointnet_sa_msg_forward.2} parent=1 // loop_header_branch
      %26 = sbr.rel (%p24) target = $region8
    $region5: #{pointnet_sa_msg_forward.2} parent=1 // loop_body
      %s28 = ssub.s32 %s23, 1
      %s29 = ssub.s32 %s23, 2
      %s39 = sadd.s32 1, %s32
      %p40 = scmp.ge.s32.totalorder %s39, 1
      %s41 = scalar_select %p40, 0, %s39
      %s42 = sadd.s32 1, %s31
      %s43 = scalar_select %p40, %s42, %s31
      %p44 = scmp.ge.s32.totalorder %s43, 1
      %s45 = scalar_select %p44, 0, %s43
      %s46 = sadd.s32 1, %s30
      %s47 = scalar_select %p44, %s46, %s30
      %p48 = scmp.ge.s32.totalorder %s47, 2
      %s49 = scalar_select %p48, 0, %s47
      %s50 = ssub.s32 %s30, %s49
      %s51 = ssub.s32 %s31, %s45
      %s52 = sor.u32 %s50, %s51
      %s53 = ssub.s32 %s32, %s41
      %s54 = sor.u32 %s52, %s53
      %p55 = scmp.eq.s32.totalorder %s54, 0
      %s57 = sadd.s32 %s56, 1
      %s58 = scalar_select %p55, %s56, %s57
      %p61 = pneg %p55
      %p62 = scmp.eq.s32.totalorder %s23, 1
      %p63 = por %p61, %p62
      %p64 = scmp.ne.s32.totalorder %s56, %s59
      %p65 = scmp.eq.s32.totalorder %s23, 0
      %p66 = por %p64, %p65
      %p67 = scmp.ne.s32.totalorder %s56, %s59
      %p68 = scmp.eq.s32.totalorder %s28, 1
      %p69 = por %p67, %p68
      %p70 = scmp.ne.s32.totalorder %s59, %s60
      %p71 = scmp.eq.s32.totalorder %s28, 0
      %p72 = por %p70, %p71
      %p73 = scmp.ne.s32.totalorder %s59, %s60
      %p74 = scmp.eq.s32.totalorder %s29, 1
      %p75 = por %p73, %p74
      %p77 = scmp.ne.s32.totalorder %s60, %s76
      %p78 = scmp.eq.s32.totalorder %s29, 0
      %p79 = por %p77, %p78
      %s80 = ssub.s32 %s30, %s49
      %s81 = ssub.s32 %s31, %s45
      %s82 = sor.u32 %s80, %s81
      %s83 = ssub.s32 %s32, %s41
      %s84 = sor.u32 %s82, %s83
      %p85 = scmp.eq.s32.totalorder %s84, 0
      %s87 = sadd.s32 %s86, 1
      %s88 = scalar_select %p85, %s86, %s87
      %p91 = pneg %p85
      %p92 = scmp.eq.s32.totalorder %s23, 1
      %p93 = por %p91, %p92
      %p94 = scmp.ne.s32.totalorder %s86, %s89
      %p95 = scmp.eq.s32.totalorder %s23, 0
      %p96 = por %p94, %p95
      %p97 = scmp.ne.s32.totalorder %s86, %s89
      %p98 = scmp.eq.s32.totalorder %s28, 1
      %p99 = por %p97, %p98
      %p100 = scmp.ne.s32.totalorder %s89, %s90
      %p101 = scmp.eq.s32.totalorder %s28, 0
      %p102 = por %p100, %p101
      %p103 = scmp.ne.s32.totalorder %s89, %s90
      %p104 = scmp.eq.s32.totalorder %s29, 1
      %p105 = por %p103, %p104
      %p107 = scmp.ne.s32.totalorder %s90, %s106
      %p108 = scmp.eq.s32.totalorder %s29, 0
      %p109 = por %p107, %p108
      %s111 = sadd.s32 %s110, 1
      %p114 = scmp.eq.s32.totalorder %s23, 1
      %p115 = scmp.ne.s32.totalorder %s110, %s112
      %p116 = scmp.eq.s32.totalorder %s23, 0
      %p117 = por %p115, %p116
      %p118 = scmp.ne.s32.totalorder %s110, %s112
      %p119 = scmp.eq.s32.totalorder %s28, 1
      %p120 = por %p118, %p119
      %p121 = scmp.ne.s32.totalorder %s112, %s113
      %p122 = scmp.eq.s32.totalorder %s28, 0
      %p123 = por %p121, %p122
      %p124 = scmp.ne.s32.totalorder %s112, %s113
      %p125 = scmp.eq.s32.totalorder %s29, 1
      %p126 = por %p124, %p125
      %p128 = scmp.ne.s32.totalorder %s113, %s127
      %p129 = scmp.eq.s32.totalorder %s29, 0
      %p130 = por %p128, %p129
      %s132 = sadd.s32 %s131, 1
      %p135 = scmp.eq.s32.totalorder %s23, 1
      %p136 = scmp.ne.s32.totalorder %s131, %s133
      %p137 = scmp.eq.s32.totalorder %s23, 0
      %p138 = por %p136, %p137
      %p139 = scmp.ne.s32.totalorder %s131, %s133
      %p140 = scmp.eq.s32.totalorder %s28, 1
      %p141 = por %p139, %p140
      %p142 = scmp.ne.s32.totalorder %s133, %s134
      %p143 = scmp.eq.s32.totalorder %s28, 0
      %p144 = por %p142, %p143
      %p145 = scmp.ne.s32.totalorder %s133, %s134
      %p146 = scmp.eq.s32.totalorder %s29, 1
      %p147 = por %p145, %p146
      %p149 = scmp.ne.s32.totalorder %s134, %s148
      %p150 = scmp.eq.s32.totalorder %s29, 0
      %p151 = por %p149, %p150
      %s153 = sadd.s32 %s152, 1
      %p156 = scmp.eq.s32.totalorder %s23, 1
      %p157 = scmp.ne.s32.totalorder %s152, %s154
      %p158 = scmp.eq.s32.totalorder %s23, 0
      %p159 = por %p157, %p158
      %p160 = scmp.ne.s32.totalorder %s152, %s154
      %p161 = scmp.eq.s32.totalorder %s28, 1
      %p162 = por %p160, %p161
      %p163 = scmp.ne.s32.totalorder %s154, %s155
      %p164 = scmp.eq.s32.totalorder %s28, 0
      %p165 = por %p163, %p164
      %p166 = scmp.ne.s32.totalorder %s154, %s155
      %p167 = scmp.eq.s32.totalorder %s29, 1
      %p168 = por %p166, %p167
      %p170 = scmp.ne.s32.totalorder %s155, %s169
      %p171 = scmp.eq.s32.totalorder %s29, 0
      %p172 = por %p170, %p171
      %s174 = sadd.s32 %s173, 1
      %p177 = scmp.eq.s32.totalorder %s23, 1
      %p178 = scmp.ne.s32.totalorder %s173, %s175
      %p179 = scmp.eq.s32.totalorder %s23, 0
      %p180 = por %p178, %p179
      %p181 = scmp.ne.s32.totalorder %s173, %s175
      %p182 = scmp.eq.s32.totalorder %s28, 1
      %p183 = por %p181, %p182
      %p184 = scmp.ne.s32.totalorder %s175, %s176
      %p185 = scmp.eq.s32.totalorder %s28, 0
      %p186 = por %p184, %p185
      %p187 = scmp.ne.s32.totalorder %s175, %s176
      %p188 = scmp.eq.s32.totalorder %s29, 1
      %p189 = por %p187, %p188
      %p191 = scmp.ne.s32.totalorder %s176, %s190
      %p192 = scmp.eq.s32.totalorder %s29, 0
      %p193 = por %p191, %p192
      %s194 = ssub.s32 %s30, %s49
      %s195 = ssub.s32 %s31, %s45
      %s196 = sor.u32 %s194, %s195
      %p197 = scmp.eq.s32.totalorder %s196, 0
      %s199 = sadd.s32 %s198, 1
      %s200 = scalar_select %p197, %s198, %s199
      %p203 = pneg %p197
      %p204 = scmp.eq.s32.totalorder %s23, 1
      %p205 = por %p203, %p204
      %p206 = scmp.ne.s32.totalorder %s198, %s201
      %p207 = scmp.eq.s32.totalorder %s23, 0
      %p208 = por %p206, %p207
      %p209 = scmp.ne.s32.totalorder %s198, %s201
      %p210 = scmp.eq.s32.totalorder %s28, 1
      %p211 = por %p209, %p210
      %p212 = scmp.ne.s32.totalorder %s201, %s202
      %p213 = scmp.eq.s32.totalorder %s28, 0
      %p214 = por %p212, %p213
      %p215 = scmp.ne.s32.totalorder %s201, %s202
      %p216 = scmp.eq.s32.totalorder %s29, 1
      %p217 = por %p215, %p216
      %p219 = scmp.ne.s32.totalorder %s202, %s218
      %p220 = scmp.eq.s32.totalorder %s29, 0
      %p221 = por %p219, %p220
      %p222 = scmp.le.s32.totalorder 1, %s23
      %p223 = scmp.lt.s32.totalorder %s23, 3
      %p224 = pnand %p222, %p223
      %p225 = pneg %p224
      // Predicated region
      $region9: #{pointnet_sa_msg_forward.2} parent=5 // pred_check
        _
      $region10: #{pointnet_sa_msg_forward.2} parent=5 // pred_check_branch
        %227 = sbr.rel (%p224) target = $region12
      $region11: #{pointnet_sa_msg_forward.2} parent=5 // pred_region
        %s228 = ssub.s32 %s23, 1
        // Predicated region
        $region13: #{pointnet_sa_msg_forward.2} parent=11 // pred_check
          %p229 = pneg %p123
        $region14: #{pointnet_sa_msg_forward.2} parent=11 // pred_check_branch
          %231 = sbr.rel (%p229) target = $region16
        $region15: #{pointnet_sa_msg_forward.2} parent=11 // pred_region
          %s233 = ssub.s32 64, 64
          %234 = vsyncadd [#allocation7], %s233
          %s236 = sshll.u32 [#allocation8], 4
          %s237 = int_to_ptr.vmem [resolvable:$true] %s236
          %239 = dma.hbm_to_vmem [thread:$0]  %s2, 64, %s237, [#allocation7]
        $region16: #{pointnet_sa_msg_forward.2} parent=11 // pred_fallthru
          _
        // Predicated region
        $region17: #{pointnet_sa_msg_forward.2} parent=11 // pred_check
          %p240 = pneg %p144
        $region18: #{pointnet_sa_msg_forward.2} parent=11 // pred_check_branch
          %242 = sbr.rel (%p240) target = $region20
        $region19: #{pointnet_sa_msg_forward.2} parent=11 // pred_region
          %s244 = ssub.s32 16, 16
          %245 = vsyncadd [#allocation10], %s244
          %s247 = sshll.u32 [#allocation9], 4
          %s248 = int_to_ptr.vmem [resolvable:$true] %s247
          %250 = dma.hbm_to_vmem [thread:$0]  %s3, 16, %s248, [#allocation10]
        $region20: #{pointnet_sa_msg_forward.2} parent=11 // pred_fallthru
          _
        // Predicated region
        $region21: #{pointnet_sa_msg_forward.2} parent=11 // pred_check
          %p251 = pneg %p165
        $region22: #{pointnet_sa_msg_forward.2} parent=11 // pred_check_branch
          %253 = sbr.rel (%p251) target = $region24
        $region23: #{pointnet_sa_msg_forward.2} parent=11 // pred_region
          %s255 = ssub.s32 128, 128
          %256 = vsyncadd [#allocation10], %s255
          %s257 = sshll.u32 [#allocation11], 4
          %s258 = int_to_ptr.vmem [resolvable:$true] %s257
          %263 = dma.hbm_to_vmem [thread:$0]  %s4, 128, %s258, [#allocation10], 64, 64, 4
        $region24: #{pointnet_sa_msg_forward.2} parent=11 // pred_fallthru
          _
        // Predicated region
        $region25: #{pointnet_sa_msg_forward.2} parent=11 // pred_check
          %p264 = pneg %p186
        $region26: #{pointnet_sa_msg_forward.2} parent=11 // pred_check_branch
          %266 = sbr.rel (%p264) target = $region28
        $region27: #{pointnet_sa_msg_forward.2} parent=11 // pred_region
          %s268 = ssub.s32 16, 16
          %269 = vsyncadd [#allocation13], %s268
          %s271 = sshll.u32 [#allocation12], 4
          %s272 = int_to_ptr.vmem [resolvable:$true] %s271
          %274 = dma.hbm_to_vmem [thread:$0]  %s5, 16, %s272, [#allocation13]
        $region28: #{pointnet_sa_msg_forward.2} parent=11 // pred_fallthru
          _
      $region12: #{pointnet_sa_msg_forward.2} parent=5 // pred_fallthru
        _
      %p275 = scmp.lt.s32.totalorder %s23, 2
      // Predicated region
      $region29: #{pointnet_sa_msg_forward.2} parent=5 // pred_check
        %p276 = pneg %p275
      $region30: #{pointnet_sa_msg_forward.2} parent=5 // pred_check_branch
        %278 = sbr.rel (%p276) target = $region32
      $region31: #{pointnet_sa_msg_forward.2} parent=5 // pred_region
        // Predicated region
        $region33: #{pointnet_sa_msg_forward.2} parent=31 // pred_check
          %p279 = pneg %p66
        $region34: #{pointnet_sa_msg_forward.2} parent=31 // pred_check_branch
          %281 = sbr.rel (%p279) target = $region36
        $region35: #{pointnet_sa_msg_forward.2} parent=31 // pred_region
          %s282 = sand.u32 %s56, 1
          %s283 = scalar_lea.sflag [#allocation4], %s282
          %s284 = sand.u32 %s56, 1
          %s285 = smul.addr %s284, 64
          %s286 = scalar_lea.vmem [#allocation3], %s285
          %s287 = smul.u32 16, %s31
          %s289 = ssub.s32 1024, 1024
          %290 = vsyncadd %s283, %s289
          %s291 = sadd.s32 %s32, %s287
          %s292 = smul.addr %s30, 16
          %s293 = sadd.s32 %s291, %s292
          %s294 = smul.addr %s293, 64
          %s295 = scalar_lea.hbm %s0, %s294
          %s296 = sshll.u32 %s286, 4
          %s297 = int_to_ptr.vmem [resolvable:$true] %s296
          %302 = dma.hbm_to_vmem [thread:$0]  %s295, 1024, %s297, %s283, 64, 64, 4
        $region36: #{pointnet_sa_msg_forward.2} parent=31 // pred_fallthru
          _
        // Predicated region
        $region37: #{pointnet_sa_msg_forward.2} parent=31 // pred_check
          %p303 = pneg %p96
        $region38: #{pointnet_sa_msg_forward.2} parent=31 // pred_check_branch
          %305 = sbr.rel (%p303) target = $region40
        $region39: #{pointnet_sa_msg_forward.2} parent=31 // pred_region
          %s306 = sand.u32 %s23, 1
          %s307 = scalar_lea.sflag [#allocation7], %s306
          %s308 = sand.u32 %s86, 1
          %s309 = smul.addr %s308, 64
          %s310 = scalar_lea.vmem [#allocation6], %s309
          %s311 = smul.u32 16, %s31
          %s313 = ssub.s32 1024, 1024
          %314 = vsyncadd %s307, %s313
          %s315 = sadd.s32 %s32, %s311
          %s316 = smul.addr %s30, 16
          %s317 = sadd.s32 %s315, %s316
          %s318 = smul.addr %s317, 64
          %s319 = scalar_lea.hbm %s1, %s318
          %s320 = sshll.u32 %s310, 4
          %s321 = int_to_ptr.vmem [resolvable:$true] %s320
          %326 = dma.hbm_to_vmem [thread:$0]  %s319, 1024, %s321, %s307, 64, 64, 4
        $region40: #{pointnet_sa_msg_forward.2} parent=31 // pred_fallthru
          _
      $region32: #{pointnet_sa_msg_forward.2} parent=5 // pred_fallthru
        _
      %p327 = scmp.le.s32.totalorder 1, %s23
      %p328 = scmp.lt.s32.totalorder %s23, 3
      %p329 = pnand %p327, %p328
      %p330 = pneg %p329
      // Predicated region
      $region41: #{pointnet_sa_msg_forward.2} parent=5 // pred_check
        _
      $region42: #{pointnet_sa_msg_forward.2} parent=5 // pred_check_branch
        %332 = sbr.rel (%p329) target = $region44
      $region43: #{pointnet_sa_msg_forward.2} parent=5 // pred_region
        %s333 = ssub.s32 %s23, 1
        %s334 = sand.u32 %s59, 1
        %s335 = scalar_lea.sflag [#allocation4], %s334
        %s336 = sand.u32 %s59, 1
        %s337 = smul.addr %s336, 64
        %s338 = scalar_lea.vmem [#allocation3], %s337
        // Predicated region
        $region45: #{pointnet_sa_msg_forward.2} parent=43 // pred_check
          %p339 = pneg %p72
        $region46: #{pointnet_sa_msg_forward.2} parent=43 // pred_check_branch
          %341 = sbr.rel (%p339) target = $region48
        $region47: #{pointnet_sa_msg_forward.2} parent=43 // pred_region
          %342 = dma.done %s335, 1024
        $region48: #{pointnet_sa_msg_forward.2} parent=43 // pred_fallthru
          _
        %s343 = sand.u32 %s28, 1
        %s344 = scalar_lea.sflag [#allocation7], %s343
        %s345 = sand.u32 %s89, 1
        %s346 = smul.addr %s345, 64
        %s347 = scalar_lea.vmem [#allocation6], %s346
        // Predicated region
        $region49: #{pointnet_sa_msg_forward.2} parent=43 // pred_check
          %p348 = pneg %p102
        $region50: #{pointnet_sa_msg_forward.2} parent=43 // pred_check_branch
          %350 = sbr.rel (%p348) target = $region52
        $region51: #{pointnet_sa_msg_forward.2} parent=43 // pred_region
          %351 = dma.done %s344, 1024
        $region52: #{pointnet_sa_msg_forward.2} parent=43 // pred_fallthru
          _
        // Predicated region
        $region53: #{pointnet_sa_msg_forward.2} parent=43 // pred_check
          %p352 = pneg %p123
        $region54: #{pointnet_sa_msg_forward.2} parent=43 // pred_check_branch
          %354 = sbr.rel (%p352) target = $region56
        $region55: #{pointnet_sa_msg_forward.2} parent=43 // pred_region
          %355 = dma.done [#allocation7], 64
        $region56: #{pointnet_sa_msg_forward.2} parent=43 // pred_fallthru
          _
        // Predicated region
        $region57: #{pointnet_sa_msg_forward.2} parent=43 // pred_check
          %p356 = pneg %p144
        $region58: #{pointnet_sa_msg_forward.2} parent=43 // pred_check_branch
          %358 = sbr.rel (%p356) target = $region60
        $region59: #{pointnet_sa_msg_forward.2} parent=43 // pred_region
          %359 = dma.done [#allocation10], 16
        $region60: #{pointnet_sa_msg_forward.2} parent=43 // pred_fallthru
          _
        // Predicated region
        $region61: #{pointnet_sa_msg_forward.2} parent=43 // pred_check
          %p360 = pneg %p165
        $region62: #{pointnet_sa_msg_forward.2} parent=43 // pred_check_branch
          %362 = sbr.rel (%p360) target = $region64
        $region63: #{pointnet_sa_msg_forward.2} parent=43 // pred_region
          %363 = dma.done [#allocation10], 128
        $region64: #{pointnet_sa_msg_forward.2} parent=43 // pred_fallthru
          _
        // Predicated region
        $region65: #{pointnet_sa_msg_forward.2} parent=43 // pred_check
          %p364 = pneg %p186
        $region66: #{pointnet_sa_msg_forward.2} parent=43 // pred_check_branch
          %366 = sbr.rel (%p364) target = $region68
        $region67: #{pointnet_sa_msg_forward.2} parent=43 // pred_region
          %367 = dma.done [#allocation13], 16
        $region68: #{pointnet_sa_msg_forward.2} parent=43 // pred_fallthru
          _
        %s368 = sand.u32 %s59, 1
        %s369 = scalar_lea.sflag [#allocation4], %s368
        %s370 = sand.u32 %s59, 1
        %s371 = smul.addr %s370, 64
        %s372 = scalar_lea.vmem [#allocation3], %s371
        %p373 = pneg %p72
        %p374 = pneg %p69
        %s375 = sand.u32 %s28, 1
        %s376 = scalar_lea.sflag [#allocation7], %s375
        %s377 = sand.u32 %s89, 1
        %s378 = smul.addr %s377, 64
        %s379 = scalar_lea.vmem [#allocation6], %s378
        %p380 = pneg %p102
        %p381 = pneg %p99
        %p382 = pneg %p123
        %p383 = pneg %p120
        %p384 = pneg %p144
        %p385 = pneg %p141
        %p386 = pneg %p165
        %p387 = pneg %p162
        %p388 = pneg %p186
        %p389 = pneg %p183
        %p390 = pneg %p214
        %p391 = pneg %p211
        %s392 = sand.u32 %s201, 1
        %s393 = scalar_lea.sflag [#allocation5], %s392
        %s394 = sand.u32 %s201, 1
        %s395 = smul.addr %s394, 64
        %s396 = scalar_lea.vmem [#allocation14], %s395
        %s397 = smul.u32 16, %s34
        %s398 = smul.u32 16, %s34
        %v400 = vld [vmem:[%s338] sm:$0xf]
        %v401 = vld [vmem:[%s338 + $0x4] sm:$0xf]
        %v402 = vld [vmem:[%s338 + $0x8] sm:$0xf]
        %v403 = vld [vmem:[%s338 + $0xc] sm:$0xf]
        %v404 = vld [vmem:[%s338 + $0x10] sm:$0xf]
        %v405 = vld [vmem:[%s338 + $0x14] sm:$0xf]
        %v406 = vld [vmem:[%s338 + $0x18] sm:$0xf]
        %v407 = vld [vmem:[%s338 + $0x1c] sm:$0xf]
        %v408 = vld [vmem:[%s338 + $0x20] sm:$0xf]
        %v409 = vld [vmem:[%s338 + $0x24] sm:$0xf]
        %v410 = vld [vmem:[%s338 + $0x28] sm:$0xf]
        %v411 = vld [vmem:[%s338 + $0x2c] sm:$0xf]
        %v412 = vld [vmem:[%s338 + $0x30] sm:$0xf]
        %v413 = vld [vmem:[%s338 + $0x34] sm:$0xf]
        %v414 = vld [vmem:[%s338 + $0x38] sm:$0xf]
        %v415 = vld [vmem:[%s338 + $0x3c] sm:$0xf]
        %v416 = vld [vmem:[%s347] sm:$0xf]
        %v417 = vld [vmem:[%s347 + $0x4] sm:$0xf]
        %v418 = vld [vmem:[%s347 + $0x8] sm:$0xf]
        %v419 = vld [vmem:[%s347 + $0xc] sm:$0xf]
        %v420 = vld [vmem:[%s347 + $0x10] sm:$0xf]
        %v421 = vld [vmem:[%s347 + $0x14] sm:$0xf]
        %v422 = vld [vmem:[%s347 + $0x18] sm:$0xf]
        %v423 = vld [vmem:[%s347 + $0x1c] sm:$0xf]
        %v424 = vld [vmem:[%s347 + $0x20] sm:$0xf]
        %v425 = vld [vmem:[%s347 + $0x24] sm:$0xf]
        %v426 = vld [vmem:[%s347 + $0x28] sm:$0xf]
        %v427 = vld [vmem:[%s347 + $0x2c] sm:$0xf]
        %v428 = vld [vmem:[%s347 + $0x30] sm:$0xf]
        %v429 = vld [vmem:[%s347 + $0x34] sm:$0xf]
        %v430 = vld [vmem:[%s347 + $0x38] sm:$0xf]
        %v431 = vld [vmem:[%s347 + $0x3c] sm:$0xf]
        %v432 = vunpack.c.l.bf16 %v416
        %v433 = vunpack.c.l.bf16 %v417
        %v434 = vunpack.c.l.bf16 %v418
        %v435 = vunpack.c.l.bf16 %v419
        %v436 = vunpack.c.l.bf16 %v420
        %v437 = vunpack.c.l.bf16 %v421
        %v438 = vunpack.c.l.bf16 %v422
        %v439 = vunpack.c.l.bf16 %v423
        %v440 = vunpack.c.l.bf16 %v424
        %v441 = vunpack.c.l.bf16 %v425
        %v442 = vunpack.c.l.bf16 %v426
        %v443 = vunpack.c.l.bf16 %v427
        %v444 = vunpack.c.l.bf16 %v428
        %v445 = vunpack.c.l.bf16 %v429
        %v446 = vunpack.c.l.bf16 %v430
        %v447 = vunpack.c.l.bf16 %v431
        %v448 = vld [vmem:[#allocation8] sm:$0x7]
        %v449 = vld [vmem:[#allocation9] sm:$0x1]
        %451 = vset.pattern.permute.xlu0 0
        %452 = vperm.xlu0 %451, %v432
        %v453 = vpop.permute.xlu0 %452
        %456 = vset.pattern.permute.xlu0 0
        %457 = vperm.xlu0 %456, %v433
        %v458 = vpop.permute.xlu0 %457
        %461 = vset.pattern.permute.xlu0 0
        %462 = vperm.xlu0 %461, %v434
        %v463 = vpop.permute.xlu0 %462
        %466 = vset.pattern.permute.xlu0 0
        %467 = vperm.xlu0 %466, %v435
        %v468 = vpop.permute.xlu0 %467
        %471 = vset.pattern.permute.xlu0 0
        %472 = vperm.xlu0 %471, %v436
        %v473 = vpop.permute.xlu0 %472
        %476 = vset.pattern.permute.xlu0 0
        %477 = vperm.xlu0 %476, %v437
        %v478 = vpop.permute.xlu0 %477
        %481 = vset.pattern.permute.xlu0 0
        %482 = vperm.xlu0 %481, %v438
        %v483 = vpop.permute.xlu0 %482
        %486 = vset.pattern.permute.xlu0 0
        %487 = vperm.xlu0 %486, %v439
        %v488 = vpop.permute.xlu0 %487
        %491 = vset.pattern.permute.xlu0 0
        %492 = vperm.xlu0 %491, %v440
        %v493 = vpop.permute.xlu0 %492
        %496 = vset.pattern.permute.xlu0 0
        %497 = vperm.xlu0 %496, %v441
        %v498 = vpop.permute.xlu0 %497
        %501 = vset.pattern.permute.xlu0 0
        %502 = vperm.xlu0 %501, %v442
        %v503 = vpop.permute.xlu0 %502
        %506 = vset.pattern.permute.xlu0 0
        %507 = vperm.xlu0 %506, %v443
        %v508 = vpop.permute.xlu0 %507
        %511 = vset.pattern.permute.xlu0 0
        %512 = vperm.xlu0 %511, %v444
        %v513 = vpop.permute.xlu0 %512
        %516 = vset.pattern.permute.xlu0 0
        %517 = vperm.xlu0 %516, %v445
        %v518 = vpop.permute.xlu0 %517
        %521 = vset.pattern.permute.xlu0 0
        %522 = vperm.xlu0 %521, %v446
        %v523 = vpop.permute.xlu0 %522
        %526 = vset.pattern.permute.xlu0 0
        %527 = vperm.xlu0 %526, %v447
        %v528 = vpop.permute.xlu0 %527
        %v530 = vlaneseq
        %v531 = vshrl.u32 %v530, 7
        %v532 = vsub.s32 0, %v531
        %v533 = vrot.slane %v448, %v532
        %v534 = vmul.f32 %v453, %v533
        %v535 = vmul.f32 %v458, %v533
        %v536 = vmul.f32 %v463, %v533
        %v537 = vmul.f32 %v468, %v533
        %v538 = vmul.f32 %v473, %v533
        %v539 = vmul.f32 %v478, %v533
        %v540 = vmul.f32 %v483, %v533
        %v541 = vmul.f32 %v488, %v533
        %v542 = vmul.f32 %v493, %v533
        %v543 = vmul.f32 %v498, %v533
        %v544 = vmul.f32 %v503, %v533
        %v545 = vmul.f32 %v508, %v533
        %v546 = vmul.f32 %v513, %v533
        %v547 = vmul.f32 %v518, %v533
        %v548 = vmul.f32 %v523, %v533
        %v549 = vmul.f32 %v528, %v533
        %550 = vset.pattern.permute.xlu0 1
        %551 = vperm.xlu0 %550, %v432
        %v552 = vpop.permute.xlu0 %551
        %554 = vset.pattern.permute.xlu0 1
        %555 = vperm.xlu0 %554, %v433
        %v556 = vpop.permute.xlu0 %555
        %558 = vset.pattern.permute.xlu0 1
        %559 = vperm.xlu0 %558, %v434
        %v560 = vpop.permute.xlu0 %559
        %562 = vset.pattern.permute.xlu0 1
        %563 = vperm.xlu0 %562, %v435
        %v564 = vpop.permute.xlu0 %563
        %566 = vset.pattern.permute.xlu0 1
        %567 = vperm.xlu0 %566, %v436
        %v568 = vpop.permute.xlu0 %567
        %570 = vset.pattern.permute.xlu0 1
        %571 = vperm.xlu0 %570, %v437
        %v572 = vpop.permute.xlu0 %571
        %574 = vset.pattern.permute.xlu0 1
        %575 = vperm.xlu0 %574, %v438
        %v576 = vpop.permute.xlu0 %575
        %578 = vset.pattern.permute.xlu0 1
        %579 = vperm.xlu0 %578, %v439
        %v580 = vpop.permute.xlu0 %579
        %582 = vset.pattern.permute.xlu0 1
        %583 = vperm.xlu0 %582, %v440
        %v584 = vpop.permute.xlu0 %583
        %586 = vset.pattern.permute.xlu0 1
        %587 = vperm.xlu0 %586, %v441
        %v588 = vpop.permute.xlu0 %587
        %590 = vset.pattern.permute.xlu0 1
        %591 = vperm.xlu0 %590, %v442
        %v592 = vpop.permute.xlu0 %591
        %594 = vset.pattern.permute.xlu0 1
        %595 = vperm.xlu0 %594, %v443
        %v596 = vpop.permute.xlu0 %595
        %598 = vset.pattern.permute.xlu0 1
        %599 = vperm.xlu0 %598, %v444
        %v600 = vpop.permute.xlu0 %599
        %602 = vset.pattern.permute.xlu0 1
        %603 = vperm.xlu0 %602, %v445
        %v604 = vpop.permute.xlu0 %603
        %606 = vset.pattern.permute.xlu0 1
        %607 = vperm.xlu0 %606, %v446
        %v608 = vpop.permute.xlu0 %607
        %610 = vset.pattern.permute.xlu0 1
        %611 = vperm.xlu0 %610, %v447
        %v612 = vpop.permute.xlu0 %611
        %v614 = vlaneseq
        %v615 = vshrl.u32 %v614, 7
        %v616 = vsub.s32 1, %v615
        %v617 = vrot.slane %v448, %v616
        %v618 = vmul.f32 %v552, %v617
        %v619 = vmul.f32 %v556, %v617
        %v620 = vmul.f32 %v560, %v617
        %v621 = vmul.f32 %v564, %v617
        %v622 = vmul.f32 %v568, %v617
        %v623 = vmul.f32 %v572, %v617
        %v624 = vmul.f32 %v576, %v617
        %v625 = vmul.f32 %v580, %v617
        %v626 = vmul.f32 %v584, %v617
        %v627 = vmul.f32 %v588, %v617
        %v628 = vmul.f32 %v592, %v617
        %v629 = vmul.f32 %v596, %v617
        %v630 = vmul.f32 %v600, %v617
        %v631 = vmul.f32 %v604, %v617
        %v632 = vmul.f32 %v608, %v617
        %v633 = vmul.f32 %v612, %v617
        %v634 = vadd.f32 %v534, %v618
        %v635 = vadd.f32 %v535, %v619
        %v636 = vadd.f32 %v536, %v620
        %v637 = vadd.f32 %v537, %v621
        %v638 = vadd.f32 %v538, %v622
        %v639 = vadd.f32 %v539, %v623
        %v640 = vadd.f32 %v540, %v624
        %v641 = vadd.f32 %v541, %v625
        %v642 = vadd.f32 %v542, %v626
        %v643 = vadd.f32 %v543, %v627
        %v644 = vadd.f32 %v544, %v628
        %v645 = vadd.f32 %v545, %v629
        %v646 = vadd.f32 %v546, %v630
        %v647 = vadd.f32 %v547, %v631
        %v648 = vadd.f32 %v548, %v632
        %v649 = vadd.f32 %v549, %v633
        %650 = vset.pattern.permute.xlu0 2
        %651 = vperm.xlu0 %650, %v432
        %v652 = vpop.permute.xlu0 %651
        %654 = vset.pattern.permute.xlu0 2
        %655 = vperm.xlu0 %654, %v433
        %v656 = vpop.permute.xlu0 %655
        %658 = vset.pattern.permute.xlu0 2
        %659 = vperm.xlu0 %658, %v434
        %v660 = vpop.permute.xlu0 %659
        %662 = vset.pattern.permute.xlu0 2
        %663 = vperm.xlu0 %662, %v435
        %v664 = vpop.permute.xlu0 %663
        %666 = vset.pattern.permute.xlu0 2
        %667 = vperm.xlu0 %666, %v436
        %v668 = vpop.permute.xlu0 %667
        %670 = vset.pattern.permute.xlu0 2
        %671 = vperm.xlu0 %670, %v437
        %v672 = vpop.permute.xlu0 %671
        %674 = vset.pattern.permute.xlu0 2
        %675 = vperm.xlu0 %674, %v438
        %v676 = vpop.permute.xlu0 %675
        %678 = vset.pattern.permute.xlu0 2
        %679 = vperm.xlu0 %678, %v439
        %v680 = vpop.permute.xlu0 %679
        %682 = vset.pattern.permute.xlu0 2
        %683 = vperm.xlu0 %682, %v440
        %v684 = vpop.permute.xlu0 %683
        %686 = vset.pattern.permute.xlu0 2
        %687 = vperm.xlu0 %686, %v441
        %v688 = vpop.permute.xlu0 %687
        %690 = vset.pattern.permute.xlu0 2
        %691 = vperm.xlu0 %690, %v442
        %v692 = vpop.permute.xlu0 %691
        %694 = vset.pattern.permute.xlu0 2
        %695 = vperm.xlu0 %694, %v443
        %v696 = vpop.permute.xlu0 %695
        %698 = vset.pattern.permute.xlu0 2
        %699 = vperm.xlu0 %698, %v444
        %v700 = vpop.permute.xlu0 %699
        %702 = vset.pattern.permute.xlu0 2
        %703 = vperm.xlu0 %702, %v445
        %v704 = vpop.permute.xlu0 %703
        %706 = vset.pattern.permute.xlu0 2
        %707 = vperm.xlu0 %706, %v446
        %v708 = vpop.permute.xlu0 %707
        %710 = vset.pattern.permute.xlu0 2
        %711 = vperm.xlu0 %710, %v447
        %v712 = vpop.permute.xlu0 %711
        %v714 = vlaneseq
        %v715 = vshrl.u32 %v714, 7
        %v716 = vsub.s32 2, %v715
        %v717 = vrot.slane %v448, %v716
        %v718 = vmul.f32 %v652, %v717
        %v719 = vmul.f32 %v656, %v717
        %v720 = vmul.f32 %v660, %v717
        %v721 = vmul.f32 %v664, %v717
        %v722 = vmul.f32 %v668, %v717
        %v723 = vmul.f32 %v672, %v717
        %v724 = vmul.f32 %v676, %v717
        %v725 = vmul.f32 %v680, %v717
        %v726 = vmul.f32 %v684, %v717
        %v727 = vmul.f32 %v688, %v717
        %v728 = vmul.f32 %v692, %v717
        %v729 = vmul.f32 %v696, %v717
        %v730 = vmul.f32 %v700, %v717
        %v731 = vmul.f32 %v704, %v717
        %v732 = vmul.f32 %v708, %v717
        %v733 = vmul.f32 %v712, %v717
        %v734 = vadd.f32 %v634, %v718
        %v735 = vadd.f32 %v635, %v719
        %v736 = vadd.f32 %v636, %v720
        %v737 = vadd.f32 %v637, %v721
        %v738 = vadd.f32 %v638, %v722
        %v739 = vadd.f32 %v639, %v723
        %v740 = vadd.f32 %v640, %v724
        %v741 = vadd.f32 %v641, %v725
        %v742 = vadd.f32 %v642, %v726
        %v743 = vadd.f32 %v643, %v727
        %v744 = vadd.f32 %v644, %v728
        %v745 = vadd.f32 %v645, %v729
        %v746 = vadd.f32 %v646, %v730
        %v747 = vadd.f32 %v647, %v731
        %v748 = vadd.f32 %v648, %v732
        %v749 = vadd.f32 %v649, %v733
        %v751 = vlaneseq
        %v752 = vshrl.u32 %v751, 7
        %v753 = vsub.s32 0, %v752
        %v754 = vrot.slane %v449, %v753
        %v756 = vadd.f32 %v734, %v754
        %v757 = vadd.f32 %v735, %v754
        %v758 = vadd.f32 %v736, %v754
        %v759 = vadd.f32 %v737, %v754
        %v760 = vadd.f32 %v738, %v754
        %v761 = vadd.f32 %v739, %v754
        %v762 = vadd.f32 %v740, %v754
        %v763 = vadd.f32 %v741, %v754
        %v764 = vadd.f32 %v742, %v754
        %v765 = vadd.f32 %v743, %v754
        %v766 = vadd.f32 %v744, %v754
        %v767 = vadd.f32 %v745, %v754
        %v768 = vadd.f32 %v746, %v754
        %v769 = vadd.f32 %v747, %v754
        %v770 = vadd.f32 %v748, %v754
        %v771 = vadd.f32 %v749, %v754
        %v772 = vunpack.c.l.bf16 %v400
        %v773 = vunpack.c.l.bf16 %v401
        %v774 = vunpack.c.l.bf16 %v402
        %v775 = vunpack.c.l.bf16 %v403
        %v776 = vunpack.c.l.bf16 %v404
        %v777 = vunpack.c.l.bf16 %v405
        %v778 = vunpack.c.l.bf16 %v406
        %v779 = vunpack.c.l.bf16 %v407
        %v780 = vunpack.c.l.bf16 %v408
        %v781 = vunpack.c.l.bf16 %v409
        %v782 = vunpack.c.l.bf16 %v410
        %v783 = vunpack.c.l.bf16 %v411
        %v784 = vunpack.c.l.bf16 %v412
        %v785 = vunpack.c.l.bf16 %v413
        %v786 = vunpack.c.l.bf16 %v414
        %v787 = vunpack.c.l.bf16 %v415
        %v788 = vadd.f32 %v756, %v772
        %v789 = vadd.f32 %v757, %v773
        %v790 = vadd.f32 %v758, %v774
        %v791 = vadd.f32 %v759, %v775
        %v792 = vadd.f32 %v760, %v776
        %v793 = vadd.f32 %v761, %v777
        %v794 = vadd.f32 %v762, %v778
        %v795 = vadd.f32 %v763, %v779
        %v796 = vadd.f32 %v764, %v780
        %v797 = vadd.f32 %v765, %v781
        %v798 = vadd.f32 %v766, %v782
        %v799 = vadd.f32 %v767, %v783
        %v800 = vadd.f32 %v768, %v784
        %v801 = vadd.f32 %v769, %v785
        %v802 = vadd.f32 %v770, %v786
        %v803 = vadd.f32 %v771, %v787
        %v804 = vmax.f32 %v788, 0.0
        %v805 = vmax.f32 %v789, 0.0
        %v806 = vmax.f32 %v790, 0.0
        %v807 = vmax.f32 %v791, 0.0
        %v808 = vmax.f32 %v792, 0.0
        %v809 = vmax.f32 %v793, 0.0
        %v810 = vmax.f32 %v794, 0.0
        %v811 = vmax.f32 %v795, 0.0
        %v812 = vmax.f32 %v796, 0.0
        %v813 = vmax.f32 %v797, 0.0
        %v814 = vmax.f32 %v798, 0.0
        %v815 = vmax.f32 %v799, 0.0
        %v816 = vmax.f32 %v800, 0.0
        %v817 = vmax.f32 %v801, 0.0
        %v818 = vmax.f32 %v802, 0.0
        %v819 = vmax.f32 %v803, 0.0
        %v820 = vld [vmem:[#allocation11] sm:$0xf]
        %v821 = vld [vmem:[#allocation11 + $0x4] sm:$0xf]
        %v822 = vld [vmem:[#allocation12] sm:$0x1]
        %v823 = vpack.c.bf16 %v805, %v804
        %v824 = vpack.c.bf16 %v807, %v806
        %v825 = vpack.c.bf16 %v809, %v808
        %v826 = vpack.c.bf16 %v811, %v810
        %v827 = vpack.c.bf16 %v813, %v812
        %v828 = vpack.c.bf16 %v815, %v814
        %v829 = vpack.c.bf16 %v817, %v816
        %v830 = vpack.c.bf16 %v819, %v818
        %v832 = vlaneseq
        %v833 = vshrl.u32 %v832, 7
        %v834 = vsub.s32 0, %v833
        %v835 = vrot.slane %v822, %v834
        %v839 = vunpack.c.l.b16 %v820
        %v840 = vunpack.c.l.b16 %v821
        %v841 = vpack.c.b16 %v840, %v839
        %vm843 = vcmask 130048
        %v845 = vsel %vm843, %v823, 0
        %v848 = vsel %vm843, %v824, 0
        %v851 = vsel %vm843, %v825, 0
        %v854 = vsel %vm843, %v826, 0
        %v857 = vsel %vm843, %v827, 0
        %v860 = vsel %vm843, %v828, 0
        %v863 = vsel %vm843, %v829, 0
        %v866 = vsel %vm843, %v830, 0
        %868 = vmatprep.subr.bf16.mxu0 0
        %869 = vmatpush1.bf16.msra.mxu0 %v841
        %870 = vmatprep.subr.bf16.mxu0 0
        %871 = vmatpush1.bf16.msra.mxu0 0
        %872 = vmatprep.subr.bf16.mxu0 0
        %873 = vmatpush1.bf16.msra.mxu0 0
        %874 = vmatprep.subr.bf16.mxu0 0
        %875 = vmatpush1.bf16.msra.mxu0 0
        %876 = vmatprep.subr.bf16.mxu0 0
        %877 = vmatpush1.bf16.msra.mxu0 0
        %878 = vmatprep.subr.bf16.mxu0 0
        %879 = vmatpush1.bf16.msra.mxu0 0
        %880 = vmatprep.subr.bf16.mxu0 0
        %881 = vmatpush1.bf16.msra.mxu0 0
        %882 = vmatprep.subr.bf16.mxu0 0
        %883 = vmatpush1.bf16.msra.mxu0 0
        %884 = vmatprep.subr.bf16.mxu0 0
        %885 = vmatpush1.bf16.msra.mxu0 0
        %886 = vmatprep.subr.bf16.mxu0 0
        %887 = vmatpush1.bf16.msra.mxu0 0
        %888 = vmatprep.subr.bf16.mxu0 0
        %889 = vmatpush1.bf16.msra.mxu0 0
        %890 = vmatprep.subr.bf16.mxu0 0
        %891 = vmatpush1.bf16.msra.mxu0 0
        %892 = vmatprep.subr.bf16.mxu0 0
        %893 = vmatpush1.bf16.msra.mxu0 0
        %894 = vmatprep.subr.bf16.mxu0 0
        %895 = vmatpush1.bf16.msra.mxu0 0
        %896 = vmatprep.subr.bf16.mxu0 0
        %897 = vmatpush1.bf16.msra.mxu0 0
        %898 = vmatprep.subr.bf16.mxu0 0
        %899 = vmatpush1.bf16.msra.mxu0 0
        %900 = vmatprep.mubr.bf16.mxu0 0
        %901 = vmatmul.mubr.bf16.gmra.mrb[0].mxu0 %v845
        %v902 = vpop.f32.mrb[0].mxu0
        %v903 = vadd.f32 %v835, %v902
        %v904 = vpop.f32.mrb[0].mxu0
        %v905 = vpop.f32.mrb[0].mxu0
        %v906 = vadd.f32 %v835, %v905
        %v907 = vpop.f32.mrb[0].mxu0
        %908 = vmatprep.mubr.bf16.mxu0 0
        %909 = vmatmul.mubr.bf16.gmra.mrb[0].mxu0 %v848
        %v910 = vpop.f32.mrb[0].mxu0
        %v911 = vadd.f32 %v835, %v910
        %v912 = vpop.f32.mrb[0].mxu0
        %v913 = vpop.f32.mrb[0].mxu0
        %v914 = vadd.f32 %v835, %v913
        %v915 = vpop.f32.mrb[0].mxu0
        %916 = vmatprep.mubr.bf16.mxu0 0
        %917 = vmatmul.mubr.bf16.gmra.mrb[0].mxu0 %v851
        %v918 = vpop.f32.mrb[0].mxu0
        %v919 = vadd.f32 %v835, %v918
        %v920 = vpop.f32.mrb[0].mxu0
        %v921 = vpop.f32.mrb[0].mxu0
        %v922 = vadd.f32 %v835, %v921
        %v923 = vpop.f32.mrb[0].mxu0
        %924 = vmatprep.mubr.bf16.mxu0 0
        %925 = vmatmul.mubr.bf16.gmra.mrb[0].mxu0 %v854
        %v926 = vpop.f32.mrb[0].mxu0
        %v927 = vadd.f32 %v835, %v926
        %v928 = vpop.f32.mrb[0].mxu0
        %v929 = vpop.f32.mrb[0].mxu0
        %v930 = vadd.f32 %v835, %v929
        %v931 = vpop.f32.mrb[0].mxu0
        %932 = vmatprep.mubr.bf16.mxu0 0
        %933 = vmatmul.mubr.bf16.gmra.mrb[0].mxu0 %v857
        %v934 = vpop.f32.mrb[0].mxu0
        %v935 = vadd.f32 %v835, %v934
        %v936 = vpop.f32.mrb[0].mxu0
        %v937 = vpop.f32.mrb[0].mxu0
        %v938 = vadd.f32 %v835, %v937
        %v939 = vpop.f32.mrb[0].mxu0
        %940 = vmatprep.mubr.bf16.mxu0 0
        %941 = vmatmul.mubr.bf16.gmra.mrb[0].mxu0 %v860
        %v942 = vpop.f32.mrb[0].mxu0
        %v943 = vadd.f32 %v835, %v942
        %v944 = vpop.f32.mrb[0].mxu0
        %v945 = vpop.f32.mrb[0].mxu0
        %v946 = vadd.f32 %v835, %v945
        %v947 = vpop.f32.mrb[0].mxu0
        %948 = vmatprep.mubr.bf16.mxu0 0
        %949 = vmatmul.mubr.bf16.gmra.mrb[0].mxu0 %v863
        %v950 = vpop.f32.mrb[0].mxu0
        %v951 = vadd.f32 %v835, %v950
        %v952 = vpop.f32.mrb[0].mxu0
        %v953 = vpop.f32.mrb[0].mxu0
        %v954 = vadd.f32 %v835, %v953
        %v955 = vpop.f32.mrb[0].mxu0
        %956 = vmatprep.mubr.bf16.mxu0 0
        %957 = vmatmul.mubr.bf16.gmra.mrb[0].mxu0 %v866
        %v958 = vpop.f32.mrb[0].mxu0
        %v959 = vadd.f32 %v835, %v958
        %v960 = vpop.f32.mrb[0].mxu0
        %v961 = vpop.f32.mrb[0].mxu0
        %v962 = vadd.f32 %v835, %v961
        %v963 = vpop.f32.mrb[0].mxu0
        %964 = vdwg.mxu0
        %v965 = vmax.f32 %v903, 0.0
        %v966 = vmax.f32 %v906, 0.0
        %v967 = vmax.f32 %v911, 0.0
        %v968 = vmax.f32 %v914, 0.0
        %v969 = vmax.f32 %v919, 0.0
        %v970 = vmax.f32 %v922, 0.0
        %v971 = vmax.f32 %v927, 0.0
        %v972 = vmax.f32 %v930, 0.0
        %v973 = vmax.f32 %v935, 0.0
        %v974 = vmax.f32 %v938, 0.0
        %v975 = vmax.f32 %v943, 0.0
        %v976 = vmax.f32 %v946, 0.0
        %v977 = vmax.f32 %v951, 0.0
        %v978 = vmax.f32 %v954, 0.0
        %v979 = vmax.f32 %v959, 0.0
        %v980 = vmax.f32 %v962, 0.0
        %v981 = vrot.slane %v965, 4
        %v982 = vmax.f32 %v965, %v981
        %v983 = vrot.slane %v982, 2
        %v984 = vmax.f32 %v982, %v983
        %v985 = vrot.slane %v984, 1
        %v986 = vmax.f32 %v984, %v985
        %v987 = vrot.slane %v966, 4
        %v988 = vmax.f32 %v966, %v987
        %v989 = vrot.slane %v988, 2
        %v990 = vmax.f32 %v988, %v989
        %v991 = vrot.slane %v990, 1
        %v992 = vmax.f32 %v990, %v991
        %v993 = vrot.slane %v967, 4
        %v994 = vmax.f32 %v967, %v993
        %v995 = vrot.slane %v994, 2
        %v996 = vmax.f32 %v994, %v995
        %v997 = vrot.slane %v996, 1
        %v998 = vmax.f32 %v996, %v997
        %v999 = vrot.slane %v968, 4
        %v1000 = vmax.f32 %v968, %v999
        %v1001 = vrot.slane %v1000, 2
        %v1002 = vmax.f32 %v1000, %v1001
        %v1003 = vrot.slane %v1002, 1
        %v1004 = vmax.f32 %v1002, %v1003
        %v1005 = vrot.slane %v969, 4
        %v1006 = vmax.f32 %v969, %v1005
        %v1007 = vrot.slane %v1006, 2
        %v1008 = vmax.f32 %v1006, %v1007
        %v1009 = vrot.slane %v1008, 1
        %v1010 = vmax.f32 %v1008, %v1009
        %v1011 = vrot.slane %v970, 4
        %v1012 = vmax.f32 %v970, %v1011
        %v1013 = vrot.slane %v1012, 2
        %v1014 = vmax.f32 %v1012, %v1013
        %v1015 = vrot.slane %v1014, 1
        %v1016 = vmax.f32 %v1014, %v1015
        %v1017 = vrot.slane %v971, 4
        %v1018 = vmax.f32 %v971, %v1017
        %v1019 = vrot.slane %v1018, 2
        %v1020 = vmax.f32 %v1018, %v1019
        %v1021 = vrot.slane %v1020, 1
        %v1022 = vmax.f32 %v1020, %v1021
        %v1023 = vrot.slane %v972, 4
        %v1024 = vmax.f32 %v972, %v1023
        %v1025 = vrot.slane %v1024, 2
        %v1026 = vmax.f32 %v1024, %v1025
        %v1027 = vrot.slane %v1026, 1
        %v1028 = vmax.f32 %v1026, %v1027
        %v1029 = vrot.slane %v973, 4
        %v1030 = vmax.f32 %v973, %v1029
        %v1031 = vrot.slane %v1030, 2
        %v1032 = vmax.f32 %v1030, %v1031
        %v1033 = vrot.slane %v1032, 1
        %v1034 = vmax.f32 %v1032, %v1033
        %v1035 = vrot.slane %v974, 4
        %v1036 = vmax.f32 %v974, %v1035
        %v1037 = vrot.slane %v1036, 2
        %v1038 = vmax.f32 %v1036, %v1037
        %v1039 = vrot.slane %v1038, 1
        %v1040 = vmax.f32 %v1038, %v1039
        %v1041 = vrot.slane %v975, 4
        %v1042 = vmax.f32 %v975, %v1041
        %v1043 = vrot.slane %v1042, 2
        %v1044 = vmax.f32 %v1042, %v1043
        %v1045 = vrot.slane %v1044, 1
        %v1046 = vmax.f32 %v1044, %v1045
        %v1047 = vrot.slane %v976, 4
        %v1048 = vmax.f32 %v976, %v1047
        %v1049 = vrot.slane %v1048, 2
        %v1050 = vmax.f32 %v1048, %v1049
        %v1051 = vrot.slane %v1050, 1
        %v1052 = vmax.f32 %v1050, %v1051
        %v1053 = vrot.slane %v977, 4
        %v1054 = vmax.f32 %v977, %v1053
        %v1055 = vrot.slane %v1054, 2
        %v1056 = vmax.f32 %v1054, %v1055
        %v1057 = vrot.slane %v1056, 1
        %v1058 = vmax.f32 %v1056, %v1057
        %v1059 = vrot.slane %v978, 4
        %v1060 = vmax.f32 %v978, %v1059
        %v1061 = vrot.slane %v1060, 2
        %v1062 = vmax.f32 %v1060, %v1061
        %v1063 = vrot.slane %v1062, 1
        %v1064 = vmax.f32 %v1062, %v1063
        %v1065 = vrot.slane %v979, 4
        %v1066 = vmax.f32 %v979, %v1065
        %v1067 = vrot.slane %v1066, 2
        %v1068 = vmax.f32 %v1066, %v1067
        %v1069 = vrot.slane %v1068, 1
        %v1070 = vmax.f32 %v1068, %v1069
        %v1071 = vrot.slane %v980, 4
        %v1072 = vmax.f32 %v980, %v1071
        %v1073 = vrot.slane %v1072, 2
        %v1074 = vmax.f32 %v1072, %v1073
        %v1075 = vrot.slane %v1074, 1
        %v1076 = vmax.f32 %v1074, %v1075
        %p1077 = scmp.eq.s32.totalorder %s35, 0
        // Predicated region
        $region69: #{pointnet_sa_msg_forward.2} parent=43 // pred_check
          %p1078 = pneg %p1077
        $region70: #{pointnet_sa_msg_forward.2} parent=43 // pred_check_branch
          %1080 = sbr.rel (%p1078) target = $region72
        $region71: #{pointnet_sa_msg_forward.2} parent=43 // pred_region
          %1081 = vst [vmem:[#allocation2] sm:$0xff] -inf
          %1082 = vst [vmem:[#allocation2 + $0x8] sm:$0xff] -inf
        $region72: #{pointnet_sa_msg_forward.2} parent=43 // pred_fallthru
          _
        %v1083 = vld [vmem:[#allocation2] sm:$0xff]
        %v1084 = vld [vmem:[#allocation2 + $0x8] sm:$0xff]
        %vm1101 = vcmask 1041409
        %v1102 = vsel %vm1101, %v992, %v986
        %vm1103 = vcmask 1042434
        %v1104 = vsel %vm1103, %v998, %v1102
        %vm1105 = vcmask 1043459
        %v1106 = vsel %vm1105, %v1004, %v1104
        %vm1107 = vcmask 1044484
        %v1108 = vsel %vm1107, %v1010, %v1106
        %vm1109 = vcmask 1045509
        %v1110 = vsel %vm1109, %v1016, %v1108
        %vm1111 = vcmask 1046534
        %v1112 = vsel %vm1111, %v1022, %v1110
        %vm1113 = vcmask 1047559
        %v1114 = vsel %vm1113, %v1028, %v1112
        %v1115 = vsel %vm1101, %v1040, %v1034
        %v1116 = vsel %vm1103, %v1046, %v1115
        %v1117 = vsel %vm1105, %v1052, %v1116
        %v1118 = vsel %vm1107, %v1058, %v1117
        %v1119 = vsel %vm1109, %v1064, %v1118
        %v1120 = vsel %vm1111, %v1070, %v1119
        %v1121 = vsel %vm1113, %v1076, %v1120
        %v1124 = vmax.f32 %v1083, %v1114
        %v1125 = vmax.f32 %v1084, %v1121
        %1126 = vst [vmem:[#allocation2] sm:$0xff] %v1124
        %1127 = vst [vmem:[#allocation2 + $0x8] sm:$0xff] %v1125
        // Predicated region
        $region73: #{pointnet_sa_msg_forward.2} parent=43 // pred_check
          %p1128 = pneg %p1077
        $region74: #{pointnet_sa_msg_forward.2} parent=43 // pred_check_branch
          %1130 = sbr.rel (%p1128) target = $region76
        $region75: #{pointnet_sa_msg_forward.2} parent=43 // pred_region
          %v1131 = vld [vmem:[#allocation2] sm:$0xff]
          %v1132 = vld [vmem:[#allocation2 + $0x8] sm:$0xff]
          %1133 = vxpose.xlu0.b32.start [1/16] %v1131, 128
          %1134 = vxpose.xlu0.b32.cont [2/16] %v1132, 128
          %1135 = vxpose.xlu0.b32.cont [3/16] 0.0, 128
          %1136 = vxpose.xlu0.b32.cont [4/16] 0.0, 128
          %1137 = vxpose.xlu0.b32.cont [5/16] 0.0, 128
          %1138 = vxpose.xlu0.b32.cont [6/16] 0.0, 128
          %1139 = vxpose.xlu0.b32.cont [7/16] 0.0, 128
          %1140 = vxpose.xlu0.b32.cont [8/16] 0.0, 128
          %1141 = vxpose.xlu0.b32.cont [9/16] 0.0, 128
          %1142 = vxpose.xlu0.b32.cont [10/16] 0.0, 128
          %1143 = vxpose.xlu0.b32.cont [11/16] 0.0, 128
          %1144 = vxpose.xlu0.b32.cont [12/16] 0.0, 128
          %1145 = vxpose.xlu0.b32.cont [13/16] 0.0, 128
          %1146 = vxpose.xlu0.b32.cont [14/16] 0.0, 128
          %1147 = vxpose.xlu0.b32.cont [15/16] 0.0, 128
          %1148 = vxpose.xlu0.b32.end [16/16] 0.0, 128
          %v1149 = vpop.trf.xlu0
          %v1150 = vpop.trf.xlu0
          %v1151 = vpop.trf.xlu0
          %v1152 = vpop.trf.xlu0
          %v1153 = vpop.trf.xlu0
          %v1154 = vpop.trf.xlu0
          %v1155 = vpop.trf.xlu0
          %v1156 = vpop.trf.xlu0
          %v1157 = vpop.trf.xlu0
          %v1158 = vpop.trf.xlu0
          %v1159 = vpop.trf.xlu0
          %v1160 = vpop.trf.xlu0
          %v1161 = vpop.trf.xlu0
          %v1162 = vpop.trf.xlu0
          %v1163 = vpop.trf.xlu0
          %v1164 = vpop.trf.xlu0
          %v1165 = vpack.c.bf16 %v1150, %v1149
          %v1166 = vpack.c.bf16 %v1152, %v1151
          %v1167 = vpack.c.bf16 %v1154, %v1153
          %v1168 = vpack.c.bf16 %v1156, %v1155
          %v1169 = vpack.c.bf16 %v1158, %v1157
          %v1170 = vpack.c.bf16 %v1160, %v1159
          %v1171 = vpack.c.bf16 %v1162, %v1161
          %v1172 = vpack.c.bf16 %v1164, %v1163
          %v1181 = vunpack.c.l.b16 %v1165
          %v1182 = vunpack.c.h.b16 %v1165
          %v1183 = vunpack.c.l.b16 %v1166
          %v1184 = vunpack.c.h.b16 %v1166
          %v1185 = vunpack.c.l.b16 %v1167
          %v1186 = vunpack.c.h.b16 %v1167
          %v1187 = vunpack.c.l.b16 %v1168
          %v1188 = vunpack.c.h.b16 %v1168
          %v1189 = vunpack.c.l.b16 %v1169
          %v1190 = vunpack.c.h.b16 %v1169
          %v1191 = vunpack.c.l.b16 %v1170
          %v1192 = vunpack.c.h.b16 %v1170
          %v1193 = vunpack.c.l.b16 %v1171
          %v1194 = vunpack.c.h.b16 %v1171
          %v1195 = vunpack.c.l.b16 %v1172
          %v1196 = vunpack.c.h.b16 %v1172
          %v1197 = vpack.c.b16 %v1181, %v1181
          %v1198 = vpack.c.b16 %v1182, %v1182
          %v1199 = vpack.c.b16 %v1183, %v1183
          %v1200 = vpack.c.b16 %v1184, %v1184
          %v1201 = vpack.c.b16 %v1185, %v1185
          %v1202 = vpack.c.b16 %v1186, %v1186
          %v1203 = vpack.c.b16 %v1187, %v1187
          %v1204 = vpack.c.b16 %v1188, %v1188
          %v1205 = vpack.c.b16 %v1189, %v1189
          %v1206 = vpack.c.b16 %v1190, %v1190
          %v1207 = vpack.c.b16 %v1191, %v1191
          %v1208 = vpack.c.b16 %v1192, %v1192
          %v1209 = vpack.c.b16 %v1193, %v1193
          %v1210 = vpack.c.b16 %v1194, %v1194
          %v1211 = vpack.c.b16 %v1195, %v1195
          %v1212 = vpack.c.b16 %v1196, %v1196
          %vm1229 = vcmask 125952
          %1230 = vst.msk [vmem:[%s396] sm:$0xf] %vm1229, %v1197
          %1231 = vst.msk [vmem:[%s396 + $0x4] sm:$0xf] %vm1229, %v1198
          %1232 = vst.msk [vmem:[%s396 + $0x8] sm:$0xf] %vm1229, %v1199
          %1233 = vst.msk [vmem:[%s396 + $0xc] sm:$0xf] %vm1229, %v1200
          %1234 = vst.msk [vmem:[%s396 + $0x10] sm:$0xf] %vm1229, %v1201
          %1235 = vst.msk [vmem:[%s396 + $0x14] sm:$0xf] %vm1229, %v1202
          %1236 = vst.msk [vmem:[%s396 + $0x18] sm:$0xf] %vm1229, %v1203
          %1237 = vst.msk [vmem:[%s396 + $0x1c] sm:$0xf] %vm1229, %v1204
          %1238 = vst.msk [vmem:[%s396 + $0x20] sm:$0xf] %vm1229, %v1205
          %1239 = vst.msk [vmem:[%s396 + $0x24] sm:$0xf] %vm1229, %v1206
          %1240 = vst.msk [vmem:[%s396 + $0x28] sm:$0xf] %vm1229, %v1207
          %1241 = vst.msk [vmem:[%s396 + $0x2c] sm:$0xf] %vm1229, %v1208
          %1242 = vst.msk [vmem:[%s396 + $0x30] sm:$0xf] %vm1229, %v1209
          %1243 = vst.msk [vmem:[%s396 + $0x34] sm:$0xf] %vm1229, %v1210
          %1244 = vst.msk [vmem:[%s396 + $0x38] sm:$0xf] %vm1229, %v1211
          %1245 = vst.msk [vmem:[%s396 + $0x3c] sm:$0xf] %vm1229, %v1212
        $region76: #{pointnet_sa_msg_forward.2} parent=43 // pred_fallthru
          _
        %s1246 = sand.u32 %s201, 1
        %s1247 = scalar_lea.sflag [#allocation5], %s1246
        %s1248 = sand.u32 %s201, 1
        %s1249 = smul.addr %s1248, 64
        %s1250 = scalar_lea.vmem [#allocation14], %s1249
        // Predicated region
        $region77: #{pointnet_sa_msg_forward.2} parent=43 // pred_check
          %p1251 = pneg %p211
        $region78: #{pointnet_sa_msg_forward.2} parent=43 // pred_check_branch
          %1253 = sbr.rel (%p1251) target = $region80
        $region79: #{pointnet_sa_msg_forward.2} parent=43 // pred_region
          %s1255 = ssub.s32 1024, 1024
          %1256 = vsyncadd %s1247, %s1255
          %s1257 = smul.addr %s33, 16
          %s1258 = sadd.s32 %s34, %s1257
          %s1259 = smul.addr %s1258, 64
          %s1260 = scalar_lea.hbm %s6, %s1259
          %s1261 = sshll.u32 %s1250, 4
          %s1262 = int_to_ptr.vmem [resolvable:$true] %s1261
          %1267 = dma.vmem_to_hbm [thread:$0]  %s1262, 1024, %s1260, %s1247, 64, 64, 4
        $region80: #{pointnet_sa_msg_forward.2} parent=43 // pred_fallthru
          _
      $region44: #{pointnet_sa_msg_forward.2} parent=5 // pred_fallthru
        _
      %p1268 = scmp.le.s32.totalorder 2, %s23
      // Predicated region
      $region81: #{pointnet_sa_msg_forward.2} parent=5 // pred_check
        %p1269 = pneg %p1268
      $region82: #{pointnet_sa_msg_forward.2} parent=5 // pred_check_branch
        %1271 = sbr.rel (%p1269) target = $region84
      $region83: #{pointnet_sa_msg_forward.2} parent=5 // pred_region
        %s1272 = ssub.s32 %s23, 2
        // Predicated region
        $region85: #{pointnet_sa_msg_forward.2} parent=83 // pred_check
          %p1273 = pneg %p217
        $region86: #{pointnet_sa_msg_forward.2} parent=83 // pred_check_branch
          %1275 = sbr.rel (%p1273) target = $region88
        $region87: #{pointnet_sa_msg_forward.2} parent=83 // pred_region
          %s1276 = sand.u32 %s202, 1
          %s1277 = scalar_lea.sflag [#allocation5], %s1276
          %s1278 = sand.u32 %s202, 1
          %s1279 = smul.addr %s1278, 64
          %s1280 = scalar_lea.vmem [#allocation14], %s1279
          %1281 = dma.done %s1277, 1024
        $region88: #{pointnet_sa_msg_forward.2} parent=83 // pred_fallthru
          _
      $region84: #{pointnet_sa_msg_forward.2} parent=5 // pred_fallthru
        _
    $region6: #{pointnet_sa_msg_forward.2} parent=1 // loop_footer
      %s27 = sadd.s32 1, %s23
    $region7: #{pointnet_sa_msg_forward.2} parent=1 // loop_footer_branch
      %22 = sbr.rel target = $region3
    $region8: #{pointnet_sa_msg_forward.2} parent=1 // loop_exit
      _
    %1282 = vsyncpa [#allocation4], 1
    %s1283 = scalar_lea.sflag [#allocation4], 1
    %1284 = vsyncpa %s1283, 1
    %1285 = vsyncpa [#allocation7], 1
    %s1286 = scalar_lea.sflag [#allocation7], 1
    %1287 = vsyncpa %s1286, 1
    %1288 = vsyncpa [#allocation10], 1
    %1289 = vsyncpa [#allocation13], 1
    %1290 = vsyncpa [#allocation5], 1
    %s1291 = scalar_lea.sflag [#allocation5], 1
    %1292 = vsyncpa %s1291, 1

// kernel: pointnet_sa_msg_forward.3
$region0: #{pointnet_sa_msg_forward.3}
  #allocation0 [shape = 'u32[]', space=smem, size = 0x4, offset = 0x4, fixed_abs, tag = 'smem constant byte address 0x4 - core index']
  #allocation1 [shape = 'u32[144,128]{1,0:T(1,128)}', space=vmem, size = 0x12000, scoped, tag = 'internal scratch']
  #allocation2 [shape = 'f32[16,128]{1,0:T(8,128)}', space=vmem, size = 0x2000, scoped, tag = 'scratch operand']
  %s0 = inlined_call_operand.hbm [shape: bf16[2,16,16,16], index: 0, kind: input, shape index: {}]
  %s1 = inlined_call_operand.hbm [shape: bf16[2,16,16,3], index: 1, kind: input, shape index: {}]
  %s2 = inlined_call_operand.hbm [shape: f32[3,16], index: 2, kind: input, shape index: {}]
  %s3 = inlined_call_operand.hbm [shape: f32[1,16], index: 3, kind: input, shape index: {}]
  %s4 = inlined_call_operand.hbm [shape: bf16[16,128], index: 4, kind: input, shape index: {}]
  %s5 = inlined_call_operand.hbm [shape: f32[1,128], index: 5, kind: input, shape index: {}]
  %s6 = inlined_call_operand.hbm [shape: bf16[2,128,16], index: 6, kind: output, shape index: {}]
  %s7 = sld [smem:[#allocation0]]
  $region89: #{pointnet_sa_msg_forward.3} parent=0
    _
  %s9 = ssub.s32 1, %s7
  %s10 = scalar_select 0, %s9, %s7
  $region1: #{pointnet_sa_msg_forward.3} parent=0
    #allocation3 [shape = 'u8[131072]{0}', space=vmem, size = 0x20000, scoped, tag = 'input window, operand 0']
    #allocation4 [shape = 's32[2]{0}', space=sflag, size = 0x8, scoped, tag = 'scoped memory for pointnet_sa_msg_forward.3']
    #allocation5 [shape = 's32[2]{0}', space=sflag, size = 0x8, scoped, tag = 'scoped memory for pointnet_sa_msg_forward.3']
    #allocation6 [shape = 'u8[131072]{0}', space=vmem, size = 0x20000, scoped, tag = 'input window, operand 1']
    #allocation7 [shape = 's32[2]{0}', space=sflag, size = 0x8, scoped, tag = 'scoped memory for pointnet_sa_msg_forward.3']
    #allocation8 [shape = 'u8[2048]{0}', space=vmem, size = 0x800, scoped, tag = 'input window, operand 2, single buffered']
    #allocation9 [shape = 'u8[512]{0}', space=vmem, size = 0x400, scoped, tag = 'input window, operand 3, single buffered']
    #allocation10 [shape = 's32[1]{0}', space=sflag, size = 0x4, scoped, tag = 'scoped memory for pointnet_sa_msg_forward.3']
    #allocation11 [shape = 'u8[4096]{0}', space=vmem, size = 0x1000, scoped, tag = 'input window, operand 4, single buffered']
    #allocation12 [shape = 'u8[512]{0}', space=vmem, size = 0x400, scoped, tag = 'input window, operand 5, single buffered']
    #allocation13 [shape = 's32[1]{0}', space=sflag, size = 0x4, scoped, tag = 'scoped memory for pointnet_sa_msg_forward.3']
    #allocation14 [shape = 'u8[65536]{0}', space=vmem, size = 0x10000, scoped, tag = 'output window, operand 0']
    %11 = vsyncpa [#allocation4], 0
    %s12 = scalar_lea.sflag [#allocation4], 1
    %13 = vsyncpa %s12, 0
    %14 = vsyncpa [#allocation7], 0
    %s15 = scalar_lea.sflag [#allocation7], 1
    %16 = vsyncpa %s15, 0
    %17 = vsyncpa [#allocation10], 0
    %18 = vsyncpa [#allocation13], 0
    %19 = vsyncpa [#allocation5], 0
    %s20 = scalar_lea.sflag [#allocation5], 1
    %21 = vsyncpa %s20, 0
    loop: start=0, step=1, limit=4
    $region2: #{pointnet_sa_msg_forward.3} parent=1 // loop_pre_header
      _
    $region3: #{pointnet_sa_msg_forward.3} parent=1 // loop_header
      %s23 = sphi 0, %s27
      %p24 = scmp.ge.s32.totalorder %s23, 4
      %s30 = sphi 0, %s49
      %s31 = sphi 0, %s45
      %s32 = sphi 0, %s41
      %s33 = sphi 0, %s30
      %s34 = sphi 0, %s31
      %s35 = sphi 0, %s32
      %s36 = sphi 0, %s33
      %s37 = sphi 0, %s34
      %s38 = sphi 0, %s35
      %s56 = sphi 0, %s58
      %s59 = sphi 0, %s56
      %s60 = sphi 0, %s59
      %s76 = sphi 0, %s60
      %s86 = sphi 0, %s88
      %s89 = sphi 0, %s86
      %s90 = sphi 0, %s89
      %s106 = sphi 0, %s90
      %s110 = sphi 0, %s110
      %s112 = sphi 0, %s110
      %s113 = sphi 0, %s112
      %s127 = sphi 0, %s113
      %s131 = sphi 0, %s131
      %s133 = sphi 0, %s131
      %s134 = sphi 0, %s133
      %s148 = sphi 0, %s134
      %s152 = sphi 0, %s152
      %s154 = sphi 0, %s152
      %s155 = sphi 0, %s154
      %s169 = sphi 0, %s155
      %s173 = sphi 0, %s173
      %s175 = sphi 0, %s173
      %s176 = sphi 0, %s175
      %s190 = sphi 0, %s176
      %s198 = sphi 0, %s200
      %s201 = sphi 0, %s198
      %s202 = sphi 0, %s201
      %s218 = sphi 0, %s202
    $region4: #{pointnet_sa_msg_forward.3} parent=1 // loop_header_branch
      %26 = sbr.rel (%p24) target = $region8
    $region5: #{pointnet_sa_msg_forward.3} parent=1 // loop_body
      %s28 = ssub.s32 %s23, 1
      %s29 = ssub.s32 %s23, 2
      %s39 = sadd.s32 1, %s32
      %p40 = scmp.ge.s32.totalorder %s39, 1
      %s41 = scalar_select %p40, 0, %s39
      %s42 = sadd.s32 1, %s31
      %s43 = scalar_select %p40, %s42, %s31
      %p44 = scmp.ge.s32.totalorder %s43, 1
      %s45 = scalar_select %p44, 0, %s43
      %s46 = sadd.s32 1, %s30
      %s47 = scalar_select %p44, %s46, %s30
      %p48 = scmp.ge.s32.totalorder %s47, 2
      %s49 = scalar_select %p48, 0, %s47
      %s50 = ssub.s32 %s30, %s49
      %s51 = ssub.s32 %s31, %s45
      %s52 = sor.u32 %s50, %s51
      %s53 = ssub.s32 %s32, %s41
      %s54 = sor.u32 %s52, %s53
      %p55 = scmp.eq.s32.totalorder %s54, 0
      %s57 = sadd.s32 %s56, 1
      %s58 = scalar_select %p55, %s56, %s57
      %p61 = pneg %p55
      %p62 = scmp.eq.s32.totalorder %s23, 1
      %p63 = por %p61, %p62
      %p64 = scmp.ne.s32.totalorder %s56, %s59
      %p65 = scmp.eq.s32.totalorder %s23, 0
      %p66 = por %p64, %p65
      %p67 = scmp.ne.s32.totalorder %s56, %s59
      %p68 = scmp.eq.s32.totalorder %s28, 1
      %p69 = por %p67, %p68
      %p70 = scmp.ne.s32.totalorder %s59, %s60
      %p71 = scmp.eq.s32.totalorder %s28, 0
      %p72 = por %p70, %p71
      %p73 = scmp.ne.s32.totalorder %s59, %s60
      %p74 = scmp.eq.s32.totalorder %s29, 1
      %p75 = por %p73, %p74
      %p77 = scmp.ne.s32.totalorder %s60, %s76
      %p78 = scmp.eq.s32.totalorder %s29, 0
      %p79 = por %p77, %p78
      %s80 = ssub.s32 %s30, %s49
      %s81 = ssub.s32 %s31, %s45
      %s82 = sor.u32 %s80, %s81
      %s83 = ssub.s32 %s32, %s41
      %s84 = sor.u32 %s82, %s83
      %p85 = scmp.eq.s32.totalorder %s84, 0
      %s87 = sadd.s32 %s86, 1
      %s88 = scalar_select %p85, %s86, %s87
      %p91 = pneg %p85
      %p92 = scmp.eq.s32.totalorder %s23, 1
      %p93 = por %p91, %p92
      %p94 = scmp.ne.s32.totalorder %s86, %s89
      %p95 = scmp.eq.s32.totalorder %s23, 0
      %p96 = por %p94, %p95
      %p97 = scmp.ne.s32.totalorder %s86, %s89
      %p98 = scmp.eq.s32.totalorder %s28, 1
      %p99 = por %p97, %p98
      %p100 = scmp.ne.s32.totalorder %s89, %s90
      %p101 = scmp.eq.s32.totalorder %s28, 0
      %p102 = por %p100, %p101
      %p103 = scmp.ne.s32.totalorder %s89, %s90
      %p104 = scmp.eq.s32.totalorder %s29, 1
      %p105 = por %p103, %p104
      %p107 = scmp.ne.s32.totalorder %s90, %s106
      %p108 = scmp.eq.s32.totalorder %s29, 0
      %p109 = por %p107, %p108
      %s111 = sadd.s32 %s110, 1
      %p114 = scmp.eq.s32.totalorder %s23, 1
      %p115 = scmp.ne.s32.totalorder %s110, %s112
      %p116 = scmp.eq.s32.totalorder %s23, 0
      %p117 = por %p115, %p116
      %p118 = scmp.ne.s32.totalorder %s110, %s112
      %p119 = scmp.eq.s32.totalorder %s28, 1
      %p120 = por %p118, %p119
      %p121 = scmp.ne.s32.totalorder %s112, %s113
      %p122 = scmp.eq.s32.totalorder %s28, 0
      %p123 = por %p121, %p122
      %p124 = scmp.ne.s32.totalorder %s112, %s113
      %p125 = scmp.eq.s32.totalorder %s29, 1
      %p126 = por %p124, %p125
      %p128 = scmp.ne.s32.totalorder %s113, %s127
      %p129 = scmp.eq.s32.totalorder %s29, 0
      %p130 = por %p128, %p129
      %s132 = sadd.s32 %s131, 1
      %p135 = scmp.eq.s32.totalorder %s23, 1
      %p136 = scmp.ne.s32.totalorder %s131, %s133
      %p137 = scmp.eq.s32.totalorder %s23, 0
      %p138 = por %p136, %p137
      %p139 = scmp.ne.s32.totalorder %s131, %s133
      %p140 = scmp.eq.s32.totalorder %s28, 1
      %p141 = por %p139, %p140
      %p142 = scmp.ne.s32.totalorder %s133, %s134
      %p143 = scmp.eq.s32.totalorder %s28, 0
      %p144 = por %p142, %p143
      %p145 = scmp.ne.s32.totalorder %s133, %s134
      %p146 = scmp.eq.s32.totalorder %s29, 1
      %p147 = por %p145, %p146
      %p149 = scmp.ne.s32.totalorder %s134, %s148
      %p150 = scmp.eq.s32.totalorder %s29, 0
      %p151 = por %p149, %p150
      %s153 = sadd.s32 %s152, 1
      %p156 = scmp.eq.s32.totalorder %s23, 1
      %p157 = scmp.ne.s32.totalorder %s152, %s154
      %p158 = scmp.eq.s32.totalorder %s23, 0
      %p159 = por %p157, %p158
      %p160 = scmp.ne.s32.totalorder %s152, %s154
      %p161 = scmp.eq.s32.totalorder %s28, 1
      %p162 = por %p160, %p161
      %p163 = scmp.ne.s32.totalorder %s154, %s155
      %p164 = scmp.eq.s32.totalorder %s28, 0
      %p165 = por %p163, %p164
      %p166 = scmp.ne.s32.totalorder %s154, %s155
      %p167 = scmp.eq.s32.totalorder %s29, 1
      %p168 = por %p166, %p167
      %p170 = scmp.ne.s32.totalorder %s155, %s169
      %p171 = scmp.eq.s32.totalorder %s29, 0
      %p172 = por %p170, %p171
      %s174 = sadd.s32 %s173, 1
      %p177 = scmp.eq.s32.totalorder %s23, 1
      %p178 = scmp.ne.s32.totalorder %s173, %s175
      %p179 = scmp.eq.s32.totalorder %s23, 0
      %p180 = por %p178, %p179
      %p181 = scmp.ne.s32.totalorder %s173, %s175
      %p182 = scmp.eq.s32.totalorder %s28, 1
      %p183 = por %p181, %p182
      %p184 = scmp.ne.s32.totalorder %s175, %s176
      %p185 = scmp.eq.s32.totalorder %s28, 0
      %p186 = por %p184, %p185
      %p187 = scmp.ne.s32.totalorder %s175, %s176
      %p188 = scmp.eq.s32.totalorder %s29, 1
      %p189 = por %p187, %p188
      %p191 = scmp.ne.s32.totalorder %s176, %s190
      %p192 = scmp.eq.s32.totalorder %s29, 0
      %p193 = por %p191, %p192
      %s194 = ssub.s32 %s30, %s49
      %s195 = ssub.s32 %s31, %s45
      %s196 = sor.u32 %s194, %s195
      %p197 = scmp.eq.s32.totalorder %s196, 0
      %s199 = sadd.s32 %s198, 1
      %s200 = scalar_select %p197, %s198, %s199
      %p203 = pneg %p197
      %p204 = scmp.eq.s32.totalorder %s23, 1
      %p205 = por %p203, %p204
      %p206 = scmp.ne.s32.totalorder %s198, %s201
      %p207 = scmp.eq.s32.totalorder %s23, 0
      %p208 = por %p206, %p207
      %p209 = scmp.ne.s32.totalorder %s198, %s201
      %p210 = scmp.eq.s32.totalorder %s28, 1
      %p211 = por %p209, %p210
      %p212 = scmp.ne.s32.totalorder %s201, %s202
      %p213 = scmp.eq.s32.totalorder %s28, 0
      %p214 = por %p212, %p213
      %p215 = scmp.ne.s32.totalorder %s201, %s202
      %p216 = scmp.eq.s32.totalorder %s29, 1
      %p217 = por %p215, %p216
      %p219 = scmp.ne.s32.totalorder %s202, %s218
      %p220 = scmp.eq.s32.totalorder %s29, 0
      %p221 = por %p219, %p220
      %p222 = scmp.le.s32.totalorder 1, %s23
      %p223 = scmp.lt.s32.totalorder %s23, 3
      %p224 = pnand %p222, %p223
      %p225 = pneg %p224
      // Predicated region
      $region9: #{pointnet_sa_msg_forward.3} parent=5 // pred_check
        _
      $region10: #{pointnet_sa_msg_forward.3} parent=5 // pred_check_branch
        %227 = sbr.rel (%p224) target = $region12
      $region11: #{pointnet_sa_msg_forward.3} parent=5 // pred_region
        %s228 = ssub.s32 %s23, 1
        // Predicated region
        $region13: #{pointnet_sa_msg_forward.3} parent=11 // pred_check
          %p229 = pneg %p123
        $region14: #{pointnet_sa_msg_forward.3} parent=11 // pred_check_branch
          %231 = sbr.rel (%p229) target = $region16
        $region15: #{pointnet_sa_msg_forward.3} parent=11 // pred_region
          %s233 = ssub.s32 64, 64
          %234 = vsyncadd [#allocation7], %s233
          %s236 = sshll.u32 [#allocation8], 4
          %s237 = int_to_ptr.vmem [resolvable:$true] %s236
          %239 = dma.hbm_to_vmem [thread:$0]  %s2, 64, %s237, [#allocation7]
        $region16: #{pointnet_sa_msg_forward.3} parent=11 // pred_fallthru
          _
        // Predicated region
        $region17: #{pointnet_sa_msg_forward.3} parent=11 // pred_check
          %p240 = pneg %p144
        $region18: #{pointnet_sa_msg_forward.3} parent=11 // pred_check_branch
          %242 = sbr.rel (%p240) target = $region20
        $region19: #{pointnet_sa_msg_forward.3} parent=11 // pred_region
          %s244 = ssub.s32 16, 16
          %245 = vsyncadd [#allocation10], %s244
          %s247 = sshll.u32 [#allocation9], 4
          %s248 = int_to_ptr.vmem [resolvable:$true] %s247
          %250 = dma.hbm_to_vmem [thread:$0]  %s3, 16, %s248, [#allocation10]
        $region20: #{pointnet_sa_msg_forward.3} parent=11 // pred_fallthru
          _
        // Predicated region
        $region21: #{pointnet_sa_msg_forward.3} parent=11 // pred_check
          %p251 = pneg %p165
        $region22: #{pointnet_sa_msg_forward.3} parent=11 // pred_check_branch
          %253 = sbr.rel (%p251) target = $region24
        $region23: #{pointnet_sa_msg_forward.3} parent=11 // pred_region
          %s255 = ssub.s32 128, 128
          %256 = vsyncadd [#allocation10], %s255
          %s257 = sshll.u32 [#allocation11], 4
          %s258 = int_to_ptr.vmem [resolvable:$true] %s257
          %263 = dma.hbm_to_vmem [thread:$0]  %s4, 128, %s258, [#allocation10], 64, 64, 4
        $region24: #{pointnet_sa_msg_forward.3} parent=11 // pred_fallthru
          _
        // Predicated region
        $region25: #{pointnet_sa_msg_forward.3} parent=11 // pred_check
          %p264 = pneg %p186
        $region26: #{pointnet_sa_msg_forward.3} parent=11 // pred_check_branch
          %266 = sbr.rel (%p264) target = $region28
        $region27: #{pointnet_sa_msg_forward.3} parent=11 // pred_region
          %s268 = ssub.s32 16, 16
          %269 = vsyncadd [#allocation13], %s268
          %s271 = sshll.u32 [#allocation12], 4
          %s272 = int_to_ptr.vmem [resolvable:$true] %s271
          %274 = dma.hbm_to_vmem [thread:$0]  %s5, 16, %s272, [#allocation13]
        $region28: #{pointnet_sa_msg_forward.3} parent=11 // pred_fallthru
          _
      $region12: #{pointnet_sa_msg_forward.3} parent=5 // pred_fallthru
        _
      %p275 = scmp.lt.s32.totalorder %s23, 2
      // Predicated region
      $region29: #{pointnet_sa_msg_forward.3} parent=5 // pred_check
        %p276 = pneg %p275
      $region30: #{pointnet_sa_msg_forward.3} parent=5 // pred_check_branch
        %278 = sbr.rel (%p276) target = $region32
      $region31: #{pointnet_sa_msg_forward.3} parent=5 // pred_region
        // Predicated region
        $region33: #{pointnet_sa_msg_forward.3} parent=31 // pred_check
          %p279 = pneg %p66
        $region34: #{pointnet_sa_msg_forward.3} parent=31 // pred_check_branch
          %281 = sbr.rel (%p279) target = $region36
        $region35: #{pointnet_sa_msg_forward.3} parent=31 // pred_region
          %s282 = sand.u32 %s56, 1
          %s283 = scalar_lea.sflag [#allocation4], %s282
          %s284 = sand.u32 %s56, 1
          %s285 = smul.addr %s284, 128
          %s286 = scalar_lea.vmem [#allocation3], %s285
          %s287 = smul.u32 16, %s31
          %s288 = smul.u32 2, %s32
          %s290 = ssub.s32 2048, 2048
          %291 = vsyncadd %s283, %s290
          %s292 = smul.addr %s287, 2
          %s293 = sadd.s32 %s288, %s292
          %s294 = smul.addr %s30, 32
          %s295 = sadd.s32 %s293, %s294
          %s296 = smul.addr %s295, 64
          %s297 = scalar_lea.hbm %s0, %s296
          %s298 = sshll.u32 %s286, 4
          %s299 = int_to_ptr.vmem [resolvable:$true] %s298
          %304 = dma.hbm_to_vmem [thread:$0]  %s297, 2048, %s299, %s283, 64, 64, 4
        $region36: #{pointnet_sa_msg_forward.3} parent=31 // pred_fallthru
          _
        // Predicated region
        $region37: #{pointnet_sa_msg_forward.3} parent=31 // pred_check
          %p305 = pneg %p96
        $region38: #{pointnet_sa_msg_forward.3} parent=31 // pred_check_branch
          %307 = sbr.rel (%p305) target = $region40
        $region39: #{pointnet_sa_msg_forward.3} parent=31 // pred_region
          %s308 = sand.u32 %s23, 1
          %s309 = scalar_lea.sflag [#allocation7], %s308
          %s310 = sand.u32 %s86, 1
          %s311 = smul.addr %s310, 128
          %s312 = scalar_lea.vmem [#allocation6], %s311
          %s313 = smul.u32 16, %s31
          %s314 = smul.u32 2, %s32
          %s316 = ssub.s32 2048, 2048
          %317 = vsyncadd %s309, %s316
          %s318 = smul.addr %s313, 2
          %s319 = sadd.s32 %s314, %s318
          %s320 = smul.addr %s30, 32
          %s321 = sadd.s32 %s319, %s320
          %s322 = smul.addr %s321, 64
          %s323 = scalar_lea.hbm %s1, %s322
          %s324 = sshll.u32 %s312, 4
          %s325 = int_to_ptr.vmem [resolvable:$true] %s324
          %330 = dma.hbm_to_vmem [thread:$0]  %s323, 2048, %s325, %s309, 64, 64, 4
        $region40: #{pointnet_sa_msg_forward.3} parent=31 // pred_fallthru
          _
      $region32: #{pointnet_sa_msg_forward.3} parent=5 // pred_fallthru
        _
      %p331 = scmp.le.s32.totalorder 1, %s23
      %p332 = scmp.lt.s32.totalorder %s23, 3
      %p333 = pnand %p331, %p332
      %p334 = pneg %p333
      // Predicated region
      $region41: #{pointnet_sa_msg_forward.3} parent=5 // pred_check
        _
      $region42: #{pointnet_sa_msg_forward.3} parent=5 // pred_check_branch
        %336 = sbr.rel (%p333) target = $region44
      $region43: #{pointnet_sa_msg_forward.3} parent=5 // pred_region
        %s337 = ssub.s32 %s23, 1
        %s338 = sand.u32 %s59, 1
        %s339 = scalar_lea.sflag [#allocation4], %s338
        %s340 = sand.u32 %s59, 1
        %s341 = smul.addr %s340, 128
        %s342 = scalar_lea.vmem [#allocation3], %s341
        // Predicated region
        $region45: #{pointnet_sa_msg_forward.3} parent=43 // pred_check
          %p343 = pneg %p72
        $region46: #{pointnet_sa_msg_forward.3} parent=43 // pred_check_branch
          %345 = sbr.rel (%p343) target = $region48
        $region47: #{pointnet_sa_msg_forward.3} parent=43 // pred_region
          %346 = dma.done %s339, 2048
        $region48: #{pointnet_sa_msg_forward.3} parent=43 // pred_fallthru
          _
        %s347 = sand.u32 %s28, 1
        %s348 = scalar_lea.sflag [#allocation7], %s347
        %s349 = sand.u32 %s89, 1
        %s350 = smul.addr %s349, 128
        %s351 = scalar_lea.vmem [#allocation6], %s350
        // Predicated region
        $region49: #{pointnet_sa_msg_forward.3} parent=43 // pred_check
          %p352 = pneg %p102
        $region50: #{pointnet_sa_msg_forward.3} parent=43 // pred_check_branch
          %354 = sbr.rel (%p352) target = $region52
        $region51: #{pointnet_sa_msg_forward.3} parent=43 // pred_region
          %355 = dma.done %s348, 2048
        $region52: #{pointnet_sa_msg_forward.3} parent=43 // pred_fallthru
          _
        // Predicated region
        $region53: #{pointnet_sa_msg_forward.3} parent=43 // pred_check
          %p356 = pneg %p123
        $region54: #{pointnet_sa_msg_forward.3} parent=43 // pred_check_branch
          %358 = sbr.rel (%p356) target = $region56
        $region55: #{pointnet_sa_msg_forward.3} parent=43 // pred_region
          %359 = dma.done [#allocation7], 64
        $region56: #{pointnet_sa_msg_forward.3} parent=43 // pred_fallthru
          _
        // Predicated region
        $region57: #{pointnet_sa_msg_forward.3} parent=43 // pred_check
          %p360 = pneg %p144
        $region58: #{pointnet_sa_msg_forward.3} parent=43 // pred_check_branch
          %362 = sbr.rel (%p360) target = $region60
        $region59: #{pointnet_sa_msg_forward.3} parent=43 // pred_region
          %363 = dma.done [#allocation10], 16
        $region60: #{pointnet_sa_msg_forward.3} parent=43 // pred_fallthru
          _
        // Predicated region
        $region61: #{pointnet_sa_msg_forward.3} parent=43 // pred_check
          %p364 = pneg %p165
        $region62: #{pointnet_sa_msg_forward.3} parent=43 // pred_check_branch
          %366 = sbr.rel (%p364) target = $region64
        $region63: #{pointnet_sa_msg_forward.3} parent=43 // pred_region
          %367 = dma.done [#allocation10], 128
        $region64: #{pointnet_sa_msg_forward.3} parent=43 // pred_fallthru
          _
        // Predicated region
        $region65: #{pointnet_sa_msg_forward.3} parent=43 // pred_check
          %p368 = pneg %p186
        $region66: #{pointnet_sa_msg_forward.3} parent=43 // pred_check_branch
          %370 = sbr.rel (%p368) target = $region68
        $region67: #{pointnet_sa_msg_forward.3} parent=43 // pred_region
          %371 = dma.done [#allocation13], 16
        $region68: #{pointnet_sa_msg_forward.3} parent=43 // pred_fallthru
          _
        %s372 = sand.u32 %s59, 1
        %s373 = scalar_lea.sflag [#allocation4], %s372
        %s374 = sand.u32 %s59, 1
        %s375 = smul.addr %s374, 128
        %s376 = scalar_lea.vmem [#allocation3], %s375
        %p377 = pneg %p72
        %p378 = pneg %p69
        %s379 = sand.u32 %s28, 1
        %s380 = scalar_lea.sflag [#allocation7], %s379
        %s381 = sand.u32 %s89, 1
        %s382 = smul.addr %s381, 128
        %s383 = scalar_lea.vmem [#allocation6], %s382
        %p384 = pneg %p102
        %p385 = pneg %p99
        %p386 = pneg %p123
        %p387 = pneg %p120
        %p388 = pneg %p144
        %p389 = pneg %p141
        %p390 = pneg %p165
        %p391 = pneg %p162
        %p392 = pneg %p186
        %p393 = pneg %p183
        %p394 = pneg %p214
        %p395 = pneg %p211
        %s396 = sand.u32 %s201, 1
        %s397 = scalar_lea.sflag [#allocation5], %s396
        %s398 = sand.u32 %s201, 1
        %s399 = smul.addr %s398, 64
        %s400 = scalar_lea.vmem [#allocation14], %s399
        %s401 = smul.u32 16, %s34
        %s402 = smul.u32 2, %s35
        %s403 = smul.u32 16, %s34
        %s404 = smul.u32 2, %s35
        %v406 = vld [vmem:[%s342] sm:$0xf]
        %v407 = vld [vmem:[%s342 + $0x4] sm:$0xf]
        %v408 = vld [vmem:[%s342 + $0x8] sm:$0xf]
        %v409 = vld [vmem:[%s342 + $0xc] sm:$0xf]
        %v410 = vld [vmem:[%s342 + $0x10] sm:$0xf]
        %v411 = vld [vmem:[%s342 + $0x14] sm:$0xf]
        %v412 = vld [vmem:[%s342 + $0x18] sm:$0xf]
        %v413 = vld [vmem:[%s342 + $0x1c] sm:$0xf]
        %v414 = vld [vmem:[%s342 + $0x20] sm:$0xf]
        %v415 = vld [vmem:[%s342 + $0x24] sm:$0xf]
        %v416 = vld [vmem:[%s342 + $0x28] sm:$0xf]
        %v417 = vld [vmem:[%s342 + $0x2c] sm:$0xf]
        %v418 = vld [vmem:[%s342 + $0x30] sm:$0xf]
        %v419 = vld [vmem:[%s342 + $0x34] sm:$0xf]
        %v420 = vld [vmem:[%s342 + $0x38] sm:$0xf]
        %v421 = vld [vmem:[%s342 + $0x3c] sm:$0xf]
        %v422 = vld [vmem:[%s342 + $0x40] sm:$0xf]
        %v423 = vld [vmem:[%s342 + $0x44] sm:$0xf]
        %v424 = vld [vmem:[%s342 + $0x48] sm:$0xf]
        %v425 = vld [vmem:[%s342 + $0x4c] sm:$0xf]
        %v426 = vld [vmem:[%s342 + $0x50] sm:$0xf]
        %v427 = vld [vmem:[%s342 + $0x54] sm:$0xf]
        %v428 = vld [vmem:[%s342 + $0x58] sm:$0xf]
        %v429 = vld [vmem:[%s342 + $0x5c] sm:$0xf]
        %v430 = vld [vmem:[%s342 + $0x60] sm:$0xf]
        %v431 = vld [vmem:[%s342 + $0x64] sm:$0xf]
        %v432 = vld [vmem:[%s342 + $0x68] sm:$0xf]
        %v433 = vld [vmem:[%s342 + $0x6c] sm:$0xf]
        %v434 = vld [vmem:[%s342 + $0x70] sm:$0xf]
        %v435 = vld [vmem:[%s342 + $0x74] sm:$0xf]
        %v436 = vld [vmem:[%s342 + $0x78] sm:$0xf]
        %v437 = vld [vmem:[%s342 + $0x7c] sm:$0xf]
        %v438 = vld [vmem:[%s351] sm:$0xf]
        %v439 = vld [vmem:[%s351 + $0x4] sm:$0xf]
        %v440 = vld [vmem:[%s351 + $0x8] sm:$0xf]
        %v441 = vld [vmem:[%s351 + $0xc] sm:$0xf]
        %v442 = vld [vmem:[%s351 + $0x10] sm:$0xf]
        %v443 = vld [vmem:[%s351 + $0x14] sm:$0xf]
        %v444 = vld [vmem:[%s351 + $0x18] sm:$0xf]
        %v445 = vld [vmem:[%s351 + $0x1c] sm:$0xf]
        %v446 = vld [vmem:[%s351 + $0x20] sm:$0xf]
        %v447 = vld [vmem:[%s351 + $0x24] sm:$0xf]
        %v448 = vld [vmem:[%s351 + $0x28] sm:$0xf]
        %v449 = vld [vmem:[%s351 + $0x2c] sm:$0xf]
        %v450 = vld [vmem:[%s351 + $0x30] sm:$0xf]
        %v451 = vld [vmem:[%s351 + $0x34] sm:$0xf]
        %v452 = vld [vmem:[%s351 + $0x38] sm:$0xf]
        %v453 = vld [vmem:[%s351 + $0x3c] sm:$0xf]
        %v454 = vld [vmem:[%s351 + $0x40] sm:$0xf]
        %v455 = vld [vmem:[%s351 + $0x44] sm:$0xf]
        %v456 = vld [vmem:[%s351 + $0x48] sm:$0xf]
        %v457 = vld [vmem:[%s351 + $0x4c] sm:$0xf]
        %v458 = vld [vmem:[%s351 + $0x50] sm:$0xf]
        %v459 = vld [vmem:[%s351 + $0x54] sm:$0xf]
        %v460 = vld [vmem:[%s351 + $0x58] sm:$0xf]
        %v461 = vld [vmem:[%s351 + $0x5c] sm:$0xf]
        %v462 = vld [vmem:[%s351 + $0x60] sm:$0xf]
        %v463 = vld [vmem:[%s351 + $0x64] sm:$0xf]
        %v464 = vld [vmem:[%s351 + $0x68] sm:$0xf]
        %v465 = vld [vmem:[%s351 + $0x6c] sm:$0xf]
        %v466 = vld [vmem:[%s351 + $0x70] sm:$0xf]
        %v467 = vld [vmem:[%s351 + $0x74] sm:$0xf]
        %v468 = vld [vmem:[%s351 + $0x78] sm:$0xf]
        %v469 = vld [vmem:[%s351 + $0x7c] sm:$0xf]
        %v470 = vunpack.c.l.bf16 %v438
        %v471 = vunpack.c.l.bf16 %v439
        %v472 = vunpack.c.l.bf16 %v440
        %v473 = vunpack.c.l.bf16 %v441
        %v474 = vunpack.c.l.bf16 %v442
        %v475 = vunpack.c.l.bf16 %v443
        %v476 = vunpack.c.l.bf16 %v444
        %v477 = vunpack.c.l.bf16 %v445
        %v478 = vunpack.c.l.bf16 %v446
        %v479 = vunpack.c.l.bf16 %v447
        %v480 = vunpack.c.l.bf16 %v448
        %v481 = vunpack.c.l.bf16 %v449
        %v482 = vunpack.c.l.bf16 %v450
        %v483 = vunpack.c.l.bf16 %v451
        %v484 = vunpack.c.l.bf16 %v452
        %v485 = vunpack.c.l.bf16 %v453
        %v486 = vunpack.c.l.bf16 %v454
        %v487 = vunpack.c.l.bf16 %v455
        %v488 = vunpack.c.l.bf16 %v456
        %v489 = vunpack.c.l.bf16 %v457
        %v490 = vunpack.c.l.bf16 %v458
        %v491 = vunpack.c.l.bf16 %v459
        %v492 = vunpack.c.l.bf16 %v460
        %v493 = vunpack.c.l.bf16 %v461
        %v494 = vunpack.c.l.bf16 %v462
        %v495 = vunpack.c.l.bf16 %v463
        %v496 = vunpack.c.l.bf16 %v464
        %v497 = vunpack.c.l.bf16 %v465
        %v498 = vunpack.c.l.bf16 %v466
        %v499 = vunpack.c.l.bf16 %v467
        %v500 = vunpack.c.l.bf16 %v468
        %v501 = vunpack.c.l.bf16 %v469
        %v502 = vld [vmem:[#allocation8] sm:$0x7]
        %v503 = vld [vmem:[#allocation9] sm:$0x1]
        %505 = vset.pattern.permute.xlu0 0
        %506 = vperm.xlu0 %505, %v470
        %v507 = vpop.permute.xlu0 %506
        %510 = vset.pattern.permute.xlu0 0
        %511 = vperm.xlu0 %510, %v471
        %v512 = vpop.permute.xlu0 %511
        %515 = vset.pattern.permute.xlu0 0
        %516 = vperm.xlu0 %515, %v472
        %v517 = vpop.permute.xlu0 %516
        %520 = vset.pattern.permute.xlu0 0
        %521 = vperm.xlu0 %520, %v473
        %v522 = vpop.permute.xlu0 %521
        %525 = vset.pattern.permute.xlu0 0
        %526 = vperm.xlu0 %525, %v474
        %v527 = vpop.permute.xlu0 %526
        %530 = vset.pattern.permute.xlu0 0
        %531 = vperm.xlu0 %530, %v475
        %v532 = vpop.permute.xlu0 %531
        %535 = vset.pattern.permute.xlu0 0
        %536 = vperm.xlu0 %535, %v476
        %v537 = vpop.permute.xlu0 %536
        %540 = vset.pattern.permute.xlu0 0
        %541 = vperm.xlu0 %540, %v477
        %v542 = vpop.permute.xlu0 %541
        %545 = vset.pattern.permute.xlu0 0
        %546 = vperm.xlu0 %545, %v478
        %v547 = vpop.permute.xlu0 %546
        %550 = vset.pattern.permute.xlu0 0
        %551 = vperm.xlu0 %550, %v479
        %v552 = vpop.permute.xlu0 %551
        %555 = vset.pattern.permute.xlu0 0
        %556 = vperm.xlu0 %555, %v480
        %v557 = vpop.permute.xlu0 %556
        %560 = vset.pattern.permute.xlu0 0
        %561 = vperm.xlu0 %560, %v481
        %v562 = vpop.permute.xlu0 %561
        %565 = vset.pattern.permute.xlu0 0
        %566 = vperm.xlu0 %565, %v482
        %v567 = vpop.permute.xlu0 %566
        %570 = vset.pattern.permute.xlu0 0
        %571 = vperm.xlu0 %570, %v483
        %v572 = vpop.permute.xlu0 %571
        %575 = vset.pattern.permute.xlu0 0
        %576 = vperm.xlu0 %575, %v484
        %v577 = vpop.permute.xlu0 %576
        %580 = vset.pattern.permute.xlu0 0
        %581 = vperm.xlu0 %580, %v485
        %v582 = vpop.permute.xlu0 %581
        %585 = vset.pattern.permute.xlu0 0
        %586 = vperm.xlu0 %585, %v486
        %v587 = vpop.permute.xlu0 %586
        %590 = vset.pattern.permute.xlu0 0
        %591 = vperm.xlu0 %590, %v487
        %v592 = vpop.permute.xlu0 %591
        %595 = vset.pattern.permute.xlu0 0
        %596 = vperm.xlu0 %595, %v488
        %v597 = vpop.permute.xlu0 %596
        %600 = vset.pattern.permute.xlu0 0
        %601 = vperm.xlu0 %600, %v489
        %v602 = vpop.permute.xlu0 %601
        %605 = vset.pattern.permute.xlu0 0
        %606 = vperm.xlu0 %605, %v490
        %v607 = vpop.permute.xlu0 %606
        %610 = vset.pattern.permute.xlu0 0
        %611 = vperm.xlu0 %610, %v491
        %v612 = vpop.permute.xlu0 %611
        %615 = vset.pattern.permute.xlu0 0
        %616 = vperm.xlu0 %615, %v492
        %v617 = vpop.permute.xlu0 %616
        %620 = vset.pattern.permute.xlu0 0
        %621 = vperm.xlu0 %620, %v493
        %v622 = vpop.permute.xlu0 %621
        %625 = vset.pattern.permute.xlu0 0
        %626 = vperm.xlu0 %625, %v494
        %v627 = vpop.permute.xlu0 %626
        %630 = vset.pattern.permute.xlu0 0
        %631 = vperm.xlu0 %630, %v495
        %v632 = vpop.permute.xlu0 %631
        %635 = vset.pattern.permute.xlu0 0
        %636 = vperm.xlu0 %635, %v496
        %v637 = vpop.permute.xlu0 %636
        %640 = vset.pattern.permute.xlu0 0
        %641 = vperm.xlu0 %640, %v497
        %v642 = vpop.permute.xlu0 %641
        %645 = vset.pattern.permute.xlu0 0
        %646 = vperm.xlu0 %645, %v498
        %v647 = vpop.permute.xlu0 %646
        %650 = vset.pattern.permute.xlu0 0
        %651 = vperm.xlu0 %650, %v499
        %v652 = vpop.permute.xlu0 %651
        %655 = vset.pattern.permute.xlu0 0
        %656 = vperm.xlu0 %655, %v500
        %v657 = vpop.permute.xlu0 %656
        %660 = vset.pattern.permute.xlu0 0
        %661 = vperm.xlu0 %660, %v501
        %v662 = vpop.permute.xlu0 %661
        %v664 = vlaneseq
        %v665 = vshrl.u32 %v664, 7
        %v666 = vsub.s32 0, %v665
        %v667 = vrot.slane %v502, %v666
        %v668 = vmul.f32 %v507, %v667
        %v669 = vmul.f32 %v512, %v667
        %v670 = vmul.f32 %v517, %v667
        %v671 = vmul.f32 %v522, %v667
        %v672 = vmul.f32 %v527, %v667
        %v673 = vmul.f32 %v532, %v667
        %v674 = vmul.f32 %v537, %v667
        %v675 = vmul.f32 %v542, %v667
        %v676 = vmul.f32 %v547, %v667
        %v677 = vmul.f32 %v552, %v667
        %v678 = vmul.f32 %v557, %v667
        %v679 = vmul.f32 %v562, %v667
        %v680 = vmul.f32 %v567, %v667
        %v681 = vmul.f32 %v572, %v667
        %v682 = vmul.f32 %v577, %v667
        %v683 = vmul.f32 %v582, %v667
        %v684 = vmul.f32 %v587, %v667
        %v685 = vmul.f32 %v592, %v667
        %v686 = vmul.f32 %v597, %v667
        %v687 = vmul.f32 %v602, %v667
        %v688 = vmul.f32 %v607, %v667
        %v689 = vmul.f32 %v612, %v667
        %v690 = vmul.f32 %v617, %v667
        %v691 = vmul.f32 %v622, %v667
        %v692 = vmul.f32 %v627, %v667
        %v693 = vmul.f32 %v632, %v667
        %v694 = vmul.f32 %v637, %v667
        %v695 = vmul.f32 %v642, %v667
        %v696 = vmul.f32 %v647, %v667
        %v697 = vmul.f32 %v652, %v667
        %v698 = vmul.f32 %v657, %v667
        %v699 = vmul.f32 %v662, %v667
        %700 = vset.pattern.permute.xlu0 1
        %701 = vperm.xlu0 %700, %v470
        %v702 = vpop.permute.xlu0 %701
        %704 = vset.pattern.permute.xlu0 1
        %705 = vperm.xlu0 %704, %v471
        %v706 = vpop.permute.xlu0 %705
        %708 = vset.pattern.permute.xlu0 1
        %709 = vperm.xlu0 %708, %v472
        %v710 = vpop.permute.xlu0 %709
        %712 = vset.pattern.permute.xlu0 1
        %713 = vperm.xlu0 %712, %v473
        %v714 = vpop.permute.xlu0 %713
        %716 = vset.pattern.permute.xlu0 1
        %717 = vperm.xlu0 %716, %v474
        %v718 = vpop.permute.xlu0 %717
        %720 = vset.pattern.permute.xlu0 1
        %721 = vperm.xlu0 %720, %v475
        %v722 = vpop.permute.xlu0 %721
        %724 = vset.pattern.permute.xlu0 1
        %725 = vperm.xlu0 %724, %v476
        %v726 = vpop.permute.xlu0 %725
        %728 = vset.pattern.permute.xlu0 1
        %729 = vperm.xlu0 %728, %v477
        %v730 = vpop.permute.xlu0 %729
        %732 = vset.pattern.permute.xlu0 1
        %733 = vperm.xlu0 %732, %v478
        %v734 = vpop.permute.xlu0 %733
        %736 = vset.pattern.permute.xlu0 1
        %737 = vperm.xlu0 %736, %v479
        %v738 = vpop.permute.xlu0 %737
        %740 = vset.pattern.permute.xlu0 1
        %741 = vperm.xlu0 %740, %v480
        %v742 = vpop.permute.xlu0 %741
        %744 = vset.pattern.permute.xlu0 1
        %745 = vperm.xlu0 %744, %v481
        %v746 = vpop.permute.xlu0 %745
        %748 = vset.pattern.permute.xlu0 1
        %749 = vperm.xlu0 %748, %v482
        %v750 = vpop.permute.xlu0 %749
        %752 = vset.pattern.permute.xlu0 1
        %753 = vperm.xlu0 %752, %v483
        %v754 = vpop.permute.xlu0 %753
        %756 = vset.pattern.permute.xlu0 1
        %757 = vperm.xlu0 %756, %v484
        %v758 = vpop.permute.xlu0 %757
        %760 = vset.pattern.permute.xlu0 1
        %761 = vperm.xlu0 %760, %v485
        %v762 = vpop.permute.xlu0 %761
        %764 = vset.pattern.permute.xlu0 1
        %765 = vperm.xlu0 %764, %v486
        %v766 = vpop.permute.xlu0 %765
        %768 = vset.pattern.permute.xlu0 1
        %769 = vperm.xlu0 %768, %v487
        %v770 = vpop.permute.xlu0 %769
        %772 = vset.pattern.permute.xlu0 1
        %773 = vperm.xlu0 %772, %v488
        %v774 = vpop.permute.xlu0 %773
        %776 = vset.pattern.permute.xlu0 1
        %777 = vperm.xlu0 %776, %v489
        %v778 = vpop.permute.xlu0 %777
        %780 = vset.pattern.permute.xlu0 1
        %781 = vperm.xlu0 %780, %v490
        %v782 = vpop.permute.xlu0 %781
        %784 = vset.pattern.permute.xlu0 1
        %785 = vperm.xlu0 %784, %v491
        %v786 = vpop.permute.xlu0 %785
        %788 = vset.pattern.permute.xlu0 1
        %789 = vperm.xlu0 %788, %v492
        %v790 = vpop.permute.xlu0 %789
        %792 = vset.pattern.permute.xlu0 1
        %793 = vperm.xlu0 %792, %v493
        %v794 = vpop.permute.xlu0 %793
        %796 = vset.pattern.permute.xlu0 1
        %797 = vperm.xlu0 %796, %v494
        %v798 = vpop.permute.xlu0 %797
        %800 = vset.pattern.permute.xlu0 1
        %801 = vperm.xlu0 %800, %v495
        %v802 = vpop.permute.xlu0 %801
        %804 = vset.pattern.permute.xlu0 1
        %805 = vperm.xlu0 %804, %v496
        %v806 = vpop.permute.xlu0 %805
        %808 = vset.pattern.permute.xlu0 1
        %809 = vperm.xlu0 %808, %v497
        %v810 = vpop.permute.xlu0 %809
        %812 = vset.pattern.permute.xlu0 1
        %813 = vperm.xlu0 %812, %v498
        %v814 = vpop.permute.xlu0 %813
        %816 = vset.pattern.permute.xlu0 1
        %817 = vperm.xlu0 %816, %v499
        %v818 = vpop.permute.xlu0 %817
        %820 = vset.pattern.permute.xlu0 1
        %821 = vperm.xlu0 %820, %v500
        %v822 = vpop.permute.xlu0 %821
        %824 = vset.pattern.permute.xlu0 1
        %825 = vperm.xlu0 %824, %v501
        %v826 = vpop.permute.xlu0 %825
        %v828 = vlaneseq
        %v829 = vshrl.u32 %v828, 7
        %v830 = vsub.s32 1, %v829
        %v831 = vrot.slane %v502, %v830
        %v832 = vmul.f32 %v702, %v831
        %v833 = vmul.f32 %v706, %v831
        %v834 = vmul.f32 %v710, %v831
        %v835 = vmul.f32 %v714, %v831
        %v836 = vmul.f32 %v718, %v831
        %v837 = vmul.f32 %v722, %v831
        %v838 = vmul.f32 %v726, %v831
        %v839 = vmul.f32 %v730, %v831
        %v840 = vmul.f32 %v734, %v831
        %v841 = vmul.f32 %v738, %v831
        %v842 = vmul.f32 %v742, %v831
        %v843 = vmul.f32 %v746, %v831
        %v844 = vmul.f32 %v750, %v831
        %v845 = vmul.f32 %v754, %v831
        %v846 = vmul.f32 %v758, %v831
        %v847 = vmul.f32 %v762, %v831
        %v848 = vmul.f32 %v766, %v831
        %v849 = vmul.f32 %v770, %v831
        %v850 = vmul.f32 %v774, %v831
        %v851 = vmul.f32 %v778, %v831
        %v852 = vmul.f32 %v782, %v831
        %v853 = vmul.f32 %v786, %v831
        %v854 = vmul.f32 %v790, %v831
        %v855 = vmul.f32 %v794, %v831
        %v856 = vmul.f32 %v798, %v831
        %v857 = vmul.f32 %v802, %v831
        %v858 = vmul.f32 %v806, %v831
        %v859 = vmul.f32 %v810, %v831
        %v860 = vmul.f32 %v814, %v831
        %v861 = vmul.f32 %v818, %v831
        %v862 = vmul.f32 %v822, %v831
        %v863 = vmul.f32 %v826, %v831
        %v864 = vadd.f32 %v668, %v832
        %v865 = vadd.f32 %v669, %v833
        %v866 = vadd.f32 %v670, %v834
        %v867 = vadd.f32 %v671, %v835
        %v868 = vadd.f32 %v672, %v836
        %v869 = vadd.f32 %v673, %v837
        %v870 = vadd.f32 %v674, %v838
        %v871 = vadd.f32 %v675, %v839
        %v872 = vadd.f32 %v676, %v840
        %v873 = vadd.f32 %v677, %v841
        %v874 = vadd.f32 %v678, %v842
        %v875 = vadd.f32 %v679, %v843
        %v876 = vadd.f32 %v680, %v844
        %v877 = vadd.f32 %v681, %v845
        %v878 = vadd.f32 %v682, %v846
        %v879 = vadd.f32 %v683, %v847
        %v880 = vadd.f32 %v684, %v848
        %v881 = vadd.f32 %v685, %v849
        %v882 = vadd.f32 %v686, %v850
        %v883 = vadd.f32 %v687, %v851
        %v884 = vadd.f32 %v688, %v852
        %v885 = vadd.f32 %v689, %v853
        %v886 = vadd.f32 %v690, %v854
        %v887 = vadd.f32 %v691, %v855
        %v888 = vadd.f32 %v692, %v856
        %v889 = vadd.f32 %v693, %v857
        %v890 = vadd.f32 %v694, %v858
        %v891 = vadd.f32 %v695, %v859
        %v892 = vadd.f32 %v696, %v860
        %v893 = vadd.f32 %v697, %v861
        %v894 = vadd.f32 %v698, %v862
        %v895 = vadd.f32 %v699, %v863
        %896 = vset.pattern.permute.xlu0 2
        %897 = vperm.xlu0 %896, %v470
        %v898 = vpop.permute.xlu0 %897
        %900 = vset.pattern.permute.xlu0 2
        %901 = vperm.xlu0 %900, %v471
        %v902 = vpop.permute.xlu0 %901
        %904 = vset.pattern.permute.xlu0 2
        %905 = vperm.xlu0 %904, %v472
        %v906 = vpop.permute.xlu0 %905
        %908 = vset.pattern.permute.xlu0 2
        %909 = vperm.xlu0 %908, %v473
        %v910 = vpop.permute.xlu0 %909
        %912 = vset.pattern.permute.xlu0 2
        %913 = vperm.xlu0 %912, %v474
        %v914 = vpop.permute.xlu0 %913
        %916 = vset.pattern.permute.xlu0 2
        %917 = vperm.xlu0 %916, %v475
        %v918 = vpop.permute.xlu0 %917
        %920 = vset.pattern.permute.xlu0 2
        %921 = vperm.xlu0 %920, %v476
        %v922 = vpop.permute.xlu0 %921
        %924 = vset.pattern.permute.xlu0 2
        %925 = vperm.xlu0 %924, %v477
        %v926 = vpop.permute.xlu0 %925
        %928 = vset.pattern.permute.xlu0 2
        %929 = vperm.xlu0 %928, %v478
        %v930 = vpop.permute.xlu0 %929
        %932 = vset.pattern.permute.xlu0 2
        %933 = vperm.xlu0 %932, %v479
        %v934 = vpop.permute.xlu0 %933
        %936 = vset.pattern.permute.xlu0 2
        %937 = vperm.xlu0 %936, %v480
        %v938 = vpop.permute.xlu0 %937
        %940 = vset.pattern.permute.xlu0 2
        %941 = vperm.xlu0 %940, %v481
        %v942 = vpop.permute.xlu0 %941
        %944 = vset.pattern.permute.xlu0 2
        %945 = vperm.xlu0 %944, %v482
        %v946 = vpop.permute.xlu0 %945
        %948 = vset.pattern.permute.xlu0 2
        %949 = vperm.xlu0 %948, %v483
        %v950 = vpop.permute.xlu0 %949
        %952 = vset.pattern.permute.xlu0 2
        %953 = vperm.xlu0 %952, %v484
        %v954 = vpop.permute.xlu0 %953
        %956 = vset.pattern.permute.xlu0 2
        %957 = vperm.xlu0 %956, %v485
        %v958 = vpop.permute.xlu0 %957
        %960 = vset.pattern.permute.xlu0 2
        %961 = vperm.xlu0 %960, %v486
        %v962 = vpop.permute.xlu0 %961
        %964 = vset.pattern.permute.xlu0 2
        %965 = vperm.xlu0 %964, %v487
        %v966 = vpop.permute.xlu0 %965
        %968 = vset.pattern.permute.xlu0 2
        %969 = vperm.xlu0 %968, %v488
        %v970 = vpop.permute.xlu0 %969
        %972 = vset.pattern.permute.xlu0 2
        %973 = vperm.xlu0 %972, %v489
        %v974 = vpop.permute.xlu0 %973
        %976 = vset.pattern.permute.xlu0 2
        %977 = vperm.xlu0 %976, %v490
        %v978 = vpop.permute.xlu0 %977
        %980 = vset.pattern.permute.xlu0 2
        %981 = vperm.xlu0 %980, %v491
        %v982 = vpop.permute.xlu0 %981
        %984 = vset.pattern.permute.xlu0 2
        %985 = vperm.xlu0 %984, %v492
        %v986 = vpop.permute.xlu0 %985
        %988 = vset.pattern.permute.xlu0 2
        %989 = vperm.xlu0 %988, %v493
        %v990 = vpop.permute.xlu0 %989
        %992 = vset.pattern.permute.xlu0 2
        %993 = vperm.xlu0 %992, %v494
        %v994 = vpop.permute.xlu0 %993
        %996 = vset.pattern.permute.xlu0 2
        %997 = vperm.xlu0 %996, %v495
        %v998 = vpop.permute.xlu0 %997
        %1000 = vset.pattern.permute.xlu0 2
        %1001 = vperm.xlu0 %1000, %v496
        %v1002 = vpop.permute.xlu0 %1001
        %1004 = vset.pattern.permute.xlu0 2
        %1005 = vperm.xlu0 %1004, %v497
        %v1006 = vpop.permute.xlu0 %1005
        %1008 = vset.pattern.permute.xlu0 2
        %1009 = vperm.xlu0 %1008, %v498
        %v1010 = vpop.permute.xlu0 %1009
        %1012 = vset.pattern.permute.xlu0 2
        %1013 = vperm.xlu0 %1012, %v499
        %v1014 = vpop.permute.xlu0 %1013
        %1016 = vset.pattern.permute.xlu0 2
        %1017 = vperm.xlu0 %1016, %v500
        %v1018 = vpop.permute.xlu0 %1017
        %1020 = vset.pattern.permute.xlu0 2
        %1021 = vperm.xlu0 %1020, %v501
        %v1022 = vpop.permute.xlu0 %1021
        %v1024 = vlaneseq
        %v1025 = vshrl.u32 %v1024, 7
        %v1026 = vsub.s32 2, %v1025
        %v1027 = vrot.slane %v502, %v1026
        %v1028 = vmul.f32 %v898, %v1027
        %v1029 = vmul.f32 %v902, %v1027
        %v1030 = vmul.f32 %v906, %v1027
        %v1031 = vmul.f32 %v910, %v1027
        %v1032 = vmul.f32 %v914, %v1027
        %v1033 = vmul.f32 %v918, %v1027
        %v1034 = vmul.f32 %v922, %v1027
        %v1035 = vmul.f32 %v926, %v1027
        %v1036 = vmul.f32 %v930, %v1027
        %v1037 = vmul.f32 %v934, %v1027
        %v1038 = vmul.f32 %v938, %v1027
        %v1039 = vmul.f32 %v942, %v1027
        %v1040 = vmul.f32 %v946, %v1027
        %v1041 = vmul.f32 %v950, %v1027
        %v1042 = vmul.f32 %v954, %v1027
        %v1043 = vmul.f32 %v958, %v1027
        %v1044 = vmul.f32 %v962, %v1027
        %v1045 = vmul.f32 %v966, %v1027
        %v1046 = vmul.f32 %v970, %v1027
        %v1047 = vmul.f32 %v974, %v1027
        %v1048 = vmul.f32 %v978, %v1027
        %v1049 = vmul.f32 %v982, %v1027
        %v1050 = vmul.f32 %v986, %v1027
        %v1051 = vmul.f32 %v990, %v1027
        %v1052 = vmul.f32 %v994, %v1027
        %v1053 = vmul.f32 %v998, %v1027
        %v1054 = vmul.f32 %v1002, %v1027
        %v1055 = vmul.f32 %v1006, %v1027
        %v1056 = vmul.f32 %v1010, %v1027
        %v1057 = vmul.f32 %v1014, %v1027
        %v1058 = vmul.f32 %v1018, %v1027
        %v1059 = vmul.f32 %v1022, %v1027
        %v1060 = vadd.f32 %v864, %v1028
        %v1061 = vadd.f32 %v865, %v1029
        %v1062 = vadd.f32 %v866, %v1030
        %v1063 = vadd.f32 %v867, %v1031
        %v1064 = vadd.f32 %v868, %v1032
        %v1065 = vadd.f32 %v869, %v1033
        %v1066 = vadd.f32 %v870, %v1034
        %v1067 = vadd.f32 %v871, %v1035
        %v1068 = vadd.f32 %v872, %v1036
        %v1069 = vadd.f32 %v873, %v1037
        %v1070 = vadd.f32 %v874, %v1038
        %v1071 = vadd.f32 %v875, %v1039
        %v1072 = vadd.f32 %v876, %v1040
        %v1073 = vadd.f32 %v877, %v1041
        %v1074 = vadd.f32 %v878, %v1042
        %v1075 = vadd.f32 %v879, %v1043
        %v1076 = vadd.f32 %v880, %v1044
        %v1077 = vadd.f32 %v881, %v1045
        %v1078 = vadd.f32 %v882, %v1046
        %v1079 = vadd.f32 %v883, %v1047
        %v1080 = vadd.f32 %v884, %v1048
        %v1081 = vadd.f32 %v885, %v1049
        %v1082 = vadd.f32 %v886, %v1050
        %v1083 = vadd.f32 %v887, %v1051
        %v1084 = vadd.f32 %v888, %v1052
        %v1085 = vadd.f32 %v889, %v1053
        %v1086 = vadd.f32 %v890, %v1054
        %v1087 = vadd.f32 %v891, %v1055
        %v1088 = vadd.f32 %v892, %v1056
        %v1089 = vadd.f32 %v893, %v1057
        %v1090 = vadd.f32 %v894, %v1058
        %v1091 = vadd.f32 %v895, %v1059
        %v1093 = vlaneseq
        %v1094 = vshrl.u32 %v1093, 7
        %v1095 = vsub.s32 0, %v1094
        %v1096 = vrot.slane %v503, %v1095
        %v1098 = vadd.f32 %v1060, %v1096
        %v1099 = vadd.f32 %v1061, %v1096
        %v1100 = vadd.f32 %v1062, %v1096
        %v1101 = vadd.f32 %v1063, %v1096
        %v1102 = vadd.f32 %v1064, %v1096
        %v1103 = vadd.f32 %v1065, %v1096
        %v1104 = vadd.f32 %v1066, %v1096
        %v1105 = vadd.f32 %v1067, %v1096
        %v1106 = vadd.f32 %v1068, %v1096
        %v1107 = vadd.f32 %v1069, %v1096
        %v1108 = vadd.f32 %v1070, %v1096
        %v1109 = vadd.f32 %v1071, %v1096
        %v1110 = vadd.f32 %v1072, %v1096
        %v1111 = vadd.f32 %v1073, %v1096
        %v1112 = vadd.f32 %v1074, %v1096
        %v1113 = vadd.f32 %v1075, %v1096
        %v1114 = vadd.f32 %v1076, %v1096
        %v1115 = vadd.f32 %v1077, %v1096
        %v1116 = vadd.f32 %v1078, %v1096
        %v1117 = vadd.f32 %v1079, %v1096
        %v1118 = vadd.f32 %v1080, %v1096
        %v1119 = vadd.f32 %v1081, %v1096
        %v1120 = vadd.f32 %v1082, %v1096
        %v1121 = vadd.f32 %v1083, %v1096
        %v1122 = vadd.f32 %v1084, %v1096
        %v1123 = vadd.f32 %v1085, %v1096
        %v1124 = vadd.f32 %v1086, %v1096
        %v1125 = vadd.f32 %v1087, %v1096
        %v1126 = vadd.f32 %v1088, %v1096
        %v1127 = vadd.f32 %v1089, %v1096
        %v1128 = vadd.f32 %v1090, %v1096
        %v1129 = vadd.f32 %v1091, %v1096
        %v1130 = vunpack.c.l.bf16 %v406
        %v1131 = vunpack.c.l.bf16 %v407
        %v1132 = vunpack.c.l.bf16 %v408
        %v1133 = vunpack.c.l.bf16 %v409
        %v1134 = vunpack.c.l.bf16 %v410
        %v1135 = vunpack.c.l.bf16 %v411
        %v1136 = vunpack.c.l.bf16 %v412
        %v1137 = vunpack.c.l.bf16 %v413
        %v1138 = vunpack.c.l.bf16 %v414
        %v1139 = vunpack.c.l.bf16 %v415
        %v1140 = vunpack.c.l.bf16 %v416
        %v1141 = vunpack.c.l.bf16 %v417
        %v1142 = vunpack.c.l.bf16 %v418
        %v1143 = vunpack.c.l.bf16 %v419
        %v1144 = vunpack.c.l.bf16 %v420
        %v1145 = vunpack.c.l.bf16 %v421
        %v1146 = vunpack.c.l.bf16 %v422
        %v1147 = vunpack.c.l.bf16 %v423
        %v1148 = vunpack.c.l.bf16 %v424
        %v1149 = vunpack.c.l.bf16 %v425
        %v1150 = vunpack.c.l.bf16 %v426
        %v1151 = vunpack.c.l.bf16 %v427
        %v1152 = vunpack.c.l.bf16 %v428
        %v1153 = vunpack.c.l.bf16 %v429
        %v1154 = vunpack.c.l.bf16 %v430
        %v1155 = vunpack.c.l.bf16 %v431
        %v1156 = vunpack.c.l.bf16 %v432
        %v1157 = vunpack.c.l.bf16 %v433
        %v1158 = vunpack.c.l.bf16 %v434
        %v1159 = vunpack.c.l.bf16 %v435
        %v1160 = vunpack.c.l.bf16 %v436
        %v1161 = vunpack.c.l.bf16 %v437
        %v1162 = vadd.f32 %v1098, %v1130
        %v1163 = vadd.f32 %v1099, %v1131
        %v1164 = vadd.f32 %v1100, %v1132
        %v1165 = vadd.f32 %v1101, %v1133
        %v1166 = vadd.f32 %v1102, %v1134
        %v1167 = vadd.f32 %v1103, %v1135
        %v1168 = vadd.f32 %v1104, %v1136
        %v1169 = vadd.f32 %v1105, %v1137
        %v1170 = vadd.f32 %v1106, %v1138
        %v1171 = vadd.f32 %v1107, %v1139
        %v1172 = vadd.f32 %v1108, %v1140
        %v1173 = vadd.f32 %v1109, %v1141
        %v1174 = vadd.f32 %v1110, %v1142
        %v1175 = vadd.f32 %v1111, %v1143
        %v1176 = vadd.f32 %v1112, %v1144
        %v1177 = vadd.f32 %v1113, %v1145
        %v1178 = vadd.f32 %v1114, %v1146
        %v1179 = vadd.f32 %v1115, %v1147
        %v1180 = vadd.f32 %v1116, %v1148
        %v1181 = vadd.f32 %v1117, %v1149
        %v1182 = vadd.f32 %v1118, %v1150
        %v1183 = vadd.f32 %v1119, %v1151
        %v1184 = vadd.f32 %v1120, %v1152
        %v1185 = vadd.f32 %v1121, %v1153
        %v1186 = vadd.f32 %v1122, %v1154
        %v1187 = vadd.f32 %v1123, %v1155
        %v1188 = vadd.f32 %v1124, %v1156
        %v1189 = vadd.f32 %v1125, %v1157
        %v1190 = vadd.f32 %v1126, %v1158
        %v1191 = vadd.f32 %v1127, %v1159
        %v1192 = vadd.f32 %v1128, %v1160
        %v1193 = vadd.f32 %v1129, %v1161
        %v1194 = vmax.f32 %v1162, 0.0
        %v1195 = vmax.f32 %v1163, 0.0
        %v1196 = vmax.f32 %v1164, 0.0
        %v1197 = vmax.f32 %v1165, 0.0
        %v1198 = vmax.f32 %v1166, 0.0
        %v1199 = vmax.f32 %v1167, 0.0
        %v1200 = vmax.f32 %v1168, 0.0
        %v1201 = vmax.f32 %v1169, 0.0
        %v1202 = vmax.f32 %v1170, 0.0
        %v1203 = vmax.f32 %v1171, 0.0
        %v1204 = vmax.f32 %v1172, 0.0
        %v1205 = vmax.f32 %v1173, 0.0
        %v1206 = vmax.f32 %v1174, 0.0
        %v1207 = vmax.f32 %v1175, 0.0
        %v1208 = vmax.f32 %v1176, 0.0
        %v1209 = vmax.f32 %v1177, 0.0
        %v1210 = vmax.f32 %v1178, 0.0
        %v1211 = vmax.f32 %v1179, 0.0
        %v1212 = vmax.f32 %v1180, 0.0
        %v1213 = vmax.f32 %v1181, 0.0
        %v1214 = vmax.f32 %v1182, 0.0
        %v1215 = vmax.f32 %v1183, 0.0
        %v1216 = vmax.f32 %v1184, 0.0
        %v1217 = vmax.f32 %v1185, 0.0
        %v1218 = vmax.f32 %v1186, 0.0
        %v1219 = vmax.f32 %v1187, 0.0
        %v1220 = vmax.f32 %v1188, 0.0
        %v1221 = vmax.f32 %v1189, 0.0
        %v1222 = vmax.f32 %v1190, 0.0
        %v1223 = vmax.f32 %v1191, 0.0
        %v1224 = vmax.f32 %v1192, 0.0
        %v1225 = vmax.f32 %v1193, 0.0
        %v1226 = vld [vmem:[#allocation11] sm:$0xf]
        %v1227 = vld [vmem:[#allocation11 + $0x4] sm:$0xf]
        %v1228 = vld [vmem:[#allocation12] sm:$0x1]
        %v1229 = vpack.c.bf16 %v1195, %v1194
        %v1230 = vpack.c.bf16 %v1197, %v1196
        %v1231 = vpack.c.bf16 %v1199, %v1198
        %v1232 = vpack.c.bf16 %v1201, %v1200
        %v1233 = vpack.c.bf16 %v1203, %v1202
        %v1234 = vpack.c.bf16 %v1205, %v1204
        %v1235 = vpack.c.bf16 %v1207, %v1206
        %v1236 = vpack.c.bf16 %v1209, %v1208
        %v1237 = vpack.c.bf16 %v1211, %v1210
        %v1238 = vpack.c.bf16 %v1213, %v1212
        %v1239 = vpack.c.bf16 %v1215, %v1214
        %v1240 = vpack.c.bf16 %v1217, %v1216
        %v1241 = vpack.c.bf16 %v1219, %v1218
        %v1242 = vpack.c.bf16 %v1221, %v1220
        %v1243 = vpack.c.bf16 %v1223, %v1222
        %v1244 = vpack.c.bf16 %v1225, %v1224
        %v1246 = vlaneseq
        %v1247 = vshrl.u32 %v1246, 7
        %v1248 = vsub.s32 0, %v1247
        %v1249 = vrot.slane %v1228, %v1248
        %v1253 = vunpack.c.l.b16 %v1226
        %v1254 = vunpack.c.l.b16 %v1227
        %v1255 = vpack.c.b16 %v1254, %v1253
        %vm1257 = vcmask 130048
        %v1259 = vsel %vm1257, %v1229, 0
        %v1262 = vsel %vm1257, %v1230, 0
        %v1265 = vsel %vm1257, %v1231, 0
        %v1268 = vsel %vm1257, %v1232, 0
        %v1271 = vsel %vm1257, %v1233, 0
        %v1274 = vsel %vm1257, %v1234, 0
        %v1277 = vsel %vm1257, %v1235, 0
        %v1280 = vsel %vm1257, %v1236, 0
        %v1283 = vsel %vm1257, %v1237, 0
        %v1286 = vsel %vm1257, %v1238, 0
        %v1289 = vsel %vm1257, %v1239, 0
        %v1292 = vsel %vm1257, %v1240, 0
        %v1295 = vsel %vm1257, %v1241, 0
        %v1298 = vsel %vm1257, %v1242, 0
        %v1301 = vsel %vm1257, %v1243, 0
        %v1304 = vsel %vm1257, %v1244, 0
        %1306 = vmatprep.subr.bf16.mxu0 0
        %1307 = vmatpush1.bf16.msra.mxu0 %v1255
        %1308 = vmatprep.subr.bf16.mxu0 0
        %1309 = vmatpush1.bf16.msra.mxu0 0
        %1310 = vmatprep.subr.bf16.mxu0 0
        %1311 = vmatpush1.bf16.msra.mxu0 0
        %1312 = vmatprep.subr.bf16.mxu0 0
        %1313 = vmatpush1.bf16.msra.mxu0 0
        %1314 = vmatprep.subr.bf16.mxu0 0
        %1315 = vmatpush1.bf16.msra.mxu0 0
        %1316 = vmatprep.subr.bf16.mxu0 0
        %1317 = vmatpush1.bf16.msra.mxu0 0
        %1318 = vmatprep.subr.bf16.mxu0 0
        %1319 = vmatpush1.bf16.msra.mxu0 0
        %1320 = vmatprep.subr.bf16.mxu0 0
        %1321 = vmatpush1.bf16.msra.mxu0 0
        %1322 = vmatprep.subr.bf16.mxu0 0
        %1323 = vmatpush1.bf16.msra.mxu0 0
        %1324 = vmatprep.subr.bf16.mxu0 0
        %1325 = vmatpush1.bf16.msra.mxu0 0
        %1326 = vmatprep.subr.bf16.mxu0 0
        %1327 = vmatpush1.bf16.msra.mxu0 0
        %1328 = vmatprep.subr.bf16.mxu0 0
        %1329 = vmatpush1.bf16.msra.mxu0 0
        %1330 = vmatprep.subr.bf16.mxu0 0
        %1331 = vmatpush1.bf16.msra.mxu0 0
        %1332 = vmatprep.subr.bf16.mxu0 0
        %1333 = vmatpush1.bf16.msra.mxu0 0
        %1334 = vmatprep.subr.bf16.mxu0 0
        %1335 = vmatpush1.bf16.msra.mxu0 0
        %1336 = vmatprep.subr.bf16.mxu0 0
        %1337 = vmatpush1.bf16.msra.mxu0 0
        %1338 = vmatprep.mubr.bf16.mxu0 0
        %1339 = vmatmul.mubr.bf16.gmra.mrb[0].mxu0 %v1259
        %v1340 = vpop.f32.mrb[0].mxu0
        %v1341 = vadd.f32 %v1249, %v1340
        %v1342 = vpop.f32.mrb[0].mxu0
        %v1343 = vpop.f32.mrb[0].mxu0
        %v1344 = vadd.f32 %v1249, %v1343
        %v1345 = vpop.f32.mrb[0].mxu0
        %1346 = vmatprep.mubr.bf16.mxu0 0
        %1347 = vmatmul.mubr.bf16.gmra.mrb[0].mxu0 %v1262
        %v1348 = vpop.f32.mrb[0].mxu0
        %v1349 = vadd.f32 %v1249, %v1348
        %v1350 = vpop.f32.mrb[0].mxu0
        %v1351 = vpop.f32.mrb[0].mxu0
        %v1352 = vadd.f32 %v1249, %v1351
        %v1353 = vpop.f32.mrb[0].mxu0
        %1354 = vmatprep.mubr.bf16.mxu0 0
        %1355 = vmatmul.mubr.bf16.gmra.mrb[0].mxu0 %v1265
        %v1356 = vpop.f32.mrb[0].mxu0
        %v1357 = vadd.f32 %v1249, %v1356
        %v1358 = vpop.f32.mrb[0].mxu0
        %v1359 = vpop.f32.mrb[0].mxu0
        %v1360 = vadd.f32 %v1249, %v1359
        %v1361 = vpop.f32.mrb[0].mxu0
        %1362 = vmatprep.mubr.bf16.mxu0 0
        %1363 = vmatmul.mubr.bf16.gmra.mrb[0].mxu0 %v1268
        %v1364 = vpop.f32.mrb[0].mxu0
        %v1365 = vadd.f32 %v1249, %v1364
        %v1366 = vpop.f32.mrb[0].mxu0
        %v1367 = vpop.f32.mrb[0].mxu0
        %v1368 = vadd.f32 %v1249, %v1367
        %v1369 = vpop.f32.mrb[0].mxu0
        %1370 = vmatprep.mubr.bf16.mxu0 0
        %1371 = vmatmul.mubr.bf16.gmra.mrb[0].mxu0 %v1271
        %v1372 = vpop.f32.mrb[0].mxu0
        %v1373 = vadd.f32 %v1249, %v1372
        %v1374 = vpop.f32.mrb[0].mxu0
        %v1375 = vpop.f32.mrb[0].mxu0
        %v1376 = vadd.f32 %v1249, %v1375
        %v1377 = vpop.f32.mrb[0].mxu0
        %1378 = vmatprep.mubr.bf16.mxu0 0
        %1379 = vmatmul.mubr.bf16.gmra.mrb[0].mxu0 %v1274
        %v1380 = vpop.f32.mrb[0].mxu0
        %v1381 = vadd.f32 %v1249, %v1380
        %v1382 = vpop.f32.mrb[0].mxu0
        %v1383 = vpop.f32.mrb[0].mxu0
        %v1384 = vadd.f32 %v1249, %v1383
        %v1385 = vpop.f32.mrb[0].mxu0
        %1386 = vmatprep.mubr.bf16.mxu0 0
        %1387 = vmatmul.mubr.bf16.gmra.mrb[0].mxu0 %v1277
        %v1388 = vpop.f32.mrb[0].mxu0
        %v1389 = vadd.f32 %v1249, %v1388
        %v1390 = vpop.f32.mrb[0].mxu0
        %v1391 = vpop.f32.mrb[0].mxu0
        %v1392 = vadd.f32 %v1249, %v1391
        %v1393 = vpop.f32.mrb[0].mxu0
        %1394 = vmatprep.mubr.bf16.mxu0 0
        %1395 = vmatmul.mubr.bf16.gmra.mrb[0].mxu0 %v1280
        %v1396 = vpop.f32.mrb[0].mxu0
        %v1397 = vadd.f32 %v1249, %v1396
        %v1398 = vpop.f32.mrb[0].mxu0
        %v1399 = vpop.f32.mrb[0].mxu0
        %v1400 = vadd.f32 %v1249, %v1399
        %v1401 = vpop.f32.mrb[0].mxu0
        %1402 = vmatprep.mubr.bf16.mxu0 0
        %1403 = vmatmul.mubr.bf16.gmra.mrb[0].mxu0 %v1283
        %v1404 = vpop.f32.mrb[0].mxu0
        %v1405 = vadd.f32 %v1249, %v1404
        %v1406 = vpop.f32.mrb[0].mxu0
        %v1407 = vpop.f32.mrb[0].mxu0
        %v1408 = vadd.f32 %v1249, %v1407
        %v1409 = vpop.f32.mrb[0].mxu0
        %1410 = vmatprep.mubr.bf16.mxu0 0
        %1411 = vmatmul.mubr.bf16.gmra.mrb[0].mxu0 %v1286
        %v1412 = vpop.f32.mrb[0].mxu0
        %v1413 = vadd.f32 %v1249, %v1412
        %v1414 = vpop.f32.mrb[0].mxu0
        %v1415 = vpop.f32.mrb[0].mxu0
        %v1416 = vadd.f32 %v1249, %v1415
        %v1417 = vpop.f32.mrb[0].mxu0
        %1418 = vmatprep.mubr.bf16.mxu0 0
        %1419 = vmatmul.mubr.bf16.gmra.mrb[0].mxu0 %v1289
        %v1420 = vpop.f32.mrb[0].mxu0
        %v1421 = vadd.f32 %v1249, %v1420
        %v1422 = vpop.f32.mrb[0].mxu0
        %v1423 = vpop.f32.mrb[0].mxu0
        %v1424 = vadd.f32 %v1249, %v1423
        %v1425 = vpop.f32.mrb[0].mxu0
        %1426 = vmatprep.mubr.bf16.mxu0 0
        %1427 = vmatmul.mubr.bf16.gmra.mrb[0].mxu0 %v1292
        %v1428 = vpop.f32.mrb[0].mxu0
        %v1429 = vadd.f32 %v1249, %v1428
        %v1430 = vpop.f32.mrb[0].mxu0
        %v1431 = vpop.f32.mrb[0].mxu0
        %v1432 = vadd.f32 %v1249, %v1431
        %v1433 = vpop.f32.mrb[0].mxu0
        %1434 = vmatprep.mubr.bf16.mxu0 0
        %1435 = vmatmul.mubr.bf16.gmra.mrb[0].mxu0 %v1295
        %v1436 = vpop.f32.mrb[0].mxu0
        %v1437 = vadd.f32 %v1249, %v1436
        %v1438 = vpop.f32.mrb[0].mxu0
        %v1439 = vpop.f32.mrb[0].mxu0
        %v1440 = vadd.f32 %v1249, %v1439
        %v1441 = vpop.f32.mrb[0].mxu0
        %1442 = vmatprep.mubr.bf16.mxu0 0
        %1443 = vmatmul.mubr.bf16.gmra.mrb[0].mxu0 %v1298
        %v1444 = vpop.f32.mrb[0].mxu0
        %v1445 = vadd.f32 %v1249, %v1444
        %v1446 = vpop.f32.mrb[0].mxu0
        %v1447 = vpop.f32.mrb[0].mxu0
        %v1448 = vadd.f32 %v1249, %v1447
        %v1449 = vpop.f32.mrb[0].mxu0
        %1450 = vmatprep.mubr.bf16.mxu0 0
        %1451 = vmatmul.mubr.bf16.gmra.mrb[0].mxu0 %v1301
        %v1452 = vpop.f32.mrb[0].mxu0
        %v1453 = vadd.f32 %v1249, %v1452
        %v1454 = vpop.f32.mrb[0].mxu0
        %v1455 = vpop.f32.mrb[0].mxu0
        %v1456 = vadd.f32 %v1249, %v1455
        %v1457 = vpop.f32.mrb[0].mxu0
        %1458 = vmatprep.mubr.bf16.mxu0 0
        %1459 = vmatmul.mubr.bf16.gmra.mrb[0].mxu0 %v1304
        %v1460 = vpop.f32.mrb[0].mxu0
        %v1461 = vadd.f32 %v1249, %v1460
        %v1462 = vpop.f32.mrb[0].mxu0
        %v1463 = vpop.f32.mrb[0].mxu0
        %v1464 = vadd.f32 %v1249, %v1463
        %v1465 = vpop.f32.mrb[0].mxu0
        %1466 = vdwg.mxu0
        %v1467 = vmax.f32 %v1341, 0.0
        %v1468 = vmax.f32 %v1344, 0.0
        %v1469 = vmax.f32 %v1349, 0.0
        %v1470 = vmax.f32 %v1352, 0.0
        %v1471 = vmax.f32 %v1357, 0.0
        %v1472 = vmax.f32 %v1360, 0.0
        %v1473 = vmax.f32 %v1365, 0.0
        %v1474 = vmax.f32 %v1368, 0.0
        %v1475 = vmax.f32 %v1373, 0.0
        %v1476 = vmax.f32 %v1376, 0.0
        %v1477 = vmax.f32 %v1381, 0.0
        %v1478 = vmax.f32 %v1384, 0.0
        %v1479 = vmax.f32 %v1389, 0.0
        %v1480 = vmax.f32 %v1392, 0.0
        %v1481 = vmax.f32 %v1397, 0.0
        %v1482 = vmax.f32 %v1400, 0.0
        %v1483 = vmax.f32 %v1405, 0.0
        %v1484 = vmax.f32 %v1408, 0.0
        %v1485 = vmax.f32 %v1413, 0.0
        %v1486 = vmax.f32 %v1416, 0.0
        %v1487 = vmax.f32 %v1421, 0.0
        %v1488 = vmax.f32 %v1424, 0.0
        %v1489 = vmax.f32 %v1429, 0.0
        %v1490 = vmax.f32 %v1432, 0.0
        %v1491 = vmax.f32 %v1437, 0.0
        %v1492 = vmax.f32 %v1440, 0.0
        %v1493 = vmax.f32 %v1445, 0.0
        %v1494 = vmax.f32 %v1448, 0.0
        %v1495 = vmax.f32 %v1453, 0.0
        %v1496 = vmax.f32 %v1456, 0.0
        %v1497 = vmax.f32 %v1461, 0.0
        %v1498 = vmax.f32 %v1464, 0.0
        %v1499 = vmax.f32 %v1467, %v1468
        %v1500 = vrot.slane %v1499, 4
        %v1501 = vmax.f32 %v1499, %v1500
        %v1502 = vrot.slane %v1501, 2
        %v1503 = vmax.f32 %v1501, %v1502
        %v1504 = vrot.slane %v1503, 1
        %v1505 = vmax.f32 %v1503, %v1504
        %v1506 = vmax.f32 %v1469, %v1470
        %v1507 = vrot.slane %v1506, 4
        %v1508 = vmax.f32 %v1506, %v1507
        %v1509 = vrot.slane %v1508, 2
        %v1510 = vmax.f32 %v1508, %v1509
        %v1511 = vrot.slane %v1510, 1
        %v1512 = vmax.f32 %v1510, %v1511
        %v1513 = vmax.f32 %v1471, %v1472
        %v1514 = vrot.slane %v1513, 4
        %v1515 = vmax.f32 %v1513, %v1514
        %v1516 = vrot.slane %v1515, 2
        %v1517 = vmax.f32 %v1515, %v1516
        %v1518 = vrot.slane %v1517, 1
        %v1519 = vmax.f32 %v1517, %v1518
        %v1520 = vmax.f32 %v1473, %v1474
        %v1521 = vrot.slane %v1520, 4
        %v1522 = vmax.f32 %v1520, %v1521
        %v1523 = vrot.slane %v1522, 2
        %v1524 = vmax.f32 %v1522, %v1523
        %v1525 = vrot.slane %v1524, 1
        %v1526 = vmax.f32 %v1524, %v1525
        %v1527 = vmax.f32 %v1475, %v1476
        %v1528 = vrot.slane %v1527, 4
        %v1529 = vmax.f32 %v1527, %v1528
        %v1530 = vrot.slane %v1529, 2
        %v1531 = vmax.f32 %v1529, %v1530
        %v1532 = vrot.slane %v1531, 1
        %v1533 = vmax.f32 %v1531, %v1532
        %v1534 = vmax.f32 %v1477, %v1478
        %v1535 = vrot.slane %v1534, 4
        %v1536 = vmax.f32 %v1534, %v1535
        %v1537 = vrot.slane %v1536, 2
        %v1538 = vmax.f32 %v1536, %v1537
        %v1539 = vrot.slane %v1538, 1
        %v1540 = vmax.f32 %v1538, %v1539
        %v1541 = vmax.f32 %v1479, %v1480
        %v1542 = vrot.slane %v1541, 4
        %v1543 = vmax.f32 %v1541, %v1542
        %v1544 = vrot.slane %v1543, 2
        %v1545 = vmax.f32 %v1543, %v1544
        %v1546 = vrot.slane %v1545, 1
        %v1547 = vmax.f32 %v1545, %v1546
        %v1548 = vmax.f32 %v1481, %v1482
        %v1549 = vrot.slane %v1548, 4
        %v1550 = vmax.f32 %v1548, %v1549
        %v1551 = vrot.slane %v1550, 2
        %v1552 = vmax.f32 %v1550, %v1551
        %v1553 = vrot.slane %v1552, 1
        %v1554 = vmax.f32 %v1552, %v1553
        %v1555 = vmax.f32 %v1483, %v1484
        %v1556 = vrot.slane %v1555, 4
        %v1557 = vmax.f32 %v1555, %v1556
        %v1558 = vrot.slane %v1557, 2
        %v1559 = vmax.f32 %v1557, %v1558
        %v1560 = vrot.slane %v1559, 1
        %v1561 = vmax.f32 %v1559, %v1560
        %v1562 = vmax.f32 %v1485, %v1486
        %v1563 = vrot.slane %v1562, 4
        %v1564 = vmax.f32 %v1562, %v1563
        %v1565 = vrot.slane %v1564, 2
        %v1566 = vmax.f32 %v1564, %v1565
        %v1567 = vrot.slane %v1566, 1
        %v1568 = vmax.f32 %v1566, %v1567
        %v1569 = vmax.f32 %v1487, %v1488
        %v1570 = vrot.slane %v1569, 4
        %v1571 = vmax.f32 %v1569, %v1570
        %v1572 = vrot.slane %v1571, 2
        %v1573 = vmax.f32 %v1571, %v1572
        %v1574 = vrot.slane %v1573, 1
        %v1575 = vmax.f32 %v1573, %v1574
        %v1576 = vmax.f32 %v1489, %v1490
        %v1577 = vrot.slane %v1576, 4
        %v1578 = vmax.f32 %v1576, %v1577
        %v1579 = vrot.slane %v1578, 2
        %v1580 = vmax.f32 %v1578, %v1579
        %v1581 = vrot.slane %v1580, 1
        %v1582 = vmax.f32 %v1580, %v1581
        %v1583 = vmax.f32 %v1491, %v1492
        %v1584 = vrot.slane %v1583, 4
        %v1585 = vmax.f32 %v1583, %v1584
        %v1586 = vrot.slane %v1585, 2
        %v1587 = vmax.f32 %v1585, %v1586
        %v1588 = vrot.slane %v1587, 1
        %v1589 = vmax.f32 %v1587, %v1588
        %v1590 = vmax.f32 %v1493, %v1494
        %v1591 = vrot.slane %v1590, 4
        %v1592 = vmax.f32 %v1590, %v1591
        %v1593 = vrot.slane %v1592, 2
        %v1594 = vmax.f32 %v1592, %v1593
        %v1595 = vrot.slane %v1594, 1
        %v1596 = vmax.f32 %v1594, %v1595
        %v1597 = vmax.f32 %v1495, %v1496
        %v1598 = vrot.slane %v1597, 4
        %v1599 = vmax.f32 %v1597, %v1598
        %v1600 = vrot.slane %v1599, 2
        %v1601 = vmax.f32 %v1599, %v1600
        %v1602 = vrot.slane %v1601, 1
        %v1603 = vmax.f32 %v1601, %v1602
        %v1604 = vmax.f32 %v1497, %v1498
        %v1605 = vrot.slane %v1604, 4
        %v1606 = vmax.f32 %v1604, %v1605
        %v1607 = vrot.slane %v1606, 2
        %v1608 = vmax.f32 %v1606, %v1607
        %v1609 = vrot.slane %v1608, 1
        %v1610 = vmax.f32 %v1608, %v1609
        %p1611 = scmp.eq.s32.totalorder %s35, 0
        // Predicated region
        $region69: #{pointnet_sa_msg_forward.3} parent=43 // pred_check
          %p1612 = pneg %p1611
        $region70: #{pointnet_sa_msg_forward.3} parent=43 // pred_check_branch
          %1614 = sbr.rel (%p1612) target = $region72
        $region71: #{pointnet_sa_msg_forward.3} parent=43 // pred_region
          %1615 = vst [vmem:[#allocation2] sm:$0xff] -inf
          %1616 = vst [vmem:[#allocation2 + $0x8] sm:$0xff] -inf
        $region72: #{pointnet_sa_msg_forward.3} parent=43 // pred_fallthru
          _
        %v1617 = vld [vmem:[#allocation2] sm:$0xff]
        %v1618 = vld [vmem:[#allocation2 + $0x8] sm:$0xff]
        %vm1635 = vcmask 1041409
        %v1636 = vsel %vm1635, %v1512, %v1505
        %vm1637 = vcmask 1042434
        %v1638 = vsel %vm1637, %v1519, %v1636
        %vm1639 = vcmask 1043459
        %v1640 = vsel %vm1639, %v1526, %v1638
        %vm1641 = vcmask 1044484
        %v1642 = vsel %vm1641, %v1533, %v1640
        %vm1643 = vcmask 1045509
        %v1644 = vsel %vm1643, %v1540, %v1642
        %vm1645 = vcmask 1046534
        %v1646 = vsel %vm1645, %v1547, %v1644
        %vm1647 = vcmask 1047559
        %v1648 = vsel %vm1647, %v1554, %v1646
        %v1649 = vsel %vm1635, %v1568, %v1561
        %v1650 = vsel %vm1637, %v1575, %v1649
        %v1651 = vsel %vm1639, %v1582, %v1650
        %v1652 = vsel %vm1641, %v1589, %v1651
        %v1653 = vsel %vm1643, %v1596, %v1652
        %v1654 = vsel %vm1645, %v1603, %v1653
        %v1655 = vsel %vm1647, %v1610, %v1654
        %v1658 = vmax.f32 %v1617, %v1648
        %v1659 = vmax.f32 %v1618, %v1655
        %1660 = vst [vmem:[#allocation2] sm:$0xff] %v1658
        %1661 = vst [vmem:[#allocation2 + $0x8] sm:$0xff] %v1659
        // Predicated region
        $region73: #{pointnet_sa_msg_forward.3} parent=43 // pred_check
          %p1662 = pneg %p1611
        $region74: #{pointnet_sa_msg_forward.3} parent=43 // pred_check_branch
          %1664 = sbr.rel (%p1662) target = $region76
        $region75: #{pointnet_sa_msg_forward.3} parent=43 // pred_region
          %v1665 = vld [vmem:[#allocation2] sm:$0xff]
          %v1666 = vld [vmem:[#allocation2 + $0x8] sm:$0xff]
          %1667 = vxpose.xlu0.b32.start [1/16] %v1665, 128
          %1668 = vxpose.xlu0.b32.cont [2/16] %v1666, 128
          %1669 = vxpose.xlu0.b32.cont [3/16] 0.0, 128
          %1670 = vxpose.xlu0.b32.cont [4/16] 0.0, 128
          %1671 = vxpose.xlu0.b32.cont [5/16] 0.0, 128
          %1672 = vxpose.xlu0.b32.cont [6/16] 0.0, 128
          %1673 = vxpose.xlu0.b32.cont [7/16] 0.0, 128
          %1674 = vxpose.xlu0.b32.cont [8/16] 0.0, 128
          %1675 = vxpose.xlu0.b32.cont [9/16] 0.0, 128
          %1676 = vxpose.xlu0.b32.cont [10/16] 0.0, 128
          %1677 = vxpose.xlu0.b32.cont [11/16] 0.0, 128
          %1678 = vxpose.xlu0.b32.cont [12/16] 0.0, 128
          %1679 = vxpose.xlu0.b32.cont [13/16] 0.0, 128
          %1680 = vxpose.xlu0.b32.cont [14/16] 0.0, 128
          %1681 = vxpose.xlu0.b32.cont [15/16] 0.0, 128
          %1682 = vxpose.xlu0.b32.end [16/16] 0.0, 128
          %v1683 = vpop.trf.xlu0
          %v1684 = vpop.trf.xlu0
          %v1685 = vpop.trf.xlu0
          %v1686 = vpop.trf.xlu0
          %v1687 = vpop.trf.xlu0
          %v1688 = vpop.trf.xlu0
          %v1689 = vpop.trf.xlu0
          %v1690 = vpop.trf.xlu0
          %v1691 = vpop.trf.xlu0
          %v1692 = vpop.trf.xlu0
          %v1693 = vpop.trf.xlu0
          %v1694 = vpop.trf.xlu0
          %v1695 = vpop.trf.xlu0
          %v1696 = vpop.trf.xlu0
          %v1697 = vpop.trf.xlu0
          %v1698 = vpop.trf.xlu0
          %v1699 = vpack.c.bf16 %v1684, %v1683
          %v1700 = vpack.c.bf16 %v1686, %v1685
          %v1701 = vpack.c.bf16 %v1688, %v1687
          %v1702 = vpack.c.bf16 %v1690, %v1689
          %v1703 = vpack.c.bf16 %v1692, %v1691
          %v1704 = vpack.c.bf16 %v1694, %v1693
          %v1705 = vpack.c.bf16 %v1696, %v1695
          %v1706 = vpack.c.bf16 %v1698, %v1697
          %v1715 = vunpack.c.l.b16 %v1699
          %v1716 = vunpack.c.h.b16 %v1699
          %v1717 = vunpack.c.l.b16 %v1700
          %v1718 = vunpack.c.h.b16 %v1700
          %v1719 = vunpack.c.l.b16 %v1701
          %v1720 = vunpack.c.h.b16 %v1701
          %v1721 = vunpack.c.l.b16 %v1702
          %v1722 = vunpack.c.h.b16 %v1702
          %v1723 = vunpack.c.l.b16 %v1703
          %v1724 = vunpack.c.h.b16 %v1703
          %v1725 = vunpack.c.l.b16 %v1704
          %v1726 = vunpack.c.h.b16 %v1704
          %v1727 = vunpack.c.l.b16 %v1705
          %v1728 = vunpack.c.h.b16 %v1705
          %v1729 = vunpack.c.l.b16 %v1706
          %v1730 = vunpack.c.h.b16 %v1706
          %v1731 = vpack.c.b16 %v1715, %v1715
          %v1732 = vpack.c.b16 %v1716, %v1716
          %v1733 = vpack.c.b16 %v1717, %v1717
          %v1734 = vpack.c.b16 %v1718, %v1718
          %v1735 = vpack.c.b16 %v1719, %v1719
          %v1736 = vpack.c.b16 %v1720, %v1720
          %v1737 = vpack.c.b16 %v1721, %v1721
          %v1738 = vpack.c.b16 %v1722, %v1722
          %v1739 = vpack.c.b16 %v1723, %v1723
          %v1740 = vpack.c.b16 %v1724, %v1724
          %v1741 = vpack.c.b16 %v1725, %v1725
          %v1742 = vpack.c.b16 %v1726, %v1726
          %v1743 = vpack.c.b16 %v1727, %v1727
          %v1744 = vpack.c.b16 %v1728, %v1728
          %v1745 = vpack.c.b16 %v1729, %v1729
          %v1746 = vpack.c.b16 %v1730, %v1730
          %vm1763 = vcmask 125952
          %1764 = vst.msk [vmem:[%s400] sm:$0xf] %vm1763, %v1731
          %1765 = vst.msk [vmem:[%s400 + $0x4] sm:$0xf] %vm1763, %v1732
          %1766 = vst.msk [vmem:[%s400 + $0x8] sm:$0xf] %vm1763, %v1733
          %1767 = vst.msk [vmem:[%s400 + $0xc] sm:$0xf] %vm1763, %v1734
          %1768 = vst.msk [vmem:[%s400 + $0x10] sm:$0xf] %vm1763, %v1735
          %1769 = vst.msk [vmem:[%s400 + $0x14] sm:$0xf] %vm1763, %v1736
          %1770 = vst.msk [vmem:[%s400 + $0x18] sm:$0xf] %vm1763, %v1737
          %1771 = vst.msk [vmem:[%s400 + $0x1c] sm:$0xf] %vm1763, %v1738
          %1772 = vst.msk [vmem:[%s400 + $0x20] sm:$0xf] %vm1763, %v1739
          %1773 = vst.msk [vmem:[%s400 + $0x24] sm:$0xf] %vm1763, %v1740
          %1774 = vst.msk [vmem:[%s400 + $0x28] sm:$0xf] %vm1763, %v1741
          %1775 = vst.msk [vmem:[%s400 + $0x2c] sm:$0xf] %vm1763, %v1742
          %1776 = vst.msk [vmem:[%s400 + $0x30] sm:$0xf] %vm1763, %v1743
          %1777 = vst.msk [vmem:[%s400 + $0x34] sm:$0xf] %vm1763, %v1744
          %1778 = vst.msk [vmem:[%s400 + $0x38] sm:$0xf] %vm1763, %v1745
          %1779 = vst.msk [vmem:[%s400 + $0x3c] sm:$0xf] %vm1763, %v1746
        $region76: #{pointnet_sa_msg_forward.3} parent=43 // pred_fallthru
          _
        %s1780 = sand.u32 %s201, 1
        %s1781 = scalar_lea.sflag [#allocation5], %s1780
        %s1782 = sand.u32 %s201, 1
        %s1783 = smul.addr %s1782, 64
        %s1784 = scalar_lea.vmem [#allocation14], %s1783
        // Predicated region
        $region77: #{pointnet_sa_msg_forward.3} parent=43 // pred_check
          %p1785 = pneg %p211
        $region78: #{pointnet_sa_msg_forward.3} parent=43 // pred_check_branch
          %1787 = sbr.rel (%p1785) target = $region80
        $region79: #{pointnet_sa_msg_forward.3} parent=43 // pred_region
          %s1789 = ssub.s32 1024, 1024
          %1790 = vsyncadd %s1781, %s1789
          %s1791 = smul.addr %s33, 16
          %s1792 = sadd.s32 %s34, %s1791
          %s1793 = smul.addr %s1792, 64
          %s1794 = scalar_lea.hbm %s6, %s1793
          %s1795 = sshll.u32 %s1784, 4
          %s1796 = int_to_ptr.vmem [resolvable:$true] %s1795
          %1801 = dma.vmem_to_hbm [thread:$0]  %s1796, 1024, %s1794, %s1781, 64, 64, 4
        $region80: #{pointnet_sa_msg_forward.3} parent=43 // pred_fallthru
          _
      $region44: #{pointnet_sa_msg_forward.3} parent=5 // pred_fallthru
        _
      %p1802 = scmp.le.s32.totalorder 2, %s23
      // Predicated region
      $region81: #{pointnet_sa_msg_forward.3} parent=5 // pred_check
        %p1803 = pneg %p1802
      $region82: #{pointnet_sa_msg_forward.3} parent=5 // pred_check_branch
        %1805 = sbr.rel (%p1803) target = $region84
      $region83: #{pointnet_sa_msg_forward.3} parent=5 // pred_region
        %s1806 = ssub.s32 %s23, 2
        // Predicated region
        $region85: #{pointnet_sa_msg_forward.3} parent=83 // pred_check
          %p1807 = pneg %p217
        $region86: #{pointnet_sa_msg_forward.3} parent=83 // pred_check_branch
          %1809 = sbr.rel (%p1807) target = $region88
        $region87: #{pointnet_sa_msg_forward.3} parent=83 // pred_region
          %s1810 = sand.u32 %s202, 1
          %s1811 = scalar_lea.sflag [#allocation5], %s1810
          %s1812 = sand.u32 %s202, 1
          %s1813 = smul.addr %s1812, 64
          %s1814 = scalar_lea.vmem [#allocation14], %s1813
          %1815 = dma.done %s1811, 1024
        $region88: #{pointnet_sa_msg_forward.3} parent=83 // pred_fallthru
          _
      $region84: #{pointnet_sa_msg_forward.3} parent=5 // pred_fallthru
        _
    $region6: #{pointnet_sa_msg_forward.3} parent=1 // loop_footer
      %s27 = sadd.s32 1, %s23
    $region7: #{pointnet_sa_msg_forward.3} parent=1 // loop_footer_branch
      %22 = sbr.rel target = $region3
    $region8: #{pointnet_sa_msg_forward.3} parent=1 // loop_exit
      _
    %1816 = vsyncpa [#allocation4], 1
    %s1817 = scalar_lea.sflag [#allocation4], 1
    %1818 = vsyncpa %s1817, 1
    %1819 = vsyncpa [#allocation7], 1
    %s1820 = scalar_lea.sflag [#allocation7], 1
    %1821 = vsyncpa %s1820, 1
    %1822 = vsyncpa [#allocation10], 1
    %1823 = vsyncpa [#allocation13], 1
    %1824 = vsyncpa [#allocation5], 1
    %s1825 = scalar_lea.sflag [#allocation5], 1
    %1826 = vsyncpa %s1825, 1

</llo_original>
